<compile_context>
chip_gen: v7x
topology: tpu7x:2x2x1
jax: 0.10.0
libtpu: 0.0.40
codegen_flags: <defaults>
</compile_context>

<pallas_src>
import jax
import jax.numpy as jnp
from jax import lax
from jax.experimental import pallas as pl
from jax.experimental.pallas import tpu as pltpu


# ----------------------------------------------------------------------------
# Fused TFIM kernel (single grid step, whole batch)
# ----------------------------------------------------------------------------
def _tfim_fused_kernel(x1_ref, x2_ref, w3_ref, sc3_ref, sh3_ref,
                       wdr_ref, scdr_ref, shdr_ref, o_ref, slab_ref):
    # x1_ref, x2_ref : (N*H, W*Cin) f32   images stacked along rows (lane-dense)
    # w3_ref         : (7, 3*W*Cin, W*Cin) bf16 dy-stacked banded 3x3 weights
    #                  [0]=sub [1]=enh1 [2]=enh2 [3]=mul [4..6]=cat partials
    # sc3_ref/sh3_ref: (5, 1, W*Cin) f32  folded conv-bias + BN scale/shift
    #                  [0]=sub [1]=enh1 [2]=enh2 [3]=mul [4]=cat
    # wdr_ref        : (W*Cin, W*Cout) bf16 block-diagonal 1x1 weight
    # scdr_ref/shdr_ref : (1, W*Cout) f32
    # o_ref          : (N*H, W*Cout) f32
    # slab_ref       : (N*(H+2), 3*W*Cin) f32 dy-stacked padded-input slab
    NH, WC = x1_ref.shape
    P = slab_ref.shape[0]
    N = (P - NH) // 2               # number of images in the batch
    H = NH // N                     # rows per image
    Hp = H + 2                      # rows per image incl. top/bottom zero rows

    # Zero the slab ONCE.  Each conv rewrites only the per-image interiors, so
    # the zero halo / separator regions persist for all 7 convolutions.
    slab_ref[...] = jnp.zeros_like(slab_ref)

    def conv3x3(x, wi):
        # 3x3 conv (padding=1) as ONE bf16 MXU matmul with K = 3*W*Cin:
        # slab column group dy at row s holds padded_input[s - 1 + dy]; the
        # width padding lives in zero rows of the banded weight, the vertical
        # padding / image separation lives in the never-written zero rows.
        for n in range(N):
            xi = x[n * H:(n + 1) * H]                              # (H, WC)
            base = n * Hp
            slab_ref[pl.ds(base + 2, H), pl.ds(0 * WC, WC)] = xi   # dy = 0
            slab_ref[pl.ds(base + 1, H), pl.ds(1 * WC, WC)] = xi   # dy = 1
            slab_ref[pl.ds(base + 0, H), pl.ds(2 * WC, WC)] = xi   # dy = 2
        acc = jnp.dot(slab_ref[...].astype(jnp.bfloat16), w3_ref[wi],
                      preferred_element_type=jnp.float32)          # (P, WC)
        # Gather the valid (interior) output rows back to compact layout.
        return jnp.concatenate(
            [acc[n * Hp + 1:n * Hp + 1 + H] for n in range(N)], axis=0)

    def bn_relu(acc, i):
        # Folded conv-bias + BatchNorm (inference) + ReLU: one FMA on fp32 acc.
        return jnp.maximum(acc * sc3_ref[i] + sh3_ref[i], 0.0)

    x1 = x1_ref[...]
    x2 = x2_ref[...]

    dx = jnp.abs(x1 - x2)                         # |x1 - x2|
    x_sub = bn_relu(conv3x3(dx, 0), 0)            # conv_sub
    ex1 = bn_relu(conv3x3(x1, 1), 1)              # conv_enh1
    ex2 = bn_relu(conv3x3(x2, 2), 2)              # conv_enh2
    x_mul = bn_relu(conv3x3(ex1 * ex2, 3), 3)     # conv_mul

    x1_add = ex1 + ex1 * x1                       # ex1 + ex1.mul(x1)
    x2_add = ex2 + ex2 * x2                       # ex2 + ex2.mul(x2)
    x_add = x_sub + x_mul

    # conv_cat over concat([x1_add, x2_add, x_add], channel) == sum of three
    # partial banded convs (one per input-channel group).
    cat = conv3x3(x1_add, 4) + conv3x3(x2_add, 5) + conv3x3(x_add, 6)
    x_cat = bn_relu(cat, 4)

    # conv_dr: 1x1 conv == single matmul with block-diagonal weight.
    y = jnp.dot(x_cat.astype(jnp.bfloat16), wdr_ref[...],
                preferred_element_type=jnp.float32)
    y = jnp.maximum(y * scdr_ref[...] + shdr_ref[...], 0.0)
    o_ref[...] = y.astype(o_ref.dtype)


# ----------------------------------------------------------------------------
# Wrapper
# ----------------------------------------------------------------------------
@jax.jit
def tfim_forward(x1, x2, kparams):
    N, H, W, Cin = x1.shape
    WC = W * Cin
    ND = kparams["wdr"].shape[-1]             # W * out_d
    out_d = ND // W
    NH = N * H
    P = N * (H + 2)

    x1f = x1.reshape(NH, WC)                  # lane-dense: last dim = W*Cin
    x2f = x2.reshape(NH, WC)

    # Advisory cost estimate (~27 MFLOP, ~0.8 MiB weights+activations).
    flops = 2 * (7 * P * (3 * WC) * WC + NH * WC * ND)
    bytes_accessed = (sum(int(v.size) * v.dtype.itemsize for v in kparams.values())
                      + (x1f.size + x2f.size + NH * ND) * 4)

    out = pl.pallas_call(
        _tfim_fused_kernel,
        out_shape=jax.ShapeDtypeStruct((NH, ND), jnp.float32),
        grid=(1,),                            # whole batch in one step;
        in_specs=[                            # weights DMA'd exactly once
            pl.BlockSpec((NH, WC), lambda i: (0, 0)),
            pl.BlockSpec((NH, WC), lambda i: (0, 0)),
            pl.BlockSpec(kparams["w3"].shape, lambda i: (0, 0, 0)),
            pl.BlockSpec(kparams["sc3"].shape, lambda i: (0, 0, 0)),
            pl.BlockSpec(kparams["sh3"].shape, lambda i: (0, 0, 0)),
            pl.BlockSpec(kparams["wdr"].shape, lambda i: (0, 0)),
            pl.BlockSpec(kparams["scdr"].shape, lambda i: (0, 0)),
            pl.BlockSpec(kparams["shdr"].shape, lambda i: (0, 0)),
        ],
        out_specs=pl.BlockSpec((NH, ND), lambda i: (0, 0)),
        scratch_shapes=[pltpu.VMEM((P, 3 * WC), jnp.float32)],
        cost_estimate=pl.CostEstimate(flops=flops, transcendentals=0,
                                      bytes_accessed=bytes_accessed),
    )(x1f, x2f, kparams["w3"], kparams["sc3"], kparams["sh3"],
      kparams["wdr"], kparams["scdr"], kparams["shdr"])
    return out.reshape(N, H, W, out_d)


# ----------------------------------------------------------------------------
# Parameter construction (deterministic Conv2d + folded inference BatchNorm)
# ----------------------------------------------------------------------------
def make_conv_bn_params(key, kh, kw, cin, cout):
    k = jax.random.split(key, 6)
    fan_in = kh * kw * cin
    # kaiming_normal_(a=1): std = sqrt(2 / ((1 + a^2) * fan_in)) = sqrt(1/fan_in)
    w = jax.random.normal(k[0], (kh, kw, cin, cout), jnp.float32) * (1.0 / fan_in) ** 0.5
    b = 0.05 * jax.random.normal(k[1], (cout,), jnp.float32)
    gamma = 1.0 + 0.1 * jax.random.normal(k[2], (cout,), jnp.float32)
    beta = 0.1 * jax.random.normal(k[3], (cout,), jnp.float32)
    mean = 0.1 * jax.random.normal(k[4], (cout,), jnp.float32)
    var = 1.0 + 0.1 * jnp.abs(jax.random.normal(k[5], (cout,), jnp.float32))
    eps = 1e-5
    scale = gamma / jnp.sqrt(var + eps)
    shift = beta + (b - mean) * scale
    return w, scale, shift


def make_tfim_params(key, in_d, out_d):
    keys = jax.random.split(key, 6)
    return {
        "sub":  make_conv_bn_params(keys[0], 3, 3, in_d, in_d),
        "enh1": make_conv_bn_params(keys[1], 3, 3, in_d, in_d),
        "enh2": make_conv_bn_params(keys[2], 3, 3, in_d, in_d),
        "mul":  make_conv_bn_params(keys[3], 3, 3, in_d, in_d),
        "cat":  make_conv_bn_params(keys[4], 3, 3, in_d * 3, in_d),
        "dr":   make_conv_bn_params(keys[5], 1, 1, in_d, out_d),   # (1,1,Cin,Cout)
    }


def _stacked_band_3x3(w, W):
    """(3,3,Cin,Cout) HWIO -> (3*W*Cin, W*Cout) dy-stacked banded matrix.

    Row index = dy*W*Cin + wp*Cin + ci, col = wo*Cout + co; the entry is
    w[dy, wp-wo+1, ci, co] when |wp - wo| <= 1 else 0 (the left/right zero
    padding is folded into the structural zeros -> K is exactly W*Cin per dy).
    Built with gather + mask (no matmul) so it is bit-exact before the bf16 cast.
    """
    kh, kw, Cin, Cout = w.shape
    wp = jnp.arange(W)[:, None]
    wo = jnp.arange(W)[None, :]
    d = wp - wo + 1                                          # dx tap index
    valid = (d >= 0) & (d <= kw - 1)
    g = w[:, jnp.clip(d, 0, kw - 1), :, :]                   # (3, W, W, Cin, Cout)
    g = jnp.where(valid[None, :, :, None, None], g, 0.0)
    g = jnp.transpose(g, (0, 1, 3, 2, 4))                    # (3, W, Cin, W, Cout)
    return g.reshape(kh * W * Cin, W * Cout)


def _blockdiag_1x1_weight(w1, W):
    """(Cin, Cout) -> (W*Cin, W*Cout) block-diagonal (exact, elementwise)."""
    Cin, Cout = w1.shape
    eye = jnp.eye(W, dtype=w1.dtype)
    g = eye[:, None, :, None] * w1[None, :, None, :]         # (W, Cin, W, Cout)
    return g.reshape(W * Cin, W * Cout)


def prepare_kernel_params(params, W, in_d, out_d):
    w3, sc, sh = [], [], []
    for name in ("sub", "enh1", "enh2", "mul"):
        wt, s, t = params[name]
        w3.append(_stacked_band_3x3(wt, W))
        sc.append(jnp.tile(s, W))
        sh.append(jnp.tile(t, W))
    wcat, scat, tcat = params["cat"]
    for p in range(3):   # channel-concat order: x1_add, x2_add, x_add
        w3.append(_stacked_band_3x3(wcat[:, :, p * in_d:(p + 1) * in_d, :], W))
    sc.append(jnp.tile(scat, W))
    sh.append(jnp.tile(tcat, W))
    wdr4, sdr, tdr = params["dr"]
    return {
        # Matmul operands in bf16 (f32 accumulate in-kernel); BN math in f32.
        "w3":   jnp.stack(w3).astype(jnp.bfloat16),       # (7, 3*W*in_d, W*in_d)
        "sc3":  jnp.stack(sc)[:, None, :],                # (5, 1, W*in_d) f32
        "sh3":  jnp.stack(sh)[:, None, :],                # (5, 1, W*in_d) f32
        "wdr":  _blockdiag_1x1_weight(wdr4.reshape(in_d, out_d), W
                                      ).astype(jnp.bfloat16),   # (W*in_d, W*out_d)
        "scdr": jnp.tile(sdr, W)[None, :],                # (1, W*out_d) f32
        "shdr": jnp.tile(tdr, W)[None, :],                # (1, W*out_d) f32
    }


# ----------------------------------------------------------------------------
# Pure-JAX reference (for correctness check)
# ----------------------------------------------------------------------------
def _ref_conv_bn_relu(x, w, scale, shift, pad):
    y = lax.conv_general_dilated(
        x, w, window_strides=(1, 1), padding=[(pad, pad), (pad, pad)],
        dimension_numbers=("NHWC", "HWIO", "NHWC"),
        precision=lax.Precision.HIGHEST)
    return jnp.maximum(y * scale + shift, 0.0)


def tfim_reference(x1, x2, params):
    dx = jnp.abs(x1 - x2)
    x_sub = _ref_conv_bn_relu(dx, *params["sub"], pad=1)
    ex1 = _ref_conv_bn_relu(x1, *params["enh1"], pad=1)
    ex2 = _ref_conv_bn_relu(x2, *params["enh2"], pad=1)
    x1_add = ex1 + ex1 * x1
    x2_add = ex2 + ex2 * x2
    x_mul = _ref_conv_bn_relu(ex1 * ex2, *params["mul"], pad=1)
    x_add = x_sub + x_mul
    x_cat = _ref_conv_bn_relu(jnp.concatenate([x1_add, x2_add, x_add], axis=-1),
                              *params["cat"], pad=1)
    return _ref_conv_bn_relu(x_cat, *params["dr"], pad=0)


# ----------------------------------------------------------------------------
if __name__ == "__main__":
    N, H, W = 2, 16, 16
    in_d, out_d = 8, 16

    key = jax.random.PRNGKey(0)
    kx1, kx2, kp = jax.random.split(key, 3)
    x1 = jax.random.normal(kx1, (N, H, W, in_d), jnp.float32)
    x2 = jax.random.normal(kx2, (N, H, W, in_d), jnp.float32)
    params = make_tfim_params(kp, in_d, out_d)
    kparams = prepare_kernel_params(params, W, in_d, out_d)

    out = jax.block_until_ready(tfim_forward(x1, x2, kparams))
    ref = jax.block_until_ready(tfim_reference(x1, x2, params))

    assert out.shape == (N, H, W, out_d), out.shape
    # Relative max-error check.  The fp32-reference comparison now includes
    # bf16 MXU-operand rounding (per the perf review), which dominates the
    # residual; it stays far below what any structural/indexing bug produces.
    err = float(jnp.max(jnp.abs(out - ref)))
    rel = err / max(float(jnp.max(jnp.abs(ref))), 1e-6)
    assert rel < 2e-2, f"max abs err {err} (rel {rel})"

    print("KERNEL_OK")
</pallas_src>

<mosaic_0001>
module attributes {stable_mosaic.version = 11 : i64} {
  func.func @_tfim_fused_kernel(%arg0: i32, %arg1: memref<32x128xf32, #tpu.memory_space<vmem>>, %arg2: memref<32x128xf32, #tpu.memory_space<vmem>>, %arg3: memref<7x384x128xbf16, #tpu.memory_space<vmem>>, %arg4: memref<5x1x128xf32, #tpu.memory_space<vmem>>, %arg5: memref<5x1x128xf32, #tpu.memory_space<vmem>>, %arg6: memref<128x256xbf16, #tpu.memory_space<vmem>>, %arg7: memref<1x256xf32, #tpu.memory_space<vmem>>, %arg8: memref<1x256xf32, #tpu.memory_space<vmem>>, %arg9: memref<32x256xf32, #tpu.memory_space<vmem>>, %arg10: memref<36x384xf32, #tpu.memory_space<vmem>>) attributes {dimension_semantics = [#tpu.dimension_semantics<arbitrary>], iteration_bounds = array<i64: 1>, scalar_prefetch = 0 : i64, scratch_operands = 1 : i64, tpu.core_type = #tpu.core_type<tc>, window_params = [{pipeline_mode = #tpu.pipeline_mode<synchronous>, transform_indices = @transform_0, window_bounds = array<i64: 32, 128>}, {pipeline_mode = #tpu.pipeline_mode<synchronous>, transform_indices = @transform_1, window_bounds = array<i64: 32, 128>}, {pipeline_mode = #tpu.pipeline_mode<synchronous>, transform_indices = @transform_2, window_bounds = array<i64: 7, 384, 128>}, {pipeline_mode = #tpu.pipeline_mode<synchronous>, transform_indices = @transform_3, window_bounds = array<i64: 5, 1, 128>}, {pipeline_mode = #tpu.pipeline_mode<synchronous>, transform_indices = @transform_4, window_bounds = array<i64: 5, 1, 128>}, {pipeline_mode = #tpu.pipeline_mode<synchronous>, transform_indices = @transform_5, window_bounds = array<i64: 128, 256>}, {pipeline_mode = #tpu.pipeline_mode<synchronous>, transform_indices = @transform_6, window_bounds = array<i64: 1, 256>}, {pipeline_mode = #tpu.pipeline_mode<synchronous>, transform_indices = @transform_7, window_bounds = array<i64: 1, 256>}, {pipeline_mode = #tpu.pipeline_mode<synchronous>, transform_indices = @transform_8, window_bounds = array<i64: 32, 256>}]} {
    %cst = arith.constant 0.000000e+00 : f32
    %0 = vector.broadcast %cst : f32 to vector<36x384xf32>
    %c0 = arith.constant 0 : index
    %c0_0 = arith.constant 0 : index
    %1 = vector.load %arg10[%c0, %c0_0] : memref<36x384xf32, #tpu.memory_space<vmem>>, vector<36x384xf32>
    tpu.vector_store %arg10[%c0, %c0_0], %0 {strides = array<i32>} : memref<36x384xf32, #tpu.memory_space<vmem>>, vector<36x384xf32>,
    %c0_1 = arith.constant 0 : index
    %c0_2 = arith.constant 0 : index
    %2 = vector.load %arg1[%c0_1, %c0_2] : memref<32x128xf32, #tpu.memory_space<vmem>>, vector<32x128xf32>
    %c0_3 = arith.constant 0 : index
    %c0_4 = arith.constant 0 : index
    %3 = vector.load %arg2[%c0_3, %c0_4] : memref<32x128xf32, #tpu.memory_space<vmem>>, vector<32x128xf32>
    %4 = arith.subf %2, %3 : vector<32x128xf32>
    %5 = math.absf %4 : vector<32x128xf32>
    %6 = vector.extract_strided_slice %5 {offsets = [0, 0], sizes = [16, 128], strides = [1, 1]} : vector<32x128xf32> to vector<16x128xf32>
    %c2 = arith.constant 2 : index
    %c0_5 = arith.constant 0 : index
    %7 = vector.load %arg10[%c2, %c0_5] : memref<36x384xf32, #tpu.memory_space<vmem>>, vector<16x128xf32>
    tpu.vector_store %arg10[%c2, %c0_5], %6 {strides = array<i32>} : memref<36x384xf32, #tpu.memory_space<vmem>>, vector<16x128xf32>,
    %c1 = arith.constant 1 : index
    %c128 = arith.constant 128 : index
    %8 = vector.load %arg10[%c1, %c128] : memref<36x384xf32, #tpu.memory_space<vmem>>, vector<16x128xf32>
    tpu.vector_store %arg10[%c1, %c128], %6 {strides = array<i32>} : memref<36x384xf32, #tpu.memory_space<vmem>>, vector<16x128xf32>,
    %c0_6 = arith.constant 0 : index
    %c256 = arith.constant 256 : index
    %9 = vector.load %arg10[%c0_6, %c256] : memref<36x384xf32, #tpu.memory_space<vmem>>, vector<16x128xf32>
    tpu.vector_store %arg10[%c0_6, %c256], %6 {strides = array<i32>} : memref<36x384xf32, #tpu.memory_space<vmem>>, vector<16x128xf32>,
    %10 = vector.extract_strided_slice %5 {offsets = [16, 0], sizes = [16, 128], strides = [1, 1]} : vector<32x128xf32> to vector<16x128xf32>
    %c20 = arith.constant 20 : index
    %c0_7 = arith.constant 0 : index
    %11 = vector.load %arg10[%c20, %c0_7] : memref<36x384xf32, #tpu.memory_space<vmem>>, vector<16x128xf32>
    tpu.vector_store %arg10[%c20, %c0_7], %10 {strides = array<i32>} : memref<36x384xf32, #tpu.memory_space<vmem>>, vector<16x128xf32>,
    %c19 = arith.constant 19 : index
    %c128_8 = arith.constant 128 : index
    %12 = vector.load %arg10[%c19, %c128_8] : memref<36x384xf32, #tpu.memory_space<vmem>>, vector<16x128xf32>
    tpu.vector_store %arg10[%c19, %c128_8], %10 {strides = array<i32>} : memref<36x384xf32, #tpu.memory_space<vmem>>, vector<16x128xf32>,
    %c18 = arith.constant 18 : index
    %c256_9 = arith.constant 256 : index
    %13 = vector.load %arg10[%c18, %c256_9] : memref<36x384xf32, #tpu.memory_space<vmem>>, vector<16x128xf32>
    tpu.vector_store %arg10[%c18, %c256_9], %10 {strides = array<i32>} : memref<36x384xf32, #tpu.memory_space<vmem>>, vector<16x128xf32>,
    %c0_10 = arith.constant 0 : index
    %c0_11 = arith.constant 0 : index
    %14 = vector.load %arg10[%c0_10, %c0_11] : memref<36x384xf32, #tpu.memory_space<vmem>>, vector<36x384xf32>
    %15 = arith.truncf %14 : vector<36x384xf32> to vector<36x384xbf16>
    %c0_12 = arith.constant 0 : index
    %c0_13 = arith.constant 0 : index
    %c0_14 = arith.constant 0 : index
    %16 = vector.load %arg3[%c0_12, %c0_13, %c0_14] : memref<7x384x128xbf16, #tpu.memory_space<vmem>>, vector<1x384x128xbf16>
    %17 = vector.shape_cast %16 : vector<1x384x128xbf16> to vector<384x128xbf16>
    %cst_15 = arith.constant dense<0.000000e+00> : vector<36x128xf32>
    %18 = tpu.matmul %15, %17, %cst_15 {dimension_numbers = #tpu.dot_dimension_numbers<[1], [0], [0], [1], [0, 0, 1, 1], [], []>} : vector<36x384xbf16>, vector<384x128xbf16>, vector<36x128xf32> -> vector<36x128xf32>
    %19 = vector.extract_strided_slice %18 {offsets = [1, 0], sizes = [16, 128], strides = [1, 1]} : vector<36x128xf32> to vector<16x128xf32>
    %20 = vector.extract_strided_slice %18 {offsets = [19, 0], sizes = [16, 128], strides = [1, 1]} : vector<36x128xf32> to vector<16x128xf32>
    %21 = tpu.concatenate %19, %20 in 0 : vector<16x128xf32>, vector<16x128xf32> -> vector<32x128xf32>
    %c0_16 = arith.constant 0 : index
    %c0_17 = arith.constant 0 : index
    %c0_18 = arith.constant 0 : index
    %22 = vector.load %arg4[%c0_16, %c0_17, %c0_18] : memref<5x1x128xf32, #tpu.memory_space<vmem>>, vector<1x1x128xf32>
    %23 = vector.shape_cast %22 : vector<1x1x128xf32> to vector<1x128xf32>
    %24 = vector.broadcast %23 : vector<1x128xf32> to vector<32x128xf32>
    %25 = arith.mulf %21, %24 : vector<32x128xf32>
    %c0_19 = arith.constant 0 : index
    %c0_20 = arith.constant 0 : index
    %c0_21 = arith.constant 0 : index
    %26 = vector.load %arg5[%c0_19, %c0_20, %c0_21] : memref<5x1x128xf32, #tpu.memory_space<vmem>>, vector<1x1x128xf32>
    %27 = vector.shape_cast %26 : vector<1x1x128xf32> to vector<1x128xf32>
    %28 = vector.broadcast %27 : vector<1x128xf32> to vector<32x128xf32>
    %29 = arith.addf %25, %28 : vector<32x128xf32>
    %cst_22 = arith.constant 0.000000e+00 : f32
    %30 = vector.broadcast %cst_22 : f32 to vector<32x128xf32>
    %31 = arith.maximumf %29, %30 : vector<32x128xf32>
    %32 = vector.extract_strided_slice %2 {offsets = [0, 0], sizes = [16, 128], strides = [1, 1]} : vector<32x128xf32> to vector<16x128xf32>
    %c2_23 = arith.constant 2 : index
    %c0_24 = arith.constant 0 : index
    %33 = vector.load %arg10[%c2_23, %c0_24] : memref<36x384xf32, #tpu.memory_space<vmem>>, vector<16x128xf32>
    tpu.vector_store %arg10[%c2_23, %c0_24], %32 {strides = array<i32>} : memref<36x384xf32, #tpu.memory_space<vmem>>, vector<16x128xf32>,
    %c1_25 = arith.constant 1 : index
    %c128_26 = arith.constant 128 : index
    %34 = vector.load %arg10[%c1_25, %c128_26] : memref<36x384xf32, #tpu.memory_space<vmem>>, vector<16x128xf32>
    tpu.vector_store %arg10[%c1_25, %c128_26], %32 {strides = array<i32>} : memref<36x384xf32, #tpu.memory_space<vmem>>, vector<16x128xf32>,
    %c0_27 = arith.constant 0 : index
    %c256_28 = arith.constant 256 : index
    %35 = vector.load %arg10[%c0_27, %c256_28] : memref<36x384xf32, #tpu.memory_space<vmem>>, vector<16x128xf32>
    tpu.vector_store %arg10[%c0_27, %c256_28], %32 {strides = array<i32>} : memref<36x384xf32, #tpu.memory_space<vmem>>, vector<16x128xf32>,
    %36 = vector.extract_strided_slice %2 {offsets = [16, 0], sizes = [16, 128], strides = [1, 1]} : vector<32x128xf32> to vector<16x128xf32>
    %c20_29 = arith.constant 20 : index
    %c0_30 = arith.constant 0 : index
    %37 = vector.load %arg10[%c20_29, %c0_30] : memref<36x384xf32, #tpu.memory_space<vmem>>, vector<16x128xf32>
    tpu.vector_store %arg10[%c20_29, %c0_30], %36 {strides = array<i32>} : memref<36x384xf32, #tpu.memory_space<vmem>>, vector<16x128xf32>,
    %c19_31 = arith.constant 19 : index
    %c128_32 = arith.constant 128 : index
    %38 = vector.load %arg10[%c19_31, %c128_32] : memref<36x384xf32, #tpu.memory_space<vmem>>, vector<16x128xf32>
    tpu.vector_store %arg10[%c19_31, %c128_32], %36 {strides = array<i32>} : memref<36x384xf32, #tpu.memory_space<vmem>>, vector<16x128xf32>,
    %c18_33 = arith.constant 18 : index
    %c256_34 = arith.constant 256 : index
    %39 = vector.load %arg10[%c18_33, %c256_34] : memref<36x384xf32, #tpu.memory_space<vmem>>, vector<16x128xf32>
    tpu.vector_store %arg10[%c18_33, %c256_34], %36 {strides = array<i32>} : memref<36x384xf32, #tpu.memory_space<vmem>>, vector<16x128xf32>,
    %c0_35 = arith.constant 0 : index
    %c0_36 = arith.constant 0 : index
    %40 = vector.load %arg10[%c0_35, %c0_36] : memref<36x384xf32, #tpu.memory_space<vmem>>, vector<36x384xf32>
    %41 = arith.truncf %40 : vector<36x384xf32> to vector<36x384xbf16>
    %c1_37 = arith.constant 1 : index
    %c0_38 = arith.constant 0 : index
    %c0_39 = arith.constant 0 : index
    %42 = vector.load %arg3[%c1_37, %c0_38, %c0_39] : memref<7x384x128xbf16, #tpu.memory_space<vmem>>, vector<1x384x128xbf16>
    %43 = vector.shape_cast %42 : vector<1x384x128xbf16> to vector<384x128xbf16>
    %cst_40 = arith.constant dense<0.000000e+00> : vector<36x128xf32>
    %44 = tpu.matmul %41, %43, %cst_40 {dimension_numbers = #tpu.dot_dimension_numbers<[1], [0], [0], [1], [0, 0, 1, 1], [], []>} : vector<36x384xbf16>, vector<384x128xbf16>, vector<36x128xf32> -> vector<36x128xf32>
    %45 = vector.extract_strided_slice %44 {offsets = [1, 0], sizes = [16, 128], strides = [1, 1]} : vector<36x128xf32> to vector<16x128xf32>
    %46 = vector.extract_strided_slice %44 {offsets = [19, 0], sizes = [16, 128], strides = [1, 1]} : vector<36x128xf32> to vector<16x128xf32>
    %47 = tpu.concatenate %45, %46 in 0 : vector<16x128xf32>, vector<16x128xf32> -> vector<32x128xf32>
    %c1_41 = arith.constant 1 : index
    %c0_42 = arith.constant 0 : index
    %c0_43 = arith.constant 0 : index
    %48 = vector.load %arg4[%c1_41, %c0_42, %c0_43] : memref<5x1x128xf32, #tpu.memory_space<vmem>>, vector<1x1x128xf32>
    %49 = vector.shape_cast %48 : vector<1x1x128xf32> to vector<1x128xf32>
    %50 = vector.broadcast %49 : vector<1x128xf32> to vector<32x128xf32>
    %51 = arith.mulf %47, %50 : vector<32x128xf32>
    %c1_44 = arith.constant 1 : index
    %c0_45 = arith.constant 0 : index
    %c0_46 = arith.constant 0 : index
    %52 = vector.load %arg5[%c1_44, %c0_45, %c0_46] : memref<5x1x128xf32, #tpu.memory_space<vmem>>, vector<1x1x128xf32>
    %53 = vector.shape_cast %52 : vector<1x1x128xf32> to vector<1x128xf32>
    %54 = vector.broadcast %53 : vector<1x128xf32> to vector<32x128xf32>
    %55 = arith.addf %51, %54 : vector<32x128xf32>
    %cst_47 = arith.constant 0.000000e+00 : f32
    %56 = vector.broadcast %cst_47 : f32 to vector<32x128xf32>
    %57 = arith.maximumf %55, %56 : vector<32x128xf32>
    %58 = vector.extract_strided_slice %3 {offsets = [0, 0], sizes = [16, 128], strides = [1, 1]} : vector<32x128xf32> to vector<16x128xf32>
    %c2_48 = arith.constant 2 : index
    %c0_49 = arith.constant 0 : index
    %59 = vector.load %arg10[%c2_48, %c0_49] : memref<36x384xf32, #tpu.memory_space<vmem>>, vector<16x128xf32>
    tpu.vector_store %arg10[%c2_48, %c0_49], %58 {strides = array<i32>} : memref<36x384xf32, #tpu.memory_space<vmem>>, vector<16x128xf32>,
    %c1_50 = arith.constant 1 : index
    %c128_51 = arith.constant 128 : index
    %60 = vector.load %arg10[%c1_50, %c128_51] : memref<36x384xf32, #tpu.memory_space<vmem>>, vector<16x128xf32>
    tpu.vector_store %arg10[%c1_50, %c128_51], %58 {strides = array<i32>} : memref<36x384xf32, #tpu.memory_space<vmem>>, vector<16x128xf32>,
    %c0_52 = arith.constant 0 : index
    %c256_53 = arith.constant 256 : index
    %61 = vector.load %arg10[%c0_52, %c256_53] : memref<36x384xf32, #tpu.memory_space<vmem>>, vector<16x128xf32>
    tpu.vector_store %arg10[%c0_52, %c256_53], %58 {strides = array<i32>} : memref<36x384xf32, #tpu.memory_space<vmem>>, vector<16x128xf32>,
    %62 = vector.extract_strided_slice %3 {offsets = [16, 0], sizes = [16, 128], strides = [1, 1]} : vector<32x128xf32> to vector<16x128xf32>
    %c20_54 = arith.constant 20 : index
    %c0_55 = arith.constant 0 : index
    %63 = vector.load %arg10[%c20_54, %c0_55] : memref<36x384xf32, #tpu.memory_space<vmem>>, vector<16x128xf32>
    tpu.vector_store %arg10[%c20_54, %c0_55], %62 {strides = array<i32>} : memref<36x384xf32, #tpu.memory_space<vmem>>, vector<16x128xf32>,
    %c19_56 = arith.constant 19 : index
    %c128_57 = arith.constant 128 : index
    %64 = vector.load %arg10[%c19_56, %c128_57] : memref<36x384xf32, #tpu.memory_space<vmem>>, vector<16x128xf32>
    tpu.vector_store %arg10[%c19_56, %c128_57], %62 {strides = array<i32>} : memref<36x384xf32, #tpu.memory_space<vmem>>, vector<16x128xf32>,
    %c18_58 = arith.constant 18 : index
    %c256_59 = arith.constant 256 : index
    %65 = vector.load %arg10[%c18_58, %c256_59] : memref<36x384xf32, #tpu.memory_space<vmem>>, vector<16x128xf32>
    tpu.vector_store %arg10[%c18_58, %c256_59], %62 {strides = array<i32>} : memref<36x384xf32, #tpu.memory_space<vmem>>, vector<16x128xf32>,
    %c0_60 = arith.constant 0 : index
    %c0_61 = arith.constant 0 : index
    %66 = vector.load %arg10[%c0_60, %c0_61] : memref<36x384xf32, #tpu.memory_space<vmem>>, vector<36x384xf32>
    %67 = arith.truncf %66 : vector<36x384xf32> to vector<36x384xbf16>
    %c2_62 = arith.constant 2 : index
    %c0_63 = arith.constant 0 : index
    %c0_64 = arith.constant 0 : index
    %68 = vector.load %arg3[%c2_62, %c0_63, %c0_64] : memref<7x384x128xbf16, #tpu.memory_space<vmem>>, vector<1x384x128xbf16>
    %69 = vector.shape_cast %68 : vector<1x384x128xbf16> to vector<384x128xbf16>
    %cst_65 = arith.constant dense<0.000000e+00> : vector<36x128xf32>
    %70 = tpu.matmul %67, %69, %cst_65 {dimension_numbers = #tpu.dot_dimension_numbers<[1], [0], [0], [1], [0, 0, 1, 1], [], []>} : vector<36x384xbf16>, vector<384x128xbf16>, vector<36x128xf32> -> vector<36x128xf32>
    %71 = vector.extract_strided_slice %70 {offsets = [1, 0], sizes = [16, 128], strides = [1, 1]} : vector<36x128xf32> to vector<16x128xf32>
    %72 = vector.extract_strided_slice %70 {offsets = [19, 0], sizes = [16, 128], strides = [1, 1]} : vector<36x128xf32> to vector<16x128xf32>
    %73 = tpu.concatenate %71, %72 in 0 : vector<16x128xf32>, vector<16x128xf32> -> vector<32x128xf32>
    %c2_66 = arith.constant 2 : index
    %c0_67 = arith.constant 0 : index
    %c0_68 = arith.constant 0 : index
    %74 = vector.load %arg4[%c2_66, %c0_67, %c0_68] : memref<5x1x128xf32, #tpu.memory_space<vmem>>, vector<1x1x128xf32>
    %75 = vector.shape_cast %74 : vector<1x1x128xf32> to vector<1x128xf32>
    %76 = vector.broadcast %75 : vector<1x128xf32> to vector<32x128xf32>
    %77 = arith.mulf %73, %76 : vector<32x128xf32>
    %c2_69 = arith.constant 2 : index
    %c0_70 = arith.constant 0 : index
    %c0_71 = arith.constant 0 : index
    %78 = vector.load %arg5[%c2_69, %c0_70, %c0_71] : memref<5x1x128xf32, #tpu.memory_space<vmem>>, vector<1x1x128xf32>
    %79 = vector.shape_cast %78 : vector<1x1x128xf32> to vector<1x128xf32>
    %80 = vector.broadcast %79 : vector<1x128xf32> to vector<32x128xf32>
    %81 = arith.addf %77, %80 : vector<32x128xf32>
    %cst_72 = arith.constant 0.000000e+00 : f32
    %82 = vector.broadcast %cst_72 : f32 to vector<32x128xf32>
    %83 = arith.maximumf %81, %82 : vector<32x128xf32>
    %84 = arith.mulf %57, %83 : vector<32x128xf32>
    %85 = vector.extract_strided_slice %84 {offsets = [0, 0], sizes = [16, 128], strides = [1, 1]} : vector<32x128xf32> to vector<16x128xf32>
    %c2_73 = arith.constant 2 : index
    %c0_74 = arith.constant 0 : index
    %86 = vector.load %arg10[%c2_73, %c0_74] : memref<36x384xf32, #tpu.memory_space<vmem>>, vector<16x128xf32>
    tpu.vector_store %arg10[%c2_73, %c0_74], %85 {strides = array<i32>} : memref<36x384xf32, #tpu.memory_space<vmem>>, vector<16x128xf32>,
    %c1_75 = arith.constant 1 : index
    %c128_76 = arith.constant 128 : index
    %87 = vector.load %arg10[%c1_75, %c128_76] : memref<36x384xf32, #tpu.memory_space<vmem>>, vector<16x128xf32>
    tpu.vector_store %arg10[%c1_75, %c128_76], %85 {strides = array<i32>} : memref<36x384xf32, #tpu.memory_space<vmem>>, vector<16x128xf32>,
    %c0_77 = arith.constant 0 : index
    %c256_78 = arith.constant 256 : index
    %88 = vector.load %arg10[%c0_77, %c256_78] : memref<36x384xf32, #tpu.memory_space<vmem>>, vector<16x128xf32>
    tpu.vector_store %arg10[%c0_77, %c256_78], %85 {strides = array<i32>} : memref<36x384xf32, #tpu.memory_space<vmem>>, vector<16x128xf32>,
    %89 = vector.extract_strided_slice %84 {offsets = [16, 0], sizes = [16, 128], strides = [1, 1]} : vector<32x128xf32> to vector<16x128xf32>
    %c20_79 = arith.constant 20 : index
    %c0_80 = arith.constant 0 : index
    %90 = vector.load %arg10[%c20_79, %c0_80] : memref<36x384xf32, #tpu.memory_space<vmem>>, vector<16x128xf32>
    tpu.vector_store %arg10[%c20_79, %c0_80], %89 {strides = array<i32>} : memref<36x384xf32, #tpu.memory_space<vmem>>, vector<16x128xf32>,
    %c19_81 = arith.constant 19 : index
    %c128_82 = arith.constant 128 : index
    %91 = vector.load %arg10[%c19_81, %c128_82] : memref<36x384xf32, #tpu.memory_space<vmem>>, vector<16x128xf32>
    tpu.vector_store %arg10[%c19_81, %c128_82], %89 {strides = array<i32>} : memref<36x384xf32, #tpu.memory_space<vmem>>, vector<16x128xf32>,
    %c18_83 = arith.constant 18 : index
    %c256_84 = arith.constant 256 : index
    %92 = vector.load %arg10[%c18_83, %c256_84] : memref<36x384xf32, #tpu.memory_space<vmem>>, vector<16x128xf32>
    tpu.vector_store %arg10[%c18_83, %c256_84], %89 {strides = array<i32>} : memref<36x384xf32, #tpu.memory_space<vmem>>, vector<16x128xf32>,
    %c0_85 = arith.constant 0 : index
    %c0_86 = arith.constant 0 : index
    %93 = vector.load %arg10[%c0_85, %c0_86] : memref<36x384xf32, #tpu.memory_space<vmem>>, vector<36x384xf32>
    %94 = arith.truncf %93 : vector<36x384xf32> to vector<36x384xbf16>
    %c3 = arith.constant 3 : index
    %c0_87 = arith.constant 0 : index
    %c0_88 = arith.constant 0 : index
    %95 = vector.load %arg3[%c3, %c0_87, %c0_88] : memref<7x384x128xbf16, #tpu.memory_space<vmem>>, vector<1x384x128xbf16>
    %96 = vector.shape_cast %95 : vector<1x384x128xbf16> to vector<384x128xbf16>
    %cst_89 = arith.constant dense<0.000000e+00> : vector<36x128xf32>
    %97 = tpu.matmul %94, %96, %cst_89 {dimension_numbers = #tpu.dot_dimension_numbers<[1], [0], [0], [1], [0, 0, 1, 1], [], []>} : vector<36x384xbf16>, vector<384x128xbf16>, vector<36x128xf32> -> vector<36x128xf32>
    %98 = vector.extract_strided_slice %97 {offsets = [1, 0], sizes = [16, 128], strides = [1, 1]} : vector<36x128xf32> to vector<16x128xf32>
    %99 = vector.extract_strided_slice %97 {offsets = [19, 0], sizes = [16, 128], strides = [1, 1]} : vector<36x128xf32> to vector<16x128xf32>
    %100 = tpu.concatenate %98, %99 in 0 : vector<16x128xf32>, vector<16x128xf32> -> vector<32x128xf32>
    %c3_90 = arith.constant 3 : index
    %c0_91 = arith.constant 0 : index
    %c0_92 = arith.constant 0 : index
    %101 = vector.load %arg4[%c3_90, %c0_91, %c0_92] : memref<5x1x128xf32, #tpu.memory_space<vmem>>, vector<1x1x128xf32>
    %102 = vector.shape_cast %101 : vector<1x1x128xf32> to vector<1x128xf32>
    %103 = vector.broadcast %102 : vector<1x128xf32> to vector<32x128xf32>
    %104 = arith.mulf %100, %103 : vector<32x128xf32>
    %c3_93 = arith.constant 3 : index
    %c0_94 = arith.constant 0 : index
    %c0_95 = arith.constant 0 : index
    %105 = vector.load %arg5[%c3_93, %c0_94, %c0_95] : memref<5x1x128xf32, #tpu.memory_space<vmem>>, vector<1x1x128xf32>
    %106 = vector.shape_cast %105 : vector<1x1x128xf32> to vector<1x128xf32>
    %107 = vector.broadcast %106 : vector<1x128xf32> to vector<32x128xf32>
    %108 = arith.addf %104, %107 : vector<32x128xf32>
    %cst_96 = arith.constant 0.000000e+00 : f32
    %109 = vector.broadcast %cst_96 : f32 to vector<32x128xf32>
    %110 = arith.maximumf %108, %109 : vector<32x128xf32>
    %111 = arith.mulf %57, %2 : vector<32x128xf32>
    %112 = arith.addf %57, %111 : vector<32x128xf32>
    %113 = arith.mulf %83, %3 : vector<32x128xf32>
    %114 = arith.addf %83, %113 : vector<32x128xf32>
    %115 = arith.addf %31, %110 : vector<32x128xf32>
    %116 = vector.extract_strided_slice %112 {offsets = [0, 0], sizes = [16, 128], strides = [1, 1]} : vector<32x128xf32> to vector<16x128xf32>
    %c2_97 = arith.constant 2 : index
    %c0_98 = arith.constant 0 : index
    %117 = vector.load %arg10[%c2_97, %c0_98] : memref<36x384xf32, #tpu.memory_space<vmem>>, vector<16x128xf32>
    tpu.vector_store %arg10[%c2_97, %c0_98], %116 {strides = array<i32>} : memref<36x384xf32, #tpu.memory_space<vmem>>, vector<16x128xf32>,
    %c1_99 = arith.constant 1 : index
    %c128_100 = arith.constant 128 : index
    %118 = vector.load %arg10[%c1_99, %c128_100] : memref<36x384xf32, #tpu.memory_space<vmem>>, vector<16x128xf32>
    tpu.vector_store %arg10[%c1_99, %c128_100], %116 {strides = array<i32>} : memref<36x384xf32, #tpu.memory_space<vmem>>, vector<16x128xf32>,
    %c0_101 = arith.constant 0 : index
    %c256_102 = arith.constant 256 : index
    %119 = vector.load %arg10[%c0_101, %c256_102] : memref<36x384xf32, #tpu.memory_space<vmem>>, vector<16x128xf32>
    tpu.vector_store %arg10[%c0_101, %c256_102], %116 {strides = array<i32>} : memref<36x384xf32, #tpu.memory_space<vmem>>, vector<16x128xf32>,
    %120 = vector.extract_strided_slice %112 {offsets = [16, 0], sizes = [16, 128], strides = [1, 1]} : vector<32x128xf32> to vector<16x128xf32>
    %c20_103 = arith.constant 20 : index
    %c0_104 = arith.constant 0 : index
    %121 = vector.load %arg10[%c20_103, %c0_104] : memref<36x384xf32, #tpu.memory_space<vmem>>, vector<16x128xf32>
    tpu.vector_store %arg10[%c20_103, %c0_104], %120 {strides = array<i32>} : memref<36x384xf32, #tpu.memory_space<vmem>>, vector<16x128xf32>,
    %c19_105 = arith.constant 19 : index
    %c128_106 = arith.constant 128 : index
    %122 = vector.load %arg10[%c19_105, %c128_106] : memref<36x384xf32, #tpu.memory_space<vmem>>, vector<16x128xf32>
    tpu.vector_store %arg10[%c19_105, %c128_106], %120 {strides = array<i32>} : memref<36x384xf32, #tpu.memory_space<vmem>>, vector<16x128xf32>,
    %c18_107 = arith.constant 18 : index
    %c256_108 = arith.constant 256 : index
    %123 = vector.load %arg10[%c18_107, %c256_108] : memref<36x384xf32, #tpu.memory_space<vmem>>, vector<16x128xf32>
    tpu.vector_store %arg10[%c18_107, %c256_108], %120 {strides = array<i32>} : memref<36x384xf32, #tpu.memory_space<vmem>>, vector<16x128xf32>,
    %c0_109 = arith.constant 0 : index
    %c0_110 = arith.constant 0 : index
    %124 = vector.load %arg10[%c0_109, %c0_110] : memref<36x384xf32, #tpu.memory_space<vmem>>, vector<36x384xf32>
    %125 = arith.truncf %124 : vector<36x384xf32> to vector<36x384xbf16>
    %c4 = arith.constant 4 : index
    %c0_111 = arith.constant 0 : index
    %c0_112 = arith.constant 0 : index
    %126 = vector.load %arg3[%c4, %c0_111, %c0_112] : memref<7x384x128xbf16, #tpu.memory_space<vmem>>, vector<1x384x128xbf16>
    %127 = vector.shape_cast %126 : vector<1x384x128xbf16> to vector<384x128xbf16>
    %cst_113 = arith.constant dense<0.000000e+00> : vector<36x128xf32>
    %128 = tpu.matmul %125, %127, %cst_113 {dimension_numbers = #tpu.dot_dimension_numbers<[1], [0], [0], [1], [0, 0, 1, 1], [], []>} : vector<36x384xbf16>, vector<384x128xbf16>, vector<36x128xf32> -> vector<36x128xf32>
    %129 = vector.extract_strided_slice %128 {offsets = [1, 0], sizes = [16, 128], strides = [1, 1]} : vector<36x128xf32> to vector<16x128xf32>
    %130 = vector.extract_strided_slice %128 {offsets = [19, 0], sizes = [16, 128], strides = [1, 1]} : vector<36x128xf32> to vector<16x128xf32>
    %131 = tpu.concatenate %129, %130 in 0 : vector<16x128xf32>, vector<16x128xf32> -> vector<32x128xf32>
    %132 = vector.extract_strided_slice %114 {offsets = [0, 0], sizes = [16, 128], strides = [1, 1]} : vector<32x128xf32> to vector<16x128xf32>
    %c2_114 = arith.constant 2 : index
    %c0_115 = arith.constant 0 : index
    %133 = vector.load %arg10[%c2_114, %c0_115] : memref<36x384xf32, #tpu.memory_space<vmem>>, vector<16x128xf32>
    tpu.vector_store %arg10[%c2_114, %c0_115], %132 {strides = array<i32>} : memref<36x384xf32, #tpu.memory_space<vmem>>, vector<16x128xf32>,
    %c1_116 = arith.constant 1 : index
    %c128_117 = arith.constant 128 : index
    %134 = vector.load %arg10[%c1_116, %c128_117] : memref<36x384xf32, #tpu.memory_space<vmem>>, vector<16x128xf32>
    tpu.vector_store %arg10[%c1_116, %c128_117], %132 {strides = array<i32>} : memref<36x384xf32, #tpu.memory_space<vmem>>, vector<16x128xf32>,
    %c0_118 = arith.constant 0 : index
    %c256_119 = arith.constant 256 : index
    %135 = vector.load %arg10[%c0_118, %c256_119] : memref<36x384xf32, #tpu.memory_space<vmem>>, vector<16x128xf32>
    tpu.vector_store %arg10[%c0_118, %c256_119], %132 {strides = array<i32>} : memref<36x384xf32, #tpu.memory_space<vmem>>, vector<16x128xf32>,
    %136 = vector.extract_strided_slice %114 {offsets = [16, 0], sizes = [16, 128], strides = [1, 1]} : vector<32x128xf32> to vector<16x128xf32>
    %c20_120 = arith.constant 20 : index
    %c0_121 = arith.constant 0 : index
    %137 = vector.load %arg10[%c20_120, %c0_121] : memref<36x384xf32, #tpu.memory_space<vmem>>, vector<16x128xf32>
    tpu.vector_store %arg10[%c20_120, %c0_121], %136 {strides = array<i32>} : memref<36x384xf32, #tpu.memory_space<vmem>>, vector<16x128xf32>,
    %c19_122 = arith.constant 19 : index
    %c128_123 = arith.constant 128 : index
    %138 = vector.load %arg10[%c19_122, %c128_123] : memref<36x384xf32, #tpu.memory_space<vmem>>, vector<16x128xf32>
    tpu.vector_store %arg10[%c19_122, %c128_123], %136 {strides = array<i32>} : memref<36x384xf32, #tpu.memory_space<vmem>>, vector<16x128xf32>,
    %c18_124 = arith.constant 18 : index
    %c256_125 = arith.constant 256 : index
    %139 = vector.load %arg10[%c18_124, %c256_125] : memref<36x384xf32, #tpu.memory_space<vmem>>, vector<16x128xf32>
    tpu.vector_store %arg10[%c18_124, %c256_125], %136 {strides = array<i32>} : memref<36x384xf32, #tpu.memory_space<vmem>>, vector<16x128xf32>,
    %c0_126 = arith.constant 0 : index
    %c0_127 = arith.constant 0 : index
    %140 = vector.load %arg10[%c0_126, %c0_127] : memref<36x384xf32, #tpu.memory_space<vmem>>, vector<36x384xf32>
    %141 = arith.truncf %140 : vector<36x384xf32> to vector<36x384xbf16>
    %c5 = arith.constant 5 : index
    %c0_128 = arith.constant 0 : index
    %c0_129 = arith.constant 0 : index
    %142 = vector.load %arg3[%c5, %c0_128, %c0_129] : memref<7x384x128xbf16, #tpu.memory_space<vmem>>, vector<1x384x128xbf16>
    %143 = vector.shape_cast %142 : vector<1x384x128xbf16> to vector<384x128xbf16>
    %cst_130 = arith.constant dense<0.000000e+00> : vector<36x128xf32>
    %144 = tpu.matmul %141, %143, %cst_130 {dimension_numbers = #tpu.dot_dimension_numbers<[1], [0], [0], [1], [0, 0, 1, 1], [], []>} : vector<36x384xbf16>, vector<384x128xbf16>, vector<36x128xf32> -> vector<36x128xf32>
    %145 = vector.extract_strided_slice %144 {offsets = [1, 0], sizes = [16, 128], strides = [1, 1]} : vector<36x128xf32> to vector<16x128xf32>
    %146 = vector.extract_strided_slice %144 {offsets = [19, 0], sizes = [16, 128], strides = [1, 1]} : vector<36x128xf32> to vector<16x128xf32>
    %147 = tpu.concatenate %145, %146 in 0 : vector<16x128xf32>, vector<16x128xf32> -> vector<32x128xf32>
    %148 = arith.addf %131, %147 : vector<32x128xf32>
    %149 = vector.extract_strided_slice %115 {offsets = [0, 0], sizes = [16, 128], strides = [1, 1]} : vector<32x128xf32> to vector<16x128xf32>
    %c2_131 = arith.constant 2 : index
    %c0_132 = arith.constant 0 : index
    %150 = vector.load %arg10[%c2_131, %c0_132] : memref<36x384xf32, #tpu.memory_space<vmem>>, vector<16x128xf32>
    tpu.vector_store %arg10[%c2_131, %c0_132], %149 {strides = array<i32>} : memref<36x384xf32, #tpu.memory_space<vmem>>, vector<16x128xf32>,
    %c1_133 = arith.constant 1 : index
    %c128_134 = arith.constant 128 : index
    %151 = vector.load %arg10[%c1_133, %c128_134] : memref<36x384xf32, #tpu.memory_space<vmem>>, vector<16x128xf32>
    tpu.vector_store %arg10[%c1_133, %c128_134], %149 {strides = array<i32>} : memref<36x384xf32, #tpu.memory_space<vmem>>, vector<16x128xf32>,
    %c0_135 = arith.constant 0 : index
    %c256_136 = arith.constant 256 : index
    %152 = vector.load %arg10[%c0_135, %c256_136] : memref<36x384xf32, #tpu.memory_space<vmem>>, vector<16x128xf32>
    tpu.vector_store %arg10[%c0_135, %c256_136], %149 {strides = array<i32>} : memref<36x384xf32, #tpu.memory_space<vmem>>, vector<16x128xf32>,
    %153 = vector.extract_strided_slice %115 {offsets = [16, 0], sizes = [16, 128], strides = [1, 1]} : vector<32x128xf32> to vector<16x128xf32>
    %c20_137 = arith.constant 20 : index
    %c0_138 = arith.constant 0 : index
    %154 = vector.load %arg10[%c20_137, %c0_138] : memref<36x384xf32, #tpu.memory_space<vmem>>, vector<16x128xf32>
    tpu.vector_store %arg10[%c20_137, %c0_138], %153 {strides = array<i32>} : memref<36x384xf32, #tpu.memory_space<vmem>>, vector<16x128xf32>,
    %c19_139 = arith.constant 19 : index
    %c128_140 = arith.constant 128 : index
    %155 = vector.load %arg10[%c19_139, %c128_140] : memref<36x384xf32, #tpu.memory_space<vmem>>, vector<16x128xf32>
    tpu.vector_store %arg10[%c19_139, %c128_140], %153 {strides = array<i32>} : memref<36x384xf32, #tpu.memory_space<vmem>>, vector<16x128xf32>,
    %c18_141 = arith.constant 18 : index
    %c256_142 = arith.constant 256 : index
    %156 = vector.load %arg10[%c18_141, %c256_142] : memref<36x384xf32, #tpu.memory_space<vmem>>, vector<16x128xf32>
    tpu.vector_store %arg10[%c18_141, %c256_142], %153 {strides = array<i32>} : memref<36x384xf32, #tpu.memory_space<vmem>>, vector<16x128xf32>,
    %c0_143 = arith.constant 0 : index
    %c0_144 = arith.constant 0 : index
    %157 = vector.load %arg10[%c0_143, %c0_144] : memref<36x384xf32, #tpu.memory_space<vmem>>, vector<36x384xf32>
    %158 = arith.truncf %157 : vector<36x384xf32> to vector<36x384xbf16>
    %c6 = arith.constant 6 : index
    %c0_145 = arith.constant 0 : index
    %c0_146 = arith.constant 0 : index
    %159 = vector.load %arg3[%c6, %c0_145, %c0_146] : memref<7x384x128xbf16, #tpu.memory_space<vmem>>, vector<1x384x128xbf16>
    %160 = vector.shape_cast %159 : vector<1x384x128xbf16> to vector<384x128xbf16>
    %cst_147 = arith.constant dense<0.000000e+00> : vector<36x128xf32>
    %161 = tpu.matmul %158, %160, %cst_147 {dimension_numbers = #tpu.dot_dimension_numbers<[1], [0], [0], [1], [0, 0, 1, 1], [], []>} : vector<36x384xbf16>, vector<384x128xbf16>, vector<36x128xf32> -> vector<36x128xf32>
    %162 = vector.extract_strided_slice %161 {offsets = [1, 0], sizes = [16, 128], strides = [1, 1]} : vector<36x128xf32> to vector<16x128xf32>
    %163 = vector.extract_strided_slice %161 {offsets = [19, 0], sizes = [16, 128], strides = [1, 1]} : vector<36x128xf32> to vector<16x128xf32>
    %164 = tpu.concatenate %162, %163 in 0 : vector<16x128xf32>, vector<16x128xf32> -> vector<32x128xf32>
    %165 = arith.addf %148, %164 : vector<32x128xf32>
    %c4_148 = arith.constant 4 : index
    %c0_149 = arith.constant 0 : index
    %c0_150 = arith.constant 0 : index
    %166 = vector.load %arg4[%c4_148, %c0_149, %c0_150] : memref<5x1x128xf32, #tpu.memory_space<vmem>>, vector<1x1x128xf32>
    %167 = vector.shape_cast %166 : vector<1x1x128xf32> to vector<1x128xf32>
    %168 = vector.broadcast %167 : vector<1x128xf32> to vector<32x128xf32>
    %169 = arith.mulf %165, %168 : vector<32x128xf32>
    %c4_151 = arith.constant 4 : index
    %c0_152 = arith.constant 0 : index
    %c0_153 = arith.constant 0 : index
    %170 = vector.load %arg5[%c4_151, %c0_152, %c0_153] : memref<5x1x128xf32, #tpu.memory_space<vmem>>, vector<1x1x128xf32>
    %171 = vector.shape_cast %170 : vector<1x1x128xf32> to vector<1x128xf32>
    %172 = vector.broadcast %171 : vector<1x128xf32> to vector<32x128xf32>
    %173 = arith.addf %169, %172 : vector<32x128xf32>
    %cst_154 = arith.constant 0.000000e+00 : f32
    %174 = vector.broadcast %cst_154 : f32 to vector<32x128xf32>
    %175 = arith.maximumf %173, %174 : vector<32x128xf32>
    %176 = arith.truncf %175 : vector<32x128xf32> to vector<32x128xbf16>
    %c0_155 = arith.constant 0 : index
    %c0_156 = arith.constant 0 : index
    %177 = vector.load %arg6[%c0_155, %c0_156] : memref<128x256xbf16, #tpu.memory_space<vmem>>, vector<128x256xbf16>
    %cst_157 = arith.constant dense<0.000000e+00> : vector<32x256xf32>
    %178 = tpu.matmul %176, %177, %cst_157 {dimension_numbers = #tpu.dot_dimension_numbers<[1], [0], [0], [1], [0, 0, 1, 1], [], []>} : vector<32x128xbf16>, vector<128x256xbf16>, vector<32x256xf32> -> vector<32x256xf32>
    %c0_158 = arith.constant 0 : index
    %c0_159 = arith.constant 0 : index
    %179 = vector.load %arg7[%c0_158, %c0_159] : memref<1x256xf32, #tpu.memory_space<vmem>>, vector<1x256xf32>
    %180 = vector.broadcast %179 : vector<1x256xf32> to vector<32x256xf32>
    %181 = arith.mulf %178, %180 : vector<32x256xf32>
    %c0_160 = arith.constant 0 : index
    %c0_161 = arith.constant 0 : index
    %182 = vector.load %arg8[%c0_160, %c0_161] : memref<1x256xf32, #tpu.memory_space<vmem>>, vector<1x256xf32>
    %183 = vector.broadcast %182 : vector<1x256xf32> to vector<32x256xf32>
    %184 = arith.addf %181, %183 : vector<32x256xf32>
    %cst_162 = arith.constant 0.000000e+00 : f32
    %185 = vector.broadcast %cst_162 : f32 to vector<32x256xf32>
    %186 = arith.maximumf %184, %185 : vector<32x256xf32>
    %c0_163 = arith.constant 0 : index
    %c0_164 = arith.constant 0 : index
    %187 = vector.load %arg9[%c0_163, %c0_164] : memref<32x256xf32, #tpu.memory_space<vmem>>, vector<32x256xf32>
    tpu.vector_store %arg9[%c0_163, %c0_164], %186 {strides = array<i32>} : memref<32x256xf32, #tpu.memory_space<vmem>>, vector<32x256xf32>,
    return
  }
  func.func @transform_0(%arg0: i32) -> (i32, i32) {
    %c0_i32 = arith.constant 0 : i32
    %c0_i32_0 = arith.constant 0 : i32
    %c0_i32_1 = arith.constant 0 : i32
    return %c0_i32, %c0_i32_0 : i32, i32
  }
  func.func @transform_1(%arg0: i32) -> (i32, i32) {
    %c0_i32 = arith.constant 0 : i32
    %c0_i32_0 = arith.constant 0 : i32
    %c0_i32_1 = arith.constant 0 : i32
    return %c0_i32, %c0_i32_0 : i32, i32
  }
  func.func @transform_2(%arg0: i32) -> (i32, i32, i32) {
    %c0_i32 = arith.constant 0 : i32
    %c0_i32_0 = arith.constant 0 : i32
    %c0_i32_1 = arith.constant 0 : i32
    %c0_i32_2 = arith.constant 0 : i32
    return %c0_i32, %c0_i32_0, %c0_i32_1 : i32, i32, i32
  }
  func.func @transform_3(%arg0: i32) -> (i32, i32, i32) {
    %c0_i32 = arith.constant 0 : i32
    %c0_i32_0 = arith.constant 0 : i32
    %c0_i32_1 = arith.constant 0 : i32
    %c0_i32_2 = arith.constant 0 : i32
    return %c0_i32, %c0_i32_0, %c0_i32_1 : i32, i32, i32
  }
  func.func @transform_4(%arg0: i32) -> (i32, i32, i32) {
    %c0_i32 = arith.constant 0 : i32
    %c0_i32_0 = arith.constant 0 : i32
    %c0_i32_1 = arith.constant 0 : i32
    %c0_i32_2 = arith.constant 0 : i32
    return %c0_i32, %c0_i32_0, %c0_i32_1 : i32, i32, i32
  }
  func.func @transform_5(%arg0: i32) -> (i32, i32) {
    %c0_i32 = arith.constant 0 : i32
    %c0_i32_0 = arith.constant 0 : i32
    %c0_i32_1 = arith.constant 0 : i32
    return %c0_i32, %c0_i32_0 : i32, i32
  }
  func.func @transform_6(%arg0: i32) -> (i32, i32) {
    %c0_i32 = arith.constant 0 : i32
    %c0_i32_0 = arith.constant 0 : i32
    %c0_i32_1 = arith.constant 0 : i32
    return %c0_i32, %c0_i32_0 : i32, i32
  }
  func.func @transform_7(%arg0: i32) -> (i32, i32) {
    %c0_i32 = arith.constant 0 : i32
    %c0_i32_0 = arith.constant 0 : i32
    %c0_i32_1 = arith.constant 0 : i32
    return %c0_i32, %c0_i32_0 : i32, i32
  }
  func.func @transform_8(%arg0: i32) -> (i32, i32) {
    %c0_i32 = arith.constant 0 : i32
    %c0_i32_0 = arith.constant 0 : i32
    %c0_i32_1 = arith.constant 0 : i32
    return %c0_i32, %c0_i32_0 : i32, i32
  }
}

</mosaic_0001>

<llo_original>
// kernel: tfim_forward.1
$region0: #{tfim_forward.1}
  #allocation0 [shape = 'u32[]', space=smem, size = 0x4, offset = 0x4, fixed_abs, tag = 'smem constant byte address 0x4 - core index']
  #allocation1 [shape = 'u32[144,128]{1,0:T(1,128)}', space=vmem, size = 0x12000, scoped, tag = 'internal scratch']
  #allocation2 [shape = 'f32[36,384]{1,0:T(8,128)}', space=vmem, size = 0xf000, scoped, tag = 'scratch operand']
  %s0 = inlined_call_operand.vmem [shape: f32[32,128], index: 0, kind: input, shape index: {}]
  %s1 = inlined_call_operand.vmem [shape: f32[32,128], index: 1, kind: input, shape index: {}]
  %s2 = inlined_call_operand.vmem [shape: bf16[7,384,128], index: 2, kind: input, shape index: {}]
  %s3 = inlined_call_operand.vmem [shape: f32[5,1,128], index: 3, kind: input, shape index: {}]
  %s4 = inlined_call_operand.vmem [shape: f32[5,1,128], index: 4, kind: input, shape index: {}]
  %s5 = inlined_call_operand.vmem [shape: bf16[128,256], index: 5, kind: input, shape index: {}]
  %s6 = inlined_call_operand.vmem [shape: f32[1,256], index: 6, kind: input, shape index: {}]
  %s7 = inlined_call_operand.vmem [shape: f32[1,256], index: 7, kind: input, shape index: {}]
  %s8 = inlined_call_operand.vmem [shape: f32[32,256], index: 8, kind: output, shape index: {}]
  %s9 = sld [smem:[#allocation0]]
  $region42: #{tfim_forward.1} parent=0
    _
  %s11 = ssub.s32 1, %s9
  %s12 = scalar_select 0, %s11, %s9
  // Predicated region
  $region2: #{tfim_forward.1} parent=0 // pred_check
    _
  $region3: #{tfim_forward.1} parent=0 // pred_check_branch
    %14 = sbr.rel (0) target = $region5
  $region4: #{tfim_forward.1} parent=0 // pred_region
    _
  $region5: #{tfim_forward.1} parent=0 // pred_fallthru
    _
  // Predicated region
  $region6: #{tfim_forward.1} parent=0 // pred_check
    _
  $region7: #{tfim_forward.1} parent=0 // pred_check_branch
    %16 = sbr.rel (0) target = $region9
  $region8: #{tfim_forward.1} parent=0 // pred_region
    _
  $region9: #{tfim_forward.1} parent=0 // pred_fallthru
    _
  // Predicated region
  $region10: #{tfim_forward.1} parent=0 // pred_check
    _
  $region11: #{tfim_forward.1} parent=0 // pred_check_branch
    %18 = sbr.rel (0) target = $region13
  $region12: #{tfim_forward.1} parent=0 // pred_region
    _
  $region13: #{tfim_forward.1} parent=0 // pred_fallthru
    _
  // Predicated region
  $region14: #{tfim_forward.1} parent=0 // pred_check
    _
  $region15: #{tfim_forward.1} parent=0 // pred_check_branch
    %20 = sbr.rel (0) target = $region17
  $region16: #{tfim_forward.1} parent=0 // pred_region
    _
  $region17: #{tfim_forward.1} parent=0 // pred_fallthru
    _
  // Predicated region
  $region18: #{tfim_forward.1} parent=0 // pred_check
    _
  $region19: #{tfim_forward.1} parent=0 // pred_check_branch
    %22 = sbr.rel (0) target = $region21
  $region20: #{tfim_forward.1} parent=0 // pred_region
    _
  $region21: #{tfim_forward.1} parent=0 // pred_fallthru
    _
  // Predicated region
  $region22: #{tfim_forward.1} parent=0 // pred_check
    _
  $region23: #{tfim_forward.1} parent=0 // pred_check_branch
    %24 = sbr.rel (0) target = $region25
  $region24: #{tfim_forward.1} parent=0 // pred_region
    _
  $region25: #{tfim_forward.1} parent=0 // pred_fallthru
    _
  // Predicated region
  $region26: #{tfim_forward.1} parent=0 // pred_check
    _
  $region27: #{tfim_forward.1} parent=0 // pred_check_branch
    %26 = sbr.rel (0) target = $region29
  $region28: #{tfim_forward.1} parent=0 // pred_region
    _
  $region29: #{tfim_forward.1} parent=0 // pred_fallthru
    _
  // Predicated region
  $region30: #{tfim_forward.1} parent=0 // pred_check
    _
  $region31: #{tfim_forward.1} parent=0 // pred_check_branch
    %28 = sbr.rel (0) target = $region33
  $region32: #{tfim_forward.1} parent=0 // pred_region
    _
  $region33: #{tfim_forward.1} parent=0 // pred_fallthru
    _
  %30 = vst [vmem:[#allocation2] sm:$0xff] 0.0
  %31 = vst [vmem:[#allocation2 + $0x8] sm:$0xff] 0.0
  %32 = vst [vmem:[#allocation2 + $0x10] sm:$0xff] 0.0
  %33 = vst [vmem:[#allocation2 + $0x18] sm:$0xff] 0.0
  %34 = vst [vmem:[#allocation2 + $0x20] sm:$0xff] 0.0
  %35 = vst [vmem:[#allocation2 + $0x28] sm:$0xff] 0.0
  %36 = vst [vmem:[#allocation2 + $0x30] sm:$0xff] 0.0
  %37 = vst [vmem:[#allocation2 + $0x38] sm:$0xff] 0.0
  %38 = vst [vmem:[#allocation2 + $0x40] sm:$0xff] 0.0
  %39 = vst [vmem:[#allocation2 + $0x48] sm:$0xff] 0.0
  %40 = vst [vmem:[#allocation2 + $0x50] sm:$0xff] 0.0
  %41 = vst [vmem:[#allocation2 + $0x58] sm:$0xff] 0.0
  %42 = vst [vmem:[#allocation2 + $0x60] sm:$0xf] 0.0
  %43 = vst [vmem:[#allocation2 + $0x68] sm:$0xf] 0.0
  %44 = vst [vmem:[#allocation2 + $0x70] sm:$0xf] 0.0
  %v45 = vld [vmem:[%s0] sm:$0xff]
  %v46 = vld [vmem:[%s0 + $0x8] sm:$0xff]
  %v47 = vld [vmem:[%s0 + $0x10] sm:$0xff]
  %v48 = vld [vmem:[%s0 + $0x18] sm:$0xff]
  %v49 = vld [vmem:[%s1] sm:$0xff]
  %v50 = vld [vmem:[%s1 + $0x8] sm:$0xff]
  %v51 = vld [vmem:[%s1 + $0x10] sm:$0xff]
  %v52 = vld [vmem:[%s1 + $0x18] sm:$0xff]
  %v53 = vsub.f32 %v45, %v49
  %v54 = vsub.f32 %v46, %v50
  %v55 = vsub.f32 %v47, %v51
  %v56 = vsub.f32 %v48, %v52
  %v57 = vand.u32 2147483647, %v53
  %v58 = vand.u32 2147483647, %v54
  %v59 = vand.u32 2147483647, %v55
  %v60 = vand.u32 2147483647, %v56
  %vm63 = vcmask 1041408
  %v64 = vrot.slane %v57, 6
  %v65 = vrot.slane %v58, 6
  %v66 = vsel %vm63, %v64, %v65
  %70 = vst [vmem:[#allocation2] sm:$0xfc] %v64
  %71 = vst [vmem:[#allocation2 + $0x18] sm:$0xff] %v66
  %72 = vst [vmem:[#allocation2 + $0x30] sm:$0x3] %v65
  %vm73 = vcmask 1040384
  %v74 = vrot.slane %v57, 7
  %v75 = vrot.slane %v58, 7
  %v76 = vsel %vm73, %v74, %v75
  %80 = vst [vmem:[#allocation2 + $0x8] sm:$0xfe] %v74
  %81 = vst [vmem:[#allocation2 + $0x20] sm:$0xff] %v76
  %82 = vst [vmem:[#allocation2 + $0x38] sm:$0x1] %v75
  %83 = vst [vmem:[#allocation2 + $0x10] sm:$0xff] %v57
  %84 = vst [vmem:[#allocation2 + $0x28] sm:$0xff] %v58
  %vm87 = vcmask 1043456
  %v88 = vrot.slane %v59, 4
  %v89 = vrot.slane %v60, 4
  %v90 = vsel %vm87, %v88, %v89
  %94 = vst [vmem:[#allocation2 + $0x30] sm:$0xf0] %v88
  %95 = vst [vmem:[#allocation2 + $0x48] sm:$0xff] %v90
  %96 = vst [vmem:[#allocation2 + $0x60] sm:$0xf] %v89
  %vm97 = vcmask 1042432
  %v98 = vrot.slane %v59, 5
  %v99 = vrot.slane %v60, 5
  %v100 = vsel %vm97, %v98, %v99
  %104 = vst [vmem:[#allocation2 + $0x38] sm:$0xf8] %v98
  %105 = vst [vmem:[#allocation2 + $0x50] sm:$0xff] %v100
  %106 = vst [vmem:[#allocation2 + $0x68] sm:$0x7] %v99
  %v107 = vrot.slane %v59, 6
  %v108 = vrot.slane %v60, 6
  %v109 = vsel %vm63, %v107, %v108
  %113 = vst [vmem:[#allocation2 + $0x40] sm:$0xfc] %v107
  %114 = vst [vmem:[#allocation2 + $0x58] sm:$0xff] %v109
  %115 = vst [vmem:[#allocation2 + $0x70] sm:$0x3] %v108
  %v116 = vld [vmem:[#allocation2] sm:$0xff]
  %v117 = vld [vmem:[#allocation2 + $0x8] sm:$0xff]
  %v118 = vld [vmem:[#allocation2 + $0x10] sm:$0xff]
  %v119 = vld [vmem:[#allocation2 + $0x18] sm:$0xff]
  %v120 = vld [vmem:[#allocation2 + $0x20] sm:$0xff]
  %v121 = vld [vmem:[#allocation2 + $0x28] sm:$0xff]
  %v122 = vld [vmem:[#allocation2 + $0x30] sm:$0xff]
  %v123 = vld [vmem:[#allocation2 + $0x38] sm:$0xff]
  %v124 = vld [vmem:[#allocation2 + $0x40] sm:$0xff]
  %v125 = vld [vmem:[#allocation2 + $0x48] sm:$0xff]
  %v126 = vld [vmem:[#allocation2 + $0x50] sm:$0xff]
  %v127 = vld [vmem:[#allocation2 + $0x58] sm:$0xff]
  %v128 = vld [vmem:[#allocation2 + $0x60] sm:$0xf]
  %v129 = vld [vmem:[#allocation2 + $0x68] sm:$0xf]
  %v130 = vld [vmem:[#allocation2 + $0x70] sm:$0xf]
  %v131 = vpack.c.bf16 %v119, %v116
  %v132 = vpack.c.bf16 %v120, %v117
  %v133 = vpack.c.bf16 %v121, %v118
  %v134 = vpack.c.bf16 %v125, %v122
  %v135 = vpack.c.bf16 %v126, %v123
  %v136 = vpack.c.bf16 %v127, %v124
  %v137 = vpack.c.bf16 %v128, %v128
  %v138 = vpack.c.bf16 %v129, %v129
  %v139 = vpack.c.bf16 %v130, %v130
  %v140 = vld [vmem:[%s2] sm:$0xf]
  %v141 = vld [vmem:[%s2 + $0x4] sm:$0xf]
  %v142 = vld [vmem:[%s2 + $0x8] sm:$0xf]
  %v143 = vld [vmem:[%s2 + $0xc] sm:$0xf]
  %v144 = vld [vmem:[%s2 + $0x10] sm:$0xf]
  %v145 = vld [vmem:[%s2 + $0x14] sm:$0xf]
  %v146 = vld [vmem:[%s2 + $0x18] sm:$0xf]
  %v147 = vld [vmem:[%s2 + $0x1c] sm:$0xf]
  %v148 = vld [vmem:[%s2 + $0x20] sm:$0xf]
  %v149 = vld [vmem:[%s2 + $0x24] sm:$0xf]
  %v150 = vld [vmem:[%s2 + $0x28] sm:$0xf]
  %v151 = vld [vmem:[%s2 + $0x2c] sm:$0xf]
  %v152 = vld [vmem:[%s2 + $0x30] sm:$0xf]
  %v153 = vld [vmem:[%s2 + $0x34] sm:$0xf]
  %v154 = vld [vmem:[%s2 + $0x38] sm:$0xf]
  %v155 = vld [vmem:[%s2 + $0x3c] sm:$0xf]
  %v156 = vld [vmem:[%s2 + $0x40] sm:$0xf]
  %v157 = vld [vmem:[%s2 + $0x44] sm:$0xf]
  %v158 = vld [vmem:[%s2 + $0x48] sm:$0xf]
  %v159 = vld [vmem:[%s2 + $0x4c] sm:$0xf]
  %v160 = vld [vmem:[%s2 + $0x50] sm:$0xf]
  %v161 = vld [vmem:[%s2 + $0x54] sm:$0xf]
  %v162 = vld [vmem:[%s2 + $0x58] sm:$0xf]
  %v163 = vld [vmem:[%s2 + $0x5c] sm:$0xf]
  %v164 = vld [vmem:[%s2 + $0x60] sm:$0xf]
  %v165 = vld [vmem:[%s2 + $0x64] sm:$0xf]
  %v166 = vld [vmem:[%s2 + $0x68] sm:$0xf]
  %v167 = vld [vmem:[%s2 + $0x6c] sm:$0xf]
  %v168 = vld [vmem:[%s2 + $0x70] sm:$0xf]
  %v169 = vld [vmem:[%s2 + $0x74] sm:$0xf]
  %v170 = vld [vmem:[%s2 + $0x78] sm:$0xf]
  %v171 = vld [vmem:[%s2 + $0x7c] sm:$0xf]
  %v172 = vld [vmem:[%s2 + $0x80] sm:$0xf]
  %v173 = vld [vmem:[%s2 + $0x84] sm:$0xf]
  %v174 = vld [vmem:[%s2 + $0x88] sm:$0xf]
  %v175 = vld [vmem:[%s2 + $0x8c] sm:$0xf]
  %v176 = vld [vmem:[%s2 + $0x90] sm:$0xf]
  %v177 = vld [vmem:[%s2 + $0x94] sm:$0xf]
  %v178 = vld [vmem:[%s2 + $0x98] sm:$0xf]
  %v179 = vld [vmem:[%s2 + $0x9c] sm:$0xf]
  %v180 = vld [vmem:[%s2 + $0xa0] sm:$0xf]
  %v181 = vld [vmem:[%s2 + $0xa4] sm:$0xf]
  %v182 = vld [vmem:[%s2 + $0xa8] sm:$0xf]
  %v183 = vld [vmem:[%s2 + $0xac] sm:$0xf]
  %v184 = vld [vmem:[%s2 + $0xb0] sm:$0xf]
  %v185 = vld [vmem:[%s2 + $0xb4] sm:$0xf]
  %v186 = vld [vmem:[%s2 + $0xb8] sm:$0xf]
  %v187 = vld [vmem:[%s2 + $0xbc] sm:$0xf]
  %v236 = vunpack.c.l.b16 %v140
  %v237 = vunpack.c.l.b16 %v141
  %v238 = vunpack.c.l.b16 %v142
  %v239 = vunpack.c.l.b16 %v143
  %v240 = vunpack.c.l.b16 %v144
  %v241 = vunpack.c.l.b16 %v145
  %v242 = vunpack.c.l.b16 %v146
  %v243 = vunpack.c.l.b16 %v147
  %v244 = vunpack.c.l.b16 %v148
  %v245 = vunpack.c.l.b16 %v149
  %v246 = vunpack.c.l.b16 %v150
  %v247 = vunpack.c.l.b16 %v151
  %v248 = vunpack.c.l.b16 %v152
  %v249 = vunpack.c.l.b16 %v153
  %v250 = vunpack.c.l.b16 %v154
  %v251 = vunpack.c.l.b16 %v155
  %v252 = vunpack.c.l.b16 %v156
  %v253 = vunpack.c.l.b16 %v157
  %v254 = vunpack.c.l.b16 %v158
  %v255 = vunpack.c.l.b16 %v159
  %v256 = vunpack.c.l.b16 %v160
  %v257 = vunpack.c.l.b16 %v161
  %v258 = vunpack.c.l.b16 %v162
  %v259 = vunpack.c.l.b16 %v163
  %v260 = vunpack.c.l.b16 %v164
  %v261 = vunpack.c.l.b16 %v165
  %v262 = vunpack.c.l.b16 %v166
  %v263 = vunpack.c.l.b16 %v167
  %v264 = vunpack.c.l.b16 %v168
  %v265 = vunpack.c.l.b16 %v169
  %v266 = vunpack.c.l.b16 %v170
  %v267 = vunpack.c.l.b16 %v171
  %v268 = vunpack.c.l.b16 %v172
  %v269 = vunpack.c.l.b16 %v173
  %v270 = vunpack.c.l.b16 %v174
  %v271 = vunpack.c.l.b16 %v175
  %v272 = vunpack.c.l.b16 %v176
  %v273 = vunpack.c.l.b16 %v177
  %v274 = vunpack.c.l.b16 %v178
  %v275 = vunpack.c.l.b16 %v179
  %v276 = vunpack.c.l.b16 %v180
  %v277 = vunpack.c.l.b16 %v181
  %v278 = vunpack.c.l.b16 %v182
  %v279 = vunpack.c.l.b16 %v183
  %v280 = vunpack.c.l.b16 %v184
  %v281 = vunpack.c.l.b16 %v185
  %v282 = vunpack.c.l.b16 %v186
  %v283 = vunpack.c.l.b16 %v187
  %v284 = vpack.c.b16 %v237, %v236
  %v285 = vpack.c.b16 %v239, %v238
  %v286 = vpack.c.b16 %v241, %v240
  %v287 = vpack.c.b16 %v243, %v242
  %v288 = vpack.c.b16 %v245, %v244
  %v289 = vpack.c.b16 %v247, %v246
  %v290 = vpack.c.b16 %v249, %v248
  %v291 = vpack.c.b16 %v251, %v250
  %v292 = vpack.c.b16 %v253, %v252
  %v293 = vpack.c.b16 %v255, %v254
  %v294 = vpack.c.b16 %v257, %v256
  %v295 = vpack.c.b16 %v259, %v258
  %v296 = vpack.c.b16 %v261, %v260
  %v297 = vpack.c.b16 %v263, %v262
  %v298 = vpack.c.b16 %v265, %v264
  %v299 = vpack.c.b16 %v267, %v266
  %v300 = vpack.c.b16 %v269, %v268
  %v301 = vpack.c.b16 %v271, %v270
  %v302 = vpack.c.b16 %v273, %v272
  %v303 = vpack.c.b16 %v275, %v274
  %v304 = vpack.c.b16 %v277, %v276
  %v305 = vpack.c.b16 %v279, %v278
  %v306 = vpack.c.b16 %v281, %v280
  %v307 = vpack.c.b16 %v283, %v282
  %332 = vmatprep.subr.bf16.mxu0 0
  %333 = vmatpush1.bf16.msra.mxu0 %v284
  %334 = vmatprep.subr.bf16.mxu0 0
  %335 = vmatpush1.bf16.msra.mxu0 %v285
  %336 = vmatprep.subr.bf16.mxu0 0
  %337 = vmatpush1.bf16.msra.mxu0 %v286
  %338 = vmatprep.subr.bf16.mxu0 0
  %339 = vmatpush1.bf16.msra.mxu0 %v287
  %340 = vmatprep.subr.bf16.mxu0 0
  %341 = vmatpush1.bf16.msra.mxu0 %v288
  %342 = vmatprep.subr.bf16.mxu0 0
  %343 = vmatpush1.bf16.msra.mxu0 %v289
  %344 = vmatprep.subr.bf16.mxu0 0
  %345 = vmatpush1.bf16.msra.mxu0 %v290
  %346 = vmatprep.subr.bf16.mxu0 0
  %347 = vmatpush1.bf16.msra.mxu0 %v291
  %348 = vmatprep.subr.bf16.mxu0 0
  %349 = vmatpush1.bf16.msra.mxu0 %v292
  %350 = vmatprep.subr.bf16.mxu0 0
  %351 = vmatpush1.bf16.msra.mxu0 %v293
  %352 = vmatprep.subr.bf16.mxu0 0
  %353 = vmatpush1.bf16.msra.mxu0 %v294
  %354 = vmatprep.subr.bf16.mxu0 0
  %355 = vmatpush1.bf16.msra.mxu0 %v295
  %356 = vmatprep.subr.bf16.mxu0 0
  %357 = vmatpush1.bf16.msra.mxu0 %v296
  %358 = vmatprep.subr.bf16.mxu0 0
  %359 = vmatpush1.bf16.msra.mxu0 %v297
  %360 = vmatprep.subr.bf16.mxu0 0
  %361 = vmatpush1.bf16.msra.mxu0 %v298
  %362 = vmatprep.subr.bf16.mxu0 0
  %363 = vmatpush1.bf16.msra.mxu0 %v299
  %364 = vmatprep.mubr.bf16.mxu0 %v132
  %365 = vmatmul.mubr.bf16.gmra.mrb[0].mxu0 %v131
  %v366 = vpop.f32.mrb[0].mxu0
  %v367 = vadd.f32 0.0, %v366
  %v368 = vpop.f32.mrb[0].mxu0
  %v369 = vpop.f32.mrb[0].mxu0
  %v370 = vadd.f32 0.0, %v369
  %v371 = vpop.f32.mrb[0].mxu0
  %372 = vmatprep.mubr.bf16.mxu0 %v135
  %373 = vmatmul.mubr.bf16.gmra.mrb[0].mxu0 %v134
  %v374 = vpop.f32.mrb[0].mxu0
  %v375 = vadd.f32 0.0, %v374
  %v376 = vpop.f32.mrb[0].mxu0
  %v377 = vpop.f32.mrb[0].mxu0
  %v378 = vadd.f32 0.0, %v377
  %v379 = vpop.f32.mrb[0].mxu0
  %380 = vmatprep.mubr.bf16.mxu0 %v138
  %381 = vmatmul.mubr.bf16.gmra.mrb[0].mxu0 %v137
  %v382 = vpop.f32.mrb[0].mxu0
  %v383 = vadd.f32 0.0, %v382
  %v384 = vpop.f32.mrb[0].mxu0
  %v385 = vpop.f32.mrb[0].mxu0
  %v386 = vpop.f32.mrb[0].mxu0
  %387 = vdwg.mxu0
  %388 = vmatprep.subr.bf16.mxu0 0
  %389 = vmatpush1.bf16.msra.mxu0 %v300
  %390 = vmatprep.subr.bf16.mxu0 0
  %391 = vmatpush1.bf16.msra.mxu0 %v301
  %392 = vmatprep.subr.bf16.mxu0 0
  %393 = vmatpush1.bf16.msra.mxu0 %v302
  %394 = vmatprep.subr.bf16.mxu0 0
  %395 = vmatpush1.bf16.msra.mxu0 %v303
  %396 = vmatprep.subr.bf16.mxu0 0
  %397 = vmatpush1.bf16.msra.mxu0 %v304
  %398 = vmatprep.subr.bf16.mxu0 0
  %399 = vmatpush1.bf16.msra.mxu0 %v305
  %400 = vmatprep.subr.bf16.mxu0 0
  %401 = vmatpush1.bf16.msra.mxu0 %v306
  %402 = vmatprep.subr.bf16.mxu0 0
  %403 = vmatpush1.bf16.msra.mxu0 %v307
  %404 = vmatprep.subr.bf16.mxu0 0
  %405 = vmatpush1.bf16.msra.mxu0 0
  %406 = vmatprep.subr.bf16.mxu0 0
  %407 = vmatpush1.bf16.msra.mxu0 0
  %408 = vmatprep.subr.bf16.mxu0 0
  %409 = vmatpush1.bf16.msra.mxu0 0
  %410 = vmatprep.subr.bf16.mxu0 0
  %411 = vmatpush1.bf16.msra.mxu0 0
  %412 = vmatprep.subr.bf16.mxu0 0
  %413 = vmatpush1.bf16.msra.mxu0 0
  %414 = vmatprep.subr.bf16.mxu0 0
  %415 = vmatpush1.bf16.msra.mxu0 0
  %416 = vmatprep.subr.bf16.mxu0 0
  %417 = vmatpush1.bf16.msra.mxu0 0
  %418 = vmatprep.subr.bf16.mxu0 0
  %419 = vmatpush1.bf16.msra.mxu0 0
  %420 = vmatprep.mubr.bf16.mxu0 0
  %421 = vmatmul.mubr.bf16.gmra.mrb[0].mxu0 %v133
  %v422 = vpop.f32.mrb[0].mxu0
  %v423 = vadd.f32 %v367, %v422
  %v424 = vpop.f32.mrb[0].mxu0
  %v425 = vpop.f32.mrb[0].mxu0
  %v426 = vadd.f32 %v370, %v425
  %v427 = vpop.f32.mrb[0].mxu0
  %428 = vmatprep.mubr.bf16.mxu0 0
  %429 = vmatmul.mubr.bf16.gmra.mrb[0].mxu0 %v136
  %v430 = vpop.f32.mrb[0].mxu0
  %v431 = vadd.f32 %v375, %v430
  %v432 = vpop.f32.mrb[0].mxu0
  %v433 = vpop.f32.mrb[0].mxu0
  %v434 = vadd.f32 %v378, %v433
  %v435 = vpop.f32.mrb[0].mxu0
  %436 = vmatprep.mubr.bf16.mxu0 0
  %437 = vmatmul.mubr.bf16.gmra.mrb[0].mxu0 %v139
  %v438 = vpop.f32.mrb[0].mxu0
  %v439 = vadd.f32 %v383, %v438
  %v440 = vpop.f32.mrb[0].mxu0
  %v441 = vpop.f32.mrb[0].mxu0
  %v442 = vpop.f32.mrb[0].mxu0
  %443 = vdwg.mxu0
  %vm447 = vcmask 1046528
  %v448 = vrot.slane %v423, 1
  %v449 = vrot.slane %v426, 1
  %v450 = vsel %vm447, %v448, %v449
  %v451 = vrot.slane %v431, 1
  %v452 = vsel %vm447, %v449, %v451
  %vm457 = vcmask 1044480
  %v458 = vrot.slane %v431, 3
  %v459 = vrot.slane %v434, 3
  %v460 = vsel %vm457, %v458, %v459
  %v461 = vrot.slane %v439, 3
  %v462 = vsel %vm457, %v459, %v461
  %v465 = vld [vmem:[%s3] sm:$0x1]
  %v467 = vlaneseq
  %v468 = vshrl.u32 %v467, 7
  %v469 = vsub.s32 0, %v468
  %v470 = vrot.slane %v465, %v469
  %v472 = vmul.f32 %v450, %v470
  %v473 = vmul.f32 %v452, %v470
  %v474 = vmul.f32 %v460, %v470
  %v475 = vmul.f32 %v462, %v470
  %v476 = vld [vmem:[%s4] sm:$0x1]
  %v478 = vlaneseq
  %v479 = vshrl.u32 %v478, 7
  %v480 = vsub.s32 0, %v479
  %v481 = vrot.slane %v476, %v480
  %v483 = vadd.f32 %v472, %v481
  %v484 = vadd.f32 %v473, %v481
  %v485 = vadd.f32 %v474, %v481
  %v486 = vadd.f32 %v475, %v481
  %v487 = vmax.f32 %v483, 0.0
  %v488 = vmax.f32 %v484, 0.0
  %v489 = vmax.f32 %v485, 0.0
  %v490 = vmax.f32 %v486, 0.0
  %v493 = vrot.slane %v45, 6
  %v494 = vrot.slane %v46, 6
  %v495 = vsel %vm63, %v493, %v494
  %499 = vst [vmem:[#allocation2] sm:$0xfc] %v493
  %500 = vst [vmem:[#allocation2 + $0x18] sm:$0xff] %v495
  %501 = vst [vmem:[#allocation2 + $0x30] sm:$0x3] %v494
  %v502 = vrot.slane %v45, 7
  %v503 = vrot.slane %v46, 7
  %v504 = vsel %vm73, %v502, %v503
  %508 = vst [vmem:[#allocation2 + $0x8] sm:$0xfe] %v502
  %509 = vst [vmem:[#allocation2 + $0x20] sm:$0xff] %v504
  %510 = vst [vmem:[#allocation2 + $0x38] sm:$0x1] %v503
  %511 = vst [vmem:[#allocation2 + $0x10] sm:$0xff] %v45
  %512 = vst [vmem:[#allocation2 + $0x28] sm:$0xff] %v46
  %v515 = vrot.slane %v47, 4
  %v516 = vrot.slane %v48, 4
  %v517 = vsel %vm87, %v515, %v516
  %521 = vst [vmem:[#allocation2 + $0x30] sm:$0xf0] %v515
  %522 = vst [vmem:[#allocation2 + $0x48] sm:$0xff] %v517
  %523 = vst [vmem:[#allocation2 + $0x60] sm:$0xf] %v516
  %v524 = vrot.slane %v47, 5
  %v525 = vrot.slane %v48, 5
  %v526 = vsel %vm97, %v524, %v525
  %530 = vst [vmem:[#allocation2 + $0x38] sm:$0xf8] %v524
  %531 = vst [vmem:[#allocation2 + $0x50] sm:$0xff] %v526
  %532 = vst [vmem:[#allocation2 + $0x68] sm:$0x7] %v525
  %v533 = vrot.slane %v47, 6
  %v534 = vrot.slane %v48, 6
  %v535 = vsel %vm63, %v533, %v534
  %539 = vst [vmem:[#allocation2 + $0x40] sm:$0xfc] %v533
  %540 = vst [vmem:[#allocation2 + $0x58] sm:$0xff] %v535
  %541 = vst [vmem:[#allocation2 + $0x70] sm:$0x3] %v534
  %v542 = vld [vmem:[#allocation2] sm:$0xff]
  %v543 = vld [vmem:[#allocation2 + $0x8] sm:$0xff]
  %v544 = vld [vmem:[#allocation2 + $0x10] sm:$0xff]
  %v545 = vld [vmem:[#allocation2 + $0x18] sm:$0xff]
  %v546 = vld [vmem:[#allocation2 + $0x20] sm:$0xff]
  %v547 = vld [vmem:[#allocation2 + $0x28] sm:$0xff]
  %v548 = vld [vmem:[#allocation2 + $0x30] sm:$0xff]
  %v549 = vld [vmem:[#allocation2 + $0x38] sm:$0xff]
  %v550 = vld [vmem:[#allocation2 + $0x40] sm:$0xff]
  %v551 = vld [vmem:[#allocation2 + $0x48] sm:$0xff]
  %v552 = vld [vmem:[#allocation2 + $0x50] sm:$0xff]
  %v553 = vld [vmem:[#allocation2 + $0x58] sm:$0xff]
  %v554 = vld [vmem:[#allocation2 + $0x60] sm:$0xf]
  %v555 = vld [vmem:[#allocation2 + $0x68] sm:$0xf]
  %v556 = vld [vmem:[#allocation2 + $0x70] sm:$0xf]
  %v557 = vpack.c.bf16 %v545, %v542
  %v558 = vpack.c.bf16 %v546, %v543
  %v559 = vpack.c.bf16 %v547, %v544
  %v560 = vpack.c.bf16 %v551, %v548
  %v561 = vpack.c.bf16 %v552, %v549
  %v562 = vpack.c.bf16 %v553, %v550
  %v563 = vpack.c.bf16 %v554, %v554
  %v564 = vpack.c.bf16 %v555, %v555
  %v565 = vpack.c.bf16 %v556, %v556
  %s566 = scalar_lea.vmem %s2, 192
  %v567 = vld [vmem:[%s566] sm:$0xf]
  %v568 = vld [vmem:[%s566 + $0x4] sm:$0xf]
  %v569 = vld [vmem:[%s566 + $0x8] sm:$0xf]
  %v570 = vld [vmem:[%s566 + $0xc] sm:$0xf]
  %v571 = vld [vmem:[%s566 + $0x10] sm:$0xf]
  %v572 = vld [vmem:[%s566 + $0x14] sm:$0xf]
  %v573 = vld [vmem:[%s566 + $0x18] sm:$0xf]
  %v574 = vld [vmem:[%s566 + $0x1c] sm:$0xf]
  %v575 = vld [vmem:[%s566 + $0x20] sm:$0xf]
  %v576 = vld [vmem:[%s566 + $0x24] sm:$0xf]
  %v577 = vld [vmem:[%s566 + $0x28] sm:$0xf]
  %v578 = vld [vmem:[%s566 + $0x2c] sm:$0xf]
  %v579 = vld [vmem:[%s566 + $0x30] sm:$0xf]
  %v580 = vld [vmem:[%s566 + $0x34] sm:$0xf]
  %v581 = vld [vmem:[%s566 + $0x38] sm:$0xf]
  %v582 = vld [vmem:[%s566 + $0x3c] sm:$0xf]
  %v583 = vld [vmem:[%s566 + $0x40] sm:$0xf]
  %v584 = vld [vmem:[%s566 + $0x44] sm:$0xf]
  %v585 = vld [vmem:[%s566 + $0x48] sm:$0xf]
  %v586 = vld [vmem:[%s566 + $0x4c] sm:$0xf]
  %v587 = vld [vmem:[%s566 + $0x50] sm:$0xf]
  %v588 = vld [vmem:[%s566 + $0x54] sm:$0xf]
  %v589 = vld [vmem:[%s566 + $0x58] sm:$0xf]
  %v590 = vld [vmem:[%s566 + $0x5c] sm:$0xf]
  %v591 = vld [vmem:[%s566 + $0x60] sm:$0xf]
  %v592 = vld [vmem:[%s566 + $0x64] sm:$0xf]
  %v593 = vld [vmem:[%s566 + $0x68] sm:$0xf]
  %v594 = vld [vmem:[%s566 + $0x6c] sm:$0xf]
  %v595 = vld [vmem:[%s566 + $0x70] sm:$0xf]
  %v596 = vld [vmem:[%s566 + $0x74] sm:$0xf]
  %v597 = vld [vmem:[%s566 + $0x78] sm:$0xf]
  %v598 = vld [vmem:[%s566 + $0x7c] sm:$0xf]
  %v599 = vld [vmem:[%s566 + $0x80] sm:$0xf]
  %v600 = vld [vmem:[%s566 + $0x84] sm:$0xf]
  %v601 = vld [vmem:[%s566 + $0x88] sm:$0xf]
  %v602 = vld [vmem:[%s566 + $0x8c] sm:$0xf]
  %v603 = vld [vmem:[%s566 + $0x90] sm:$0xf]
  %v604 = vld [vmem:[%s566 + $0x94] sm:$0xf]
  %v605 = vld [vmem:[%s566 + $0x98] sm:$0xf]
  %v606 = vld [vmem:[%s566 + $0x9c] sm:$0xf]
  %v607 = vld [vmem:[%s566 + $0xa0] sm:$0xf]
  %v608 = vld [vmem:[%s566 + $0xa4] sm:$0xf]
  %v609 = vld [vmem:[%s566 + $0xa8] sm:$0xf]
  %v610 = vld [vmem:[%s566 + $0xac] sm:$0xf]
  %v611 = vld [vmem:[%s566 + $0xb0] sm:$0xf]
  %v612 = vld [vmem:[%s566 + $0xb4] sm:$0xf]
  %v613 = vld [vmem:[%s566 + $0xb8] sm:$0xf]
  %v614 = vld [vmem:[%s566 + $0xbc] sm:$0xf]
  %v663 = vunpack.c.l.b16 %v567
  %v664 = vunpack.c.l.b16 %v568
  %v665 = vunpack.c.l.b16 %v569
  %v666 = vunpack.c.l.b16 %v570
  %v667 = vunpack.c.l.b16 %v571
  %v668 = vunpack.c.l.b16 %v572
  %v669 = vunpack.c.l.b16 %v573
  %v670 = vunpack.c.l.b16 %v574
  %v671 = vunpack.c.l.b16 %v575
  %v672 = vunpack.c.l.b16 %v576
  %v673 = vunpack.c.l.b16 %v577
  %v674 = vunpack.c.l.b16 %v578
  %v675 = vunpack.c.l.b16 %v579
  %v676 = vunpack.c.l.b16 %v580
  %v677 = vunpack.c.l.b16 %v581
  %v678 = vunpack.c.l.b16 %v582
  %v679 = vunpack.c.l.b16 %v583
  %v680 = vunpack.c.l.b16 %v584
  %v681 = vunpack.c.l.b16 %v585
  %v682 = vunpack.c.l.b16 %v586
  %v683 = vunpack.c.l.b16 %v587
  %v684 = vunpack.c.l.b16 %v588
  %v685 = vunpack.c.l.b16 %v589
  %v686 = vunpack.c.l.b16 %v590
  %v687 = vunpack.c.l.b16 %v591
  %v688 = vunpack.c.l.b16 %v592
  %v689 = vunpack.c.l.b16 %v593
  %v690 = vunpack.c.l.b16 %v594
  %v691 = vunpack.c.l.b16 %v595
  %v692 = vunpack.c.l.b16 %v596
  %v693 = vunpack.c.l.b16 %v597
  %v694 = vunpack.c.l.b16 %v598
  %v695 = vunpack.c.l.b16 %v599
  %v696 = vunpack.c.l.b16 %v600
  %v697 = vunpack.c.l.b16 %v601
  %v698 = vunpack.c.l.b16 %v602
  %v699 = vunpack.c.l.b16 %v603
  %v700 = vunpack.c.l.b16 %v604
  %v701 = vunpack.c.l.b16 %v605
  %v702 = vunpack.c.l.b16 %v606
  %v703 = vunpack.c.l.b16 %v607
  %v704 = vunpack.c.l.b16 %v608
  %v705 = vunpack.c.l.b16 %v609
  %v706 = vunpack.c.l.b16 %v610
  %v707 = vunpack.c.l.b16 %v611
  %v708 = vunpack.c.l.b16 %v612
  %v709 = vunpack.c.l.b16 %v613
  %v710 = vunpack.c.l.b16 %v614
  %v711 = vpack.c.b16 %v664, %v663
  %v712 = vpack.c.b16 %v666, %v665
  %v713 = vpack.c.b16 %v668, %v667
  %v714 = vpack.c.b16 %v670, %v669
  %v715 = vpack.c.b16 %v672, %v671
  %v716 = vpack.c.b16 %v674, %v673
  %v717 = vpack.c.b16 %v676, %v675
  %v718 = vpack.c.b16 %v678, %v677
  %v719 = vpack.c.b16 %v680, %v679
  %v720 = vpack.c.b16 %v682, %v681
  %v721 = vpack.c.b16 %v684, %v683
  %v722 = vpack.c.b16 %v686, %v685
  %v723 = vpack.c.b16 %v688, %v687
  %v724 = vpack.c.b16 %v690, %v689
  %v725 = vpack.c.b16 %v692, %v691
  %v726 = vpack.c.b16 %v694, %v693
  %v727 = vpack.c.b16 %v696, %v695
  %v728 = vpack.c.b16 %v698, %v697
  %v729 = vpack.c.b16 %v700, %v699
  %v730 = vpack.c.b16 %v702, %v701
  %v731 = vpack.c.b16 %v704, %v703
  %v732 = vpack.c.b16 %v706, %v705
  %v733 = vpack.c.b16 %v708, %v707
  %v734 = vpack.c.b16 %v710, %v709
  %759 = vmatprep.subr.bf16.mxu0 0
  %760 = vmatpush1.bf16.msra.mxu0 %v711
  %761 = vmatprep.subr.bf16.mxu0 0
  %762 = vmatpush1.bf16.msra.mxu0 %v712
  %763 = vmatprep.subr.bf16.mxu0 0
  %764 = vmatpush1.bf16.msra.mxu0 %v713
  %765 = vmatprep.subr.bf16.mxu0 0
  %766 = vmatpush1.bf16.msra.mxu0 %v714
  %767 = vmatprep.subr.bf16.mxu0 0
  %768 = vmatpush1.bf16.msra.mxu0 %v715
  %769 = vmatprep.subr.bf16.mxu0 0
  %770 = vmatpush1.bf16.msra.mxu0 %v716
  %771 = vmatprep.subr.bf16.mxu0 0
  %772 = vmatpush1.bf16.msra.mxu0 %v717
  %773 = vmatprep.subr.bf16.mxu0 0
  %774 = vmatpush1.bf16.msra.mxu0 %v718
  %775 = vmatprep.subr.bf16.mxu0 0
  %776 = vmatpush1.bf16.msra.mxu0 %v719
  %777 = vmatprep.subr.bf16.mxu0 0
  %778 = vmatpush1.bf16.msra.mxu0 %v720
  %779 = vmatprep.subr.bf16.mxu0 0
  %780 = vmatpush1.bf16.msra.mxu0 %v721
  %781 = vmatprep.subr.bf16.mxu0 0
  %782 = vmatpush1.bf16.msra.mxu0 %v722
  %783 = vmatprep.subr.bf16.mxu0 0
  %784 = vmatpush1.bf16.msra.mxu0 %v723
  %785 = vmatprep.subr.bf16.mxu0 0
  %786 = vmatpush1.bf16.msra.mxu0 %v724
  %787 = vmatprep.subr.bf16.mxu0 0
  %788 = vmatpush1.bf16.msra.mxu0 %v725
  %789 = vmatprep.subr.bf16.mxu0 0
  %790 = vmatpush1.bf16.msra.mxu0 %v726
  %791 = vmatprep.mubr.bf16.mxu0 %v558
  %792 = vmatmul.mubr.bf16.gmra.mrb[0].mxu0 %v557
  %v793 = vpop.f32.mrb[0].mxu0
  %v794 = vadd.f32 0.0, %v793
  %v795 = vpop.f32.mrb[0].mxu0
  %v796 = vpop.f32.mrb[0].mxu0
  %v797 = vadd.f32 0.0, %v796
  %v798 = vpop.f32.mrb[0].mxu0
  %799 = vmatprep.mubr.bf16.mxu0 %v561
  %800 = vmatmul.mubr.bf16.gmra.mrb[0].mxu0 %v560
  %v801 = vpop.f32.mrb[0].mxu0
  %v802 = vadd.f32 0.0, %v801
  %v803 = vpop.f32.mrb[0].mxu0
  %v804 = vpop.f32.mrb[0].mxu0
  %v805 = vadd.f32 0.0, %v804
  %v806 = vpop.f32.mrb[0].mxu0
  %807 = vmatprep.mubr.bf16.mxu0 %v564
  %808 = vmatmul.mubr.bf16.gmra.mrb[0].mxu0 %v563
  %v809 = vpop.f32.mrb[0].mxu0
  %v810 = vadd.f32 0.0, %v809
  %v811 = vpop.f32.mrb[0].mxu0
  %v812 = vpop.f32.mrb[0].mxu0
  %v813 = vpop.f32.mrb[0].mxu0
  %814 = vdwg.mxu0
  %815 = vmatprep.subr.bf16.mxu0 0
  %816 = vmatpush1.bf16.msra.mxu0 %v727
  %817 = vmatprep.subr.bf16.mxu0 0
  %818 = vmatpush1.bf16.msra.mxu0 %v728
  %819 = vmatprep.subr.bf16.mxu0 0
  %820 = vmatpush1.bf16.msra.mxu0 %v729
  %821 = vmatprep.subr.bf16.mxu0 0
  %822 = vmatpush1.bf16.msra.mxu0 %v730
  %823 = vmatprep.subr.bf16.mxu0 0
  %824 = vmatpush1.bf16.msra.mxu0 %v731
  %825 = vmatprep.subr.bf16.mxu0 0
  %826 = vmatpush1.bf16.msra.mxu0 %v732
  %827 = vmatprep.subr.bf16.mxu0 0
  %828 = vmatpush1.bf16.msra.mxu0 %v733
  %829 = vmatprep.subr.bf16.mxu0 0
  %830 = vmatpush1.bf16.msra.mxu0 %v734
  %831 = vmatprep.subr.bf16.mxu0 0
  %832 = vmatpush1.bf16.msra.mxu0 0
  %833 = vmatprep.subr.bf16.mxu0 0
  %834 = vmatpush1.bf16.msra.mxu0 0
  %835 = vmatprep.subr.bf16.mxu0 0
  %836 = vmatpush1.bf16.msra.mxu0 0
  %837 = vmatprep.subr.bf16.mxu0 0
  %838 = vmatpush1.bf16.msra.mxu0 0
  %839 = vmatprep.subr.bf16.mxu0 0
  %840 = vmatpush1.bf16.msra.mxu0 0
  %841 = vmatprep.subr.bf16.mxu0 0
  %842 = vmatpush1.bf16.msra.mxu0 0
  %843 = vmatprep.subr.bf16.mxu0 0
  %844 = vmatpush1.bf16.msra.mxu0 0
  %845 = vmatprep.subr.bf16.mxu0 0
  %846 = vmatpush1.bf16.msra.mxu0 0
  %847 = vmatprep.mubr.bf16.mxu0 0
  %848 = vmatmul.mubr.bf16.gmra.mrb[0].mxu0 %v559
  %v849 = vpop.f32.mrb[0].mxu0
  %v850 = vadd.f32 %v794, %v849
  %v851 = vpop.f32.mrb[0].mxu0
  %v852 = vpop.f32.mrb[0].mxu0
  %v853 = vadd.f32 %v797, %v852
  %v854 = vpop.f32.mrb[0].mxu0
  %855 = vmatprep.mubr.bf16.mxu0 0
  %856 = vmatmul.mubr.bf16.gmra.mrb[0].mxu0 %v562
  %v857 = vpop.f32.mrb[0].mxu0
  %v858 = vadd.f32 %v802, %v857
  %v859 = vpop.f32.mrb[0].mxu0
  %v860 = vpop.f32.mrb[0].mxu0
  %v861 = vadd.f32 %v805, %v860
  %v862 = vpop.f32.mrb[0].mxu0
  %863 = vmatprep.mubr.bf16.mxu0 0
  %864 = vmatmul.mubr.bf16.gmra.mrb[0].mxu0 %v565
  %v865 = vpop.f32.mrb[0].mxu0
  %v866 = vadd.f32 %v810, %v865
  %v867 = vpop.f32.mrb[0].mxu0
  %v868 = vpop.f32.mrb[0].mxu0
  %v869 = vpop.f32.mrb[0].mxu0
  %870 = vdwg.mxu0
  %v874 = vrot.slane %v850, 1
  %v875 = vrot.slane %v853, 1
  %v876 = vsel %vm447, %v874, %v875
  %v877 = vrot.slane %v858, 1
  %v878 = vsel %vm447, %v875, %v877
  %v883 = vrot.slane %v858, 3
  %v884 = vrot.slane %v861, 3
  %v885 = vsel %vm457, %v883, %v884
  %v886 = vrot.slane %v866, 3
  %v887 = vsel %vm457, %v884, %v886
  %s890 = scalar_lea.vmem %s3, 1
  %v891 = vld [vmem:[%s890] sm:$0x1]
  %v893 = vlaneseq
  %v894 = vshrl.u32 %v893, 7
  %v895 = vsub.s32 0, %v894
  %v896 = vrot.slane %v891, %v895
  %v898 = vmul.f32 %v876, %v896
  %v899 = vmul.f32 %v878, %v896
  %v900 = vmul.f32 %v885, %v896
  %v901 = vmul.f32 %v887, %v896
  %s902 = scalar_lea.vmem %s4, 1
  %v903 = vld [vmem:[%s902] sm:$0x1]
  %v905 = vlaneseq
  %v906 = vshrl.u32 %v905, 7
  %v907 = vsub.s32 0, %v906
  %v908 = vrot.slane %v903, %v907
  %v910 = vadd.f32 %v898, %v908
  %v911 = vadd.f32 %v899, %v908
  %v912 = vadd.f32 %v900, %v908
  %v913 = vadd.f32 %v901, %v908
  %v914 = vmax.f32 %v910, 0.0
  %v915 = vmax.f32 %v911, 0.0
  %v916 = vmax.f32 %v912, 0.0
  %v917 = vmax.f32 %v913, 0.0
  %v920 = vrot.slane %v49, 6
  %v921 = vrot.slane %v50, 6
  %v922 = vsel %vm63, %v920, %v921
  %926 = vst [vmem:[#allocation2] sm:$0xfc] %v920
  %927 = vst [vmem:[#allocation2 + $0x18] sm:$0xff] %v922
  %928 = vst [vmem:[#allocation2 + $0x30] sm:$0x3] %v921
  %v929 = vrot.slane %v49, 7
  %v930 = vrot.slane %v50, 7
  %v931 = vsel %vm73, %v929, %v930
  %935 = vst [vmem:[#allocation2 + $0x8] sm:$0xfe] %v929
  %936 = vst [vmem:[#allocation2 + $0x20] sm:$0xff] %v931
  %937 = vst [vmem:[#allocation2 + $0x38] sm:$0x1] %v930
  %938 = vst [vmem:[#allocation2 + $0x10] sm:$0xff] %v49
  %939 = vst [vmem:[#allocation2 + $0x28] sm:$0xff] %v50
  %v942 = vrot.slane %v51, 4
  %v943 = vrot.slane %v52, 4
  %v944 = vsel %vm87, %v942, %v943
  %948 = vst [vmem:[#allocation2 + $0x30] sm:$0xf0] %v942
  %949 = vst [vmem:[#allocation2 + $0x48] sm:$0xff] %v944
  %950 = vst [vmem:[#allocation2 + $0x60] sm:$0xf] %v943
  %v951 = vrot.slane %v51, 5
  %v952 = vrot.slane %v52, 5
  %v953 = vsel %vm97, %v951, %v952
  %957 = vst [vmem:[#allocation2 + $0x38] sm:$0xf8] %v951
  %958 = vst [vmem:[#allocation2 + $0x50] sm:$0xff] %v953
  %959 = vst [vmem:[#allocation2 + $0x68] sm:$0x7] %v952
  %v960 = vrot.slane %v51, 6
  %v961 = vrot.slane %v52, 6
  %v962 = vsel %vm63, %v960, %v961
  %966 = vst [vmem:[#allocation2 + $0x40] sm:$0xfc] %v960
  %967 = vst [vmem:[#allocation2 + $0x58] sm:$0xff] %v962
  %968 = vst [vmem:[#allocation2 + $0x70] sm:$0x3] %v961
  %v969 = vld [vmem:[#allocation2] sm:$0xff]
  %v970 = vld [vmem:[#allocation2 + $0x8] sm:$0xff]
  %v971 = vld [vmem:[#allocation2 + $0x10] sm:$0xff]
  %v972 = vld [vmem:[#allocation2 + $0x18] sm:$0xff]
  %v973 = vld [vmem:[#allocation2 + $0x20] sm:$0xff]
  %v974 = vld [vmem:[#allocation2 + $0x28] sm:$0xff]
  %v975 = vld [vmem:[#allocation2 + $0x30] sm:$0xff]
  %v976 = vld [vmem:[#allocation2 + $0x38] sm:$0xff]
  %v977 = vld [vmem:[#allocation2 + $0x40] sm:$0xff]
  %v978 = vld [vmem:[#allocation2 + $0x48] sm:$0xff]
  %v979 = vld [vmem:[#allocation2 + $0x50] sm:$0xff]
  %v980 = vld [vmem:[#allocation2 + $0x58] sm:$0xff]
  %v981 = vld [vmem:[#allocation2 + $0x60] sm:$0xf]
  %v982 = vld [vmem:[#allocation2 + $0x68] sm:$0xf]
  %v983 = vld [vmem:[#allocation2 + $0x70] sm:$0xf]
  %v984 = vpack.c.bf16 %v972, %v969
  %v985 = vpack.c.bf16 %v973, %v970
  %v986 = vpack.c.bf16 %v974, %v971
  %v987 = vpack.c.bf16 %v978, %v975
  %v988 = vpack.c.bf16 %v979, %v976
  %v989 = vpack.c.bf16 %v980, %v977
  %v990 = vpack.c.bf16 %v981, %v981
  %v991 = vpack.c.bf16 %v982, %v982
  %v992 = vpack.c.bf16 %v983, %v983
  %s993 = scalar_lea.vmem %s2, 384
  %v994 = vld [vmem:[%s993] sm:$0xf]
  %v995 = vld [vmem:[%s993 + $0x4] sm:$0xf]
  %v996 = vld [vmem:[%s993 + $0x8] sm:$0xf]
  %v997 = vld [vmem:[%s993 + $0xc] sm:$0xf]
  %v998 = vld [vmem:[%s993 + $0x10] sm:$0xf]
  %v999 = vld [vmem:[%s993 + $0x14] sm:$0xf]
  %v1000 = vld [vmem:[%s993 + $0x18] sm:$0xf]
  %v1001 = vld [vmem:[%s993 + $0x1c] sm:$0xf]
  %v1002 = vld [vmem:[%s993 + $0x20] sm:$0xf]
  %v1003 = vld [vmem:[%s993 + $0x24] sm:$0xf]
  %v1004 = vld [vmem:[%s993 + $0x28] sm:$0xf]
  %v1005 = vld [vmem:[%s993 + $0x2c] sm:$0xf]
  %v1006 = vld [vmem:[%s993 + $0x30] sm:$0xf]
  %v1007 = vld [vmem:[%s993 + $0x34] sm:$0xf]
  %v1008 = vld [vmem:[%s993 + $0x38] sm:$0xf]
  %v1009 = vld [vmem:[%s993 + $0x3c] sm:$0xf]
  %v1010 = vld [vmem:[%s993 + $0x40] sm:$0xf]
  %v1011 = vld [vmem:[%s993 + $0x44] sm:$0xf]
  %v1012 = vld [vmem:[%s993 + $0x48] sm:$0xf]
  %v1013 = vld [vmem:[%s993 + $0x4c] sm:$0xf]
  %v1014 = vld [vmem:[%s993 + $0x50] sm:$0xf]
  %v1015 = vld [vmem:[%s993 + $0x54] sm:$0xf]
  %v1016 = vld [vmem:[%s993 + $0x58] sm:$0xf]
  %v1017 = vld [vmem:[%s993 + $0x5c] sm:$0xf]
  %v1018 = vld [vmem:[%s993 + $0x60] sm:$0xf]
  %v1019 = vld [vmem:[%s993 + $0x64] sm:$0xf]
  %v1020 = vld [vmem:[%s993 + $0x68] sm:$0xf]
  %v1021 = vld [vmem:[%s993 + $0x6c] sm:$0xf]
  %v1022 = vld [vmem:[%s993 + $0x70] sm:$0xf]
  %v1023 = vld [vmem:[%s993 + $0x74] sm:$0xf]
  %v1024 = vld [vmem:[%s993 + $0x78] sm:$0xf]
  %v1025 = vld [vmem:[%s993 + $0x7c] sm:$0xf]
  %v1026 = vld [vmem:[%s993 + $0x80] sm:$0xf]
  %v1027 = vld [vmem:[%s993 + $0x84] sm:$0xf]
  %v1028 = vld [vmem:[%s993 + $0x88] sm:$0xf]
  %v1029 = vld [vmem:[%s993 + $0x8c] sm:$0xf]
  %v1030 = vld [vmem:[%s993 + $0x90] sm:$0xf]
  %v1031 = vld [vmem:[%s993 + $0x94] sm:$0xf]
  %v1032 = vld [vmem:[%s993 + $0x98] sm:$0xf]
  %v1033 = vld [vmem:[%s993 + $0x9c] sm:$0xf]
  %v1034 = vld [vmem:[%s993 + $0xa0] sm:$0xf]
  %v1035 = vld [vmem:[%s993 + $0xa4] sm:$0xf]
  %v1036 = vld [vmem:[%s993 + $0xa8] sm:$0xf]
  %v1037 = vld [vmem:[%s993 + $0xac] sm:$0xf]
  %v1038 = vld [vmem:[%s993 + $0xb0] sm:$0xf]
  %v1039 = vld [vmem:[%s993 + $0xb4] sm:$0xf]
  %v1040 = vld [vmem:[%s993 + $0xb8] sm:$0xf]
  %v1041 = vld [vmem:[%s993 + $0xbc] sm:$0xf]
  %v1090 = vunpack.c.l.b16 %v994
  %v1091 = vunpack.c.l.b16 %v995
  %v1092 = vunpack.c.l.b16 %v996
  %v1093 = vunpack.c.l.b16 %v997
  %v1094 = vunpack.c.l.b16 %v998
  %v1095 = vunpack.c.l.b16 %v999
  %v1096 = vunpack.c.l.b16 %v1000
  %v1097 = vunpack.c.l.b16 %v1001
  %v1098 = vunpack.c.l.b16 %v1002
  %v1099 = vunpack.c.l.b16 %v1003
  %v1100 = vunpack.c.l.b16 %v1004
  %v1101 = vunpack.c.l.b16 %v1005
  %v1102 = vunpack.c.l.b16 %v1006
  %v1103 = vunpack.c.l.b16 %v1007
  %v1104 = vunpack.c.l.b16 %v1008
  %v1105 = vunpack.c.l.b16 %v1009
  %v1106 = vunpack.c.l.b16 %v1010
  %v1107 = vunpack.c.l.b16 %v1011
  %v1108 = vunpack.c.l.b16 %v1012
  %v1109 = vunpack.c.l.b16 %v1013
  %v1110 = vunpack.c.l.b16 %v1014
  %v1111 = vunpack.c.l.b16 %v1015
  %v1112 = vunpack.c.l.b16 %v1016
  %v1113 = vunpack.c.l.b16 %v1017
  %v1114 = vunpack.c.l.b16 %v1018
  %v1115 = vunpack.c.l.b16 %v1019
  %v1116 = vunpack.c.l.b16 %v1020
  %v1117 = vunpack.c.l.b16 %v1021
  %v1118 = vunpack.c.l.b16 %v1022
  %v1119 = vunpack.c.l.b16 %v1023
  %v1120 = vunpack.c.l.b16 %v1024
  %v1121 = vunpack.c.l.b16 %v1025
  %v1122 = vunpack.c.l.b16 %v1026
  %v1123 = vunpack.c.l.b16 %v1027
  %v1124 = vunpack.c.l.b16 %v1028
  %v1125 = vunpack.c.l.b16 %v1029
  %v1126 = vunpack.c.l.b16 %v1030
  %v1127 = vunpack.c.l.b16 %v1031
  %v1128 = vunpack.c.l.b16 %v1032
  %v1129 = vunpack.c.l.b16 %v1033
  %v1130 = vunpack.c.l.b16 %v1034
  %v1131 = vunpack.c.l.b16 %v1035
  %v1132 = vunpack.c.l.b16 %v1036
  %v1133 = vunpack.c.l.b16 %v1037
  %v1134 = vunpack.c.l.b16 %v1038
  %v1135 = vunpack.c.l.b16 %v1039
  %v1136 = vunpack.c.l.b16 %v1040
  %v1137 = vunpack.c.l.b16 %v1041
  %v1138 = vpack.c.b16 %v1091, %v1090
  %v1139 = vpack.c.b16 %v1093, %v1092
  %v1140 = vpack.c.b16 %v1095, %v1094
  %v1141 = vpack.c.b16 %v1097, %v1096
  %v1142 = vpack.c.b16 %v1099, %v1098
  %v1143 = vpack.c.b16 %v1101, %v1100
  %v1144 = vpack.c.b16 %v1103, %v1102
  %v1145 = vpack.c.b16 %v1105, %v1104
  %v1146 = vpack.c.b16 %v1107, %v1106
  %v1147 = vpack.c.b16 %v1109, %v1108
  %v1148 = vpack.c.b16 %v1111, %v1110
  %v1149 = vpack.c.b16 %v1113, %v1112
  %v1150 = vpack.c.b16 %v1115, %v1114
  %v1151 = vpack.c.b16 %v1117, %v1116
  %v1152 = vpack.c.b16 %v1119, %v1118
  %v1153 = vpack.c.b16 %v1121, %v1120
  %v1154 = vpack.c.b16 %v1123, %v1122
  %v1155 = vpack.c.b16 %v1125, %v1124
  %v1156 = vpack.c.b16 %v1127, %v1126
  %v1157 = vpack.c.b16 %v1129, %v1128
  %v1158 = vpack.c.b16 %v1131, %v1130
  %v1159 = vpack.c.b16 %v1133, %v1132
  %v1160 = vpack.c.b16 %v1135, %v1134
  %v1161 = vpack.c.b16 %v1137, %v1136
  %1186 = vmatprep.subr.bf16.mxu0 0
  %1187 = vmatpush1.bf16.msra.mxu0 %v1138
  %1188 = vmatprep.subr.bf16.mxu0 0
  %1189 = vmatpush1.bf16.msra.mxu0 %v1139
  %1190 = vmatprep.subr.bf16.mxu0 0
  %1191 = vmatpush1.bf16.msra.mxu0 %v1140
  %1192 = vmatprep.subr.bf16.mxu0 0
  %1193 = vmatpush1.bf16.msra.mxu0 %v1141
  %1194 = vmatprep.subr.bf16.mxu0 0
  %1195 = vmatpush1.bf16.msra.mxu0 %v1142
  %1196 = vmatprep.subr.bf16.mxu0 0
  %1197 = vmatpush1.bf16.msra.mxu0 %v1143
  %1198 = vmatprep.subr.bf16.mxu0 0
  %1199 = vmatpush1.bf16.msra.mxu0 %v1144
  %1200 = vmatprep.subr.bf16.mxu0 0
  %1201 = vmatpush1.bf16.msra.mxu0 %v1145
  %1202 = vmatprep.subr.bf16.mxu0 0
  %1203 = vmatpush1.bf16.msra.mxu0 %v1146
  %1204 = vmatprep.subr.bf16.mxu0 0
  %1205 = vmatpush1.bf16.msra.mxu0 %v1147
  %1206 = vmatprep.subr.bf16.mxu0 0
  %1207 = vmatpush1.bf16.msra.mxu0 %v1148
  %1208 = vmatprep.subr.bf16.mxu0 0
  %1209 = vmatpush1.bf16.msra.mxu0 %v1149
  %1210 = vmatprep.subr.bf16.mxu0 0
  %1211 = vmatpush1.bf16.msra.mxu0 %v1150
  %1212 = vmatprep.subr.bf16.mxu0 0
  %1213 = vmatpush1.bf16.msra.mxu0 %v1151
  %1214 = vmatprep.subr.bf16.mxu0 0
  %1215 = vmatpush1.bf16.msra.mxu0 %v1152
  %1216 = vmatprep.subr.bf16.mxu0 0
  %1217 = vmatpush1.bf16.msra.mxu0 %v1153
  %1218 = vmatprep.mubr.bf16.mxu0 %v985
  %1219 = vmatmul.mubr.bf16.gmra.mrb[0].mxu0 %v984
  %v1220 = vpop.f32.mrb[0].mxu0
  %v1221 = vadd.f32 0.0, %v1220
  %v1222 = vpop.f32.mrb[0].mxu0
  %v1223 = vpop.f32.mrb[0].mxu0
  %v1224 = vadd.f32 0.0, %v1223
  %v1225 = vpop.f32.mrb[0].mxu0
  %1226 = vmatprep.mubr.bf16.mxu0 %v988
  %1227 = vmatmul.mubr.bf16.gmra.mrb[0].mxu0 %v987
  %v1228 = vpop.f32.mrb[0].mxu0
  %v1229 = vadd.f32 0.0, %v1228
  %v1230 = vpop.f32.mrb[0].mxu0
  %v1231 = vpop.f32.mrb[0].mxu0
  %v1232 = vadd.f32 0.0, %v1231
  %v1233 = vpop.f32.mrb[0].mxu0
  %1234 = vmatprep.mubr.bf16.mxu0 %v991
  %1235 = vmatmul.mubr.bf16.gmra.mrb[0].mxu0 %v990
  %v1236 = vpop.f32.mrb[0].mxu0
  %v1237 = vadd.f32 0.0, %v1236
  %v1238 = vpop.f32.mrb[0].mxu0
  %v1239 = vpop.f32.mrb[0].mxu0
  %v1240 = vpop.f32.mrb[0].mxu0
  %1241 = vdwg.mxu0
  %1242 = vmatprep.subr.bf16.mxu0 0
  %1243 = vmatpush1.bf16.msra.mxu0 %v1154
  %1244 = vmatprep.subr.bf16.mxu0 0
  %1245 = vmatpush1.bf16.msra.mxu0 %v1155
  %1246 = vmatprep.subr.bf16.mxu0 0
  %1247 = vmatpush1.bf16.msra.mxu0 %v1156
  %1248 = vmatprep.subr.bf16.mxu0 0
  %1249 = vmatpush1.bf16.msra.mxu0 %v1157
  %1250 = vmatprep.subr.bf16.mxu0 0
  %1251 = vmatpush1.bf16.msra.mxu0 %v1158
  %1252 = vmatprep.subr.bf16.mxu0 0
  %1253 = vmatpush1.bf16.msra.mxu0 %v1159
  %1254 = vmatprep.subr.bf16.mxu0 0
  %1255 = vmatpush1.bf16.msra.mxu0 %v1160
  %1256 = vmatprep.subr.bf16.mxu0 0
  %1257 = vmatpush1.bf16.msra.mxu0 %v1161
  %1258 = vmatprep.subr.bf16.mxu0 0
  %1259 = vmatpush1.bf16.msra.mxu0 0
  %1260 = vmatprep.subr.bf16.mxu0 0
  %1261 = vmatpush1.bf16.msra.mxu0 0
  %1262 = vmatprep.subr.bf16.mxu0 0
  %1263 = vmatpush1.bf16.msra.mxu0 0
  %1264 = vmatprep.subr.bf16.mxu0 0
  %1265 = vmatpush1.bf16.msra.mxu0 0
  %1266 = vmatprep.subr.bf16.mxu0 0
  %1267 = vmatpush1.bf16.msra.mxu0 0
  %1268 = vmatprep.subr.bf16.mxu0 0
  %1269 = vmatpush1.bf16.msra.mxu0 0
  %1270 = vmatprep.subr.bf16.mxu0 0
  %1271 = vmatpush1.bf16.msra.mxu0 0
  %1272 = vmatprep.subr.bf16.mxu0 0
  %1273 = vmatpush1.bf16.msra.mxu0 0
  %1274 = vmatprep.mubr.bf16.mxu0 0
  %1275 = vmatmul.mubr.bf16.gmra.mrb[0].mxu0 %v986
  %v1276 = vpop.f32.mrb[0].mxu0
  %v1277 = vadd.f32 %v1221, %v1276
  %v1278 = vpop.f32.mrb[0].mxu0
  %v1279 = vpop.f32.mrb[0].mxu0
  %v1280 = vadd.f32 %v1224, %v1279
  %v1281 = vpop.f32.mrb[0].mxu0
  %1282 = vmatprep.mubr.bf16.mxu0 0
  %1283 = vmatmul.mubr.bf16.gmra.mrb[0].mxu0 %v989
  %v1284 = vpop.f32.mrb[0].mxu0
  %v1285 = vadd.f32 %v1229, %v1284
  %v1286 = vpop.f32.mrb[0].mxu0
  %v1287 = vpop.f32.mrb[0].mxu0
  %v1288 = vadd.f32 %v1232, %v1287
  %v1289 = vpop.f32.mrb[0].mxu0
  %1290 = vmatprep.mubr.bf16.mxu0 0
  %1291 = vmatmul.mubr.bf16.gmra.mrb[0].mxu0 %v992
  %v1292 = vpop.f32.mrb[0].mxu0
  %v1293 = vadd.f32 %v1237, %v1292
  %v1294 = vpop.f32.mrb[0].mxu0
  %v1295 = vpop.f32.mrb[0].mxu0
  %v1296 = vpop.f32.mrb[0].mxu0
  %1297 = vdwg.mxu0
  %v1301 = vrot.slane %v1277, 1
  %v1302 = vrot.slane %v1280, 1
  %v1303 = vsel %vm447, %v1301, %v1302
  %v1304 = vrot.slane %v1285, 1
  %v1305 = vsel %vm447, %v1302, %v1304
  %v1310 = vrot.slane %v1285, 3
  %v1311 = vrot.slane %v1288, 3
  %v1312 = vsel %vm457, %v1310, %v1311
  %v1313 = vrot.slane %v1293, 3
  %v1314 = vsel %vm457, %v1311, %v1313
  %s1317 = scalar_lea.vmem %s3, 2
  %v1318 = vld [vmem:[%s1317] sm:$0x1]
  %v1320 = vlaneseq
  %v1321 = vshrl.u32 %v1320, 7
  %v1322 = vsub.s32 0, %v1321
  %v1323 = vrot.slane %v1318, %v1322
  %v1325 = vmul.f32 %v1303, %v1323
  %v1326 = vmul.f32 %v1305, %v1323
  %v1327 = vmul.f32 %v1312, %v1323
  %v1328 = vmul.f32 %v1314, %v1323
  %s1329 = scalar_lea.vmem %s4, 2
  %v1330 = vld [vmem:[%s1329] sm:$0x1]
  %v1332 = vlaneseq
  %v1333 = vshrl.u32 %v1332, 7
  %v1334 = vsub.s32 0, %v1333
  %v1335 = vrot.slane %v1330, %v1334
  %v1337 = vadd.f32 %v1325, %v1335
  %v1338 = vadd.f32 %v1326, %v1335
  %v1339 = vadd.f32 %v1327, %v1335
  %v1340 = vadd.f32 %v1328, %v1335
  %v1341 = vmax.f32 %v1337, 0.0
  %v1342 = vmax.f32 %v1338, 0.0
  %v1343 = vmax.f32 %v1339, 0.0
  %v1344 = vmax.f32 %v1340, 0.0
  %v1345 = vmul.f32 %v914, %v1341
  %v1346 = vmul.f32 %v915, %v1342
  %v1347 = vmul.f32 %v916, %v1343
  %v1348 = vmul.f32 %v917, %v1344
  %v1351 = vrot.slane %v1345, 6
  %v1352 = vrot.slane %v1346, 6
  %v1353 = vsel %vm63, %v1351, %v1352
  %1357 = vst [vmem:[#allocation2] sm:$0xfc] %v1351
  %1358 = vst [vmem:[#allocation2 + $0x18] sm:$0xff] %v1353
  %1359 = vst [vmem:[#allocation2 + $0x30] sm:$0x3] %v1352
  %v1360 = vrot.slane %v1345, 7
  %v1361 = vrot.slane %v1346, 7
  %v1362 = vsel %vm73, %v1360, %v1361
  %1366 = vst [vmem:[#allocation2 + $0x8] sm:$0xfe] %v1360
  %1367 = vst [vmem:[#allocation2 + $0x20] sm:$0xff] %v1362
  %1368 = vst [vmem:[#allocation2 + $0x38] sm:$0x1] %v1361
  %1369 = vst [vmem:[#allocation2 + $0x10] sm:$0xff] %v1345
  %1370 = vst [vmem:[#allocation2 + $0x28] sm:$0xff] %v1346
  %v1373 = vrot.slane %v1347, 4
  %v1374 = vrot.slane %v1348, 4
  %v1375 = vsel %vm87, %v1373, %v1374
  %1379 = vst [vmem:[#allocation2 + $0x30] sm:$0xf0] %v1373
  %1380 = vst [vmem:[#allocation2 + $0x48] sm:$0xff] %v1375
  %1381 = vst [vmem:[#allocation2 + $0x60] sm:$0xf] %v1374
  %v1382 = vrot.slane %v1347, 5
  %v1383 = vrot.slane %v1348, 5
  %v1384 = vsel %vm97, %v1382, %v1383
  %1388 = vst [vmem:[#allocation2 + $0x38] sm:$0xf8] %v1382
  %1389 = vst [vmem:[#allocation2 + $0x50] sm:$0xff] %v1384
  %1390 = vst [vmem:[#allocation2 + $0x68] sm:$0x7] %v1383
  %v1391 = vrot.slane %v1347, 6
  %v1392 = vrot.slane %v1348, 6
  %v1393 = vsel %vm63, %v1391, %v1392
  %1397 = vst [vmem:[#allocation2 + $0x40] sm:$0xfc] %v1391
  %1398 = vst [vmem:[#allocation2 + $0x58] sm:$0xff] %v1393
  %1399 = vst [vmem:[#allocation2 + $0x70] sm:$0x3] %v1392
  %v1400 = vld [vmem:[#allocation2] sm:$0xff]
  %v1401 = vld [vmem:[#allocation2 + $0x8] sm:$0xff]
  %v1402 = vld [vmem:[#allocation2 + $0x10] sm:$0xff]
  %v1403 = vld [vmem:[#allocation2 + $0x18] sm:$0xff]
  %v1404 = vld [vmem:[#allocation2 + $0x20] sm:$0xff]
  %v1405 = vld [vmem:[#allocation2 + $0x28] sm:$0xff]
  %v1406 = vld [vmem:[#allocation2 + $0x30] sm:$0xff]
  %v1407 = vld [vmem:[#allocation2 + $0x38] sm:$0xff]
  %v1408 = vld [vmem:[#allocation2 + $0x40] sm:$0xff]
  %v1409 = vld [vmem:[#allocation2 + $0x48] sm:$0xff]
  %v1410 = vld [vmem:[#allocation2 + $0x50] sm:$0xff]
  %v1411 = vld [vmem:[#allocation2 + $0x58] sm:$0xff]
  %v1412 = vld [vmem:[#allocation2 + $0x60] sm:$0xf]
  %v1413 = vld [vmem:[#allocation2 + $0x68] sm:$0xf]
  %v1414 = vld [vmem:[#allocation2 + $0x70] sm:$0xf]
  %v1415 = vpack.c.bf16 %v1403, %v1400
  %v1416 = vpack.c.bf16 %v1404, %v1401
  %v1417 = vpack.c.bf16 %v1405, %v1402
  %v1418 = vpack.c.bf16 %v1409, %v1406
  %v1419 = vpack.c.bf16 %v1410, %v1407
  %v1420 = vpack.c.bf16 %v1411, %v1408
  %v1421 = vpack.c.bf16 %v1412, %v1412
  %v1422 = vpack.c.bf16 %v1413, %v1413
  %v1423 = vpack.c.bf16 %v1414, %v1414
  %s1424 = scalar_lea.vmem %s2, 576
  %v1425 = vld [vmem:[%s1424] sm:$0xf]
  %v1426 = vld [vmem:[%s1424 + $0x4] sm:$0xf]
  %v1427 = vld [vmem:[%s1424 + $0x8] sm:$0xf]
  %v1428 = vld [vmem:[%s1424 + $0xc] sm:$0xf]
  %v1429 = vld [vmem:[%s1424 + $0x10] sm:$0xf]
  %v1430 = vld [vmem:[%s1424 + $0x14] sm:$0xf]
  %v1431 = vld [vmem:[%s1424 + $0x18] sm:$0xf]
  %v1432 = vld [vmem:[%s1424 + $0x1c] sm:$0xf]
  %v1433 = vld [vmem:[%s1424 + $0x20] sm:$0xf]
  %v1434 = vld [vmem:[%s1424 + $0x24] sm:$0xf]
  %v1435 = vld [vmem:[%s1424 + $0x28] sm:$0xf]
  %v1436 = vld [vmem:[%s1424 + $0x2c] sm:$0xf]
  %v1437 = vld [vmem:[%s1424 + $0x30] sm:$0xf]
  %v1438 = vld [vmem:[%s1424 + $0x34] sm:$0xf]
  %v1439 = vld [vmem:[%s1424 + $0x38] sm:$0xf]
  %v1440 = vld [vmem:[%s1424 + $0x3c] sm:$0xf]
  %v1441 = vld [vmem:[%s1424 + $0x40] sm:$0xf]
  %v1442 = vld [vmem:[%s1424 + $0x44] sm:$0xf]
  %v1443 = vld [vmem:[%s1424 + $0x48] sm:$0xf]
  %v1444 = vld [vmem:[%s1424 + $0x4c] sm:$0xf]
  %v1445 = vld [vmem:[%s1424 + $0x50] sm:$0xf]
  %v1446 = vld [vmem:[%s1424 + $0x54] sm:$0xf]
  %v1447 = vld [vmem:[%s1424 + $0x58] sm:$0xf]
  %v1448 = vld [vmem:[%s1424 + $0x5c] sm:$0xf]
  %v1449 = vld [vmem:[%s1424 + $0x60] sm:$0xf]
  %v1450 = vld [vmem:[%s1424 + $0x64] sm:$0xf]
  %v1451 = vld [vmem:[%s1424 + $0x68] sm:$0xf]
  %v1452 = vld [vmem:[%s1424 + $0x6c] sm:$0xf]
  %v1453 = vld [vmem:[%s1424 + $0x70] sm:$0xf]
  %v1454 = vld [vmem:[%s1424 + $0x74] sm:$0xf]
  %v1455 = vld [vmem:[%s1424 + $0x78] sm:$0xf]
  %v1456 = vld [vmem:[%s1424 + $0x7c] sm:$0xf]
  %v1457 = vld [vmem:[%s1424 + $0x80] sm:$0xf]
  %v1458 = vld [vmem:[%s1424 + $0x84] sm:$0xf]
  %v1459 = vld [vmem:[%s1424 + $0x88] sm:$0xf]
  %v1460 = vld [vmem:[%s1424 + $0x8c] sm:$0xf]
  %v1461 = vld [vmem:[%s1424 + $0x90] sm:$0xf]
  %v1462 = vld [vmem:[%s1424 + $0x94] sm:$0xf]
  %v1463 = vld [vmem:[%s1424 + $0x98] sm:$0xf]
  %v1464 = vld [vmem:[%s1424 + $0x9c] sm:$0xf]
  %v1465 = vld [vmem:[%s1424 + $0xa0] sm:$0xf]
  %v1466 = vld [vmem:[%s1424 + $0xa4] sm:$0xf]
  %v1467 = vld [vmem:[%s1424 + $0xa8] sm:$0xf]
  %v1468 = vld [vmem:[%s1424 + $0xac] sm:$0xf]
  %v1469 = vld [vmem:[%s1424 + $0xb0] sm:$0xf]
  %v1470 = vld [vmem:[%s1424 + $0xb4] sm:$0xf]
  %v1471 = vld [vmem:[%s1424 + $0xb8] sm:$0xf]
  %v1472 = vld [vmem:[%s1424 + $0xbc] sm:$0xf]
  %v1521 = vunpack.c.l.b16 %v1425
  %v1522 = vunpack.c.l.b16 %v1426
  %v1523 = vunpack.c.l.b16 %v1427
  %v1524 = vunpack.c.l.b16 %v1428
  %v1525 = vunpack.c.l.b16 %v1429
  %v1526 = vunpack.c.l.b16 %v1430
  %v1527 = vunpack.c.l.b16 %v1431
  %v1528 = vunpack.c.l.b16 %v1432
  %v1529 = vunpack.c.l.b16 %v1433
  %v1530 = vunpack.c.l.b16 %v1434
  %v1531 = vunpack.c.l.b16 %v1435
  %v1532 = vunpack.c.l.b16 %v1436
  %v1533 = vunpack.c.l.b16 %v1437
  %v1534 = vunpack.c.l.b16 %v1438
  %v1535 = vunpack.c.l.b16 %v1439
  %v1536 = vunpack.c.l.b16 %v1440
  %v1537 = vunpack.c.l.b16 %v1441
  %v1538 = vunpack.c.l.b16 %v1442
  %v1539 = vunpack.c.l.b16 %v1443
  %v1540 = vunpack.c.l.b16 %v1444
  %v1541 = vunpack.c.l.b16 %v1445
  %v1542 = vunpack.c.l.b16 %v1446
  %v1543 = vunpack.c.l.b16 %v1447
  %v1544 = vunpack.c.l.b16 %v1448
  %v1545 = vunpack.c.l.b16 %v1449
  %v1546 = vunpack.c.l.b16 %v1450
  %v1547 = vunpack.c.l.b16 %v1451
  %v1548 = vunpack.c.l.b16 %v1452
  %v1549 = vunpack.c.l.b16 %v1453
  %v1550 = vunpack.c.l.b16 %v1454
  %v1551 = vunpack.c.l.b16 %v1455
  %v1552 = vunpack.c.l.b16 %v1456
  %v1553 = vunpack.c.l.b16 %v1457
  %v1554 = vunpack.c.l.b16 %v1458
  %v1555 = vunpack.c.l.b16 %v1459
  %v1556 = vunpack.c.l.b16 %v1460
  %v1557 = vunpack.c.l.b16 %v1461
  %v1558 = vunpack.c.l.b16 %v1462
  %v1559 = vunpack.c.l.b16 %v1463
  %v1560 = vunpack.c.l.b16 %v1464
  %v1561 = vunpack.c.l.b16 %v1465
  %v1562 = vunpack.c.l.b16 %v1466
  %v1563 = vunpack.c.l.b16 %v1467
  %v1564 = vunpack.c.l.b16 %v1468
  %v1565 = vunpack.c.l.b16 %v1469
  %v1566 = vunpack.c.l.b16 %v1470
  %v1567 = vunpack.c.l.b16 %v1471
  %v1568 = vunpack.c.l.b16 %v1472
  %v1569 = vpack.c.b16 %v1522, %v1521
  %v1570 = vpack.c.b16 %v1524, %v1523
  %v1571 = vpack.c.b16 %v1526, %v1525
  %v1572 = vpack.c.b16 %v1528, %v1527
  %v1573 = vpack.c.b16 %v1530, %v1529
  %v1574 = vpack.c.b16 %v1532, %v1531
  %v1575 = vpack.c.b16 %v1534, %v1533
  %v1576 = vpack.c.b16 %v1536, %v1535
  %v1577 = vpack.c.b16 %v1538, %v1537
  %v1578 = vpack.c.b16 %v1540, %v1539
  %v1579 = vpack.c.b16 %v1542, %v1541
  %v1580 = vpack.c.b16 %v1544, %v1543
  %v1581 = vpack.c.b16 %v1546, %v1545
  %v1582 = vpack.c.b16 %v1548, %v1547
  %v1583 = vpack.c.b16 %v1550, %v1549
  %v1584 = vpack.c.b16 %v1552, %v1551
  %v1585 = vpack.c.b16 %v1554, %v1553
  %v1586 = vpack.c.b16 %v1556, %v1555
  %v1587 = vpack.c.b16 %v1558, %v1557
  %v1588 = vpack.c.b16 %v1560, %v1559
  %v1589 = vpack.c.b16 %v1562, %v1561
  %v1590 = vpack.c.b16 %v1564, %v1563
  %v1591 = vpack.c.b16 %v1566, %v1565
  %v1592 = vpack.c.b16 %v1568, %v1567
  %1617 = vmatprep.subr.bf16.mxu0 0
  %1618 = vmatpush1.bf16.msra.mxu0 %v1569
  %1619 = vmatprep.subr.bf16.mxu0 0
  %1620 = vmatpush1.bf16.msra.mxu0 %v1570
  %1621 = vmatprep.subr.bf16.mxu0 0
  %1622 = vmatpush1.bf16.msra.mxu0 %v1571
  %1623 = vmatprep.subr.bf16.mxu0 0
  %1624 = vmatpush1.bf16.msra.mxu0 %v1572
  %1625 = vmatprep.subr.bf16.mxu0 0
  %1626 = vmatpush1.bf16.msra.mxu0 %v1573
  %1627 = vmatprep.subr.bf16.mxu0 0
  %1628 = vmatpush1.bf16.msra.mxu0 %v1574
  %1629 = vmatprep.subr.bf16.mxu0 0
  %1630 = vmatpush1.bf16.msra.mxu0 %v1575
  %1631 = vmatprep.subr.bf16.mxu0 0
  %1632 = vmatpush1.bf16.msra.mxu0 %v1576
  %1633 = vmatprep.subr.bf16.mxu0 0
  %1634 = vmatpush1.bf16.msra.mxu0 %v1577
  %1635 = vmatprep.subr.bf16.mxu0 0
  %1636 = vmatpush1.bf16.msra.mxu0 %v1578
  %1637 = vmatprep.subr.bf16.mxu0 0
  %1638 = vmatpush1.bf16.msra.mxu0 %v1579
  %1639 = vmatprep.subr.bf16.mxu0 0
  %1640 = vmatpush1.bf16.msra.mxu0 %v1580
  %1641 = vmatprep.subr.bf16.mxu0 0
  %1642 = vmatpush1.bf16.msra.mxu0 %v1581
  %1643 = vmatprep.subr.bf16.mxu0 0
  %1644 = vmatpush1.bf16.msra.mxu0 %v1582
  %1645 = vmatprep.subr.bf16.mxu0 0
  %1646 = vmatpush1.bf16.msra.mxu0 %v1583
  %1647 = vmatprep.subr.bf16.mxu0 0
  %1648 = vmatpush1.bf16.msra.mxu0 %v1584
  %1649 = vmatprep.mubr.bf16.mxu0 %v1416
  %1650 = vmatmul.mubr.bf16.gmra.mrb[0].mxu0 %v1415
  %v1651 = vpop.f32.mrb[0].mxu0
  %v1652 = vadd.f32 0.0, %v1651
  %v1653 = vpop.f32.mrb[0].mxu0
  %v1654 = vpop.f32.mrb[0].mxu0
  %v1655 = vadd.f32 0.0, %v1654
  %v1656 = vpop.f32.mrb[0].mxu0
  %1657 = vmatprep.mubr.bf16.mxu0 %v1419
  %1658 = vmatmul.mubr.bf16.gmra.mrb[0].mxu0 %v1418
  %v1659 = vpop.f32.mrb[0].mxu0
  %v1660 = vadd.f32 0.0, %v1659
  %v1661 = vpop.f32.mrb[0].mxu0
  %v1662 = vpop.f32.mrb[0].mxu0
  %v1663 = vadd.f32 0.0, %v1662
  %v1664 = vpop.f32.mrb[0].mxu0
  %1665 = vmatprep.mubr.bf16.mxu0 %v1422
  %1666 = vmatmul.mubr.bf16.gmra.mrb[0].mxu0 %v1421
  %v1667 = vpop.f32.mrb[0].mxu0
  %v1668 = vadd.f32 0.0, %v1667
  %v1669 = vpop.f32.mrb[0].mxu0
  %v1670 = vpop.f32.mrb[0].mxu0
  %v1671 = vpop.f32.mrb[0].mxu0
  %1672 = vdwg.mxu0
  %1673 = vmatprep.subr.bf16.mxu0 0
  %1674 = vmatpush1.bf16.msra.mxu0 %v1585
  %1675 = vmatprep.subr.bf16.mxu0 0
  %1676 = vmatpush1.bf16.msra.mxu0 %v1586
  %1677 = vmatprep.subr.bf16.mxu0 0
  %1678 = vmatpush1.bf16.msra.mxu0 %v1587
  %1679 = vmatprep.subr.bf16.mxu0 0
  %1680 = vmatpush1.bf16.msra.mxu0 %v1588
  %1681 = vmatprep.subr.bf16.mxu0 0
  %1682 = vmatpush1.bf16.msra.mxu0 %v1589
  %1683 = vmatprep.subr.bf16.mxu0 0
  %1684 = vmatpush1.bf16.msra.mxu0 %v1590
  %1685 = vmatprep.subr.bf16.mxu0 0
  %1686 = vmatpush1.bf16.msra.mxu0 %v1591
  %1687 = vmatprep.subr.bf16.mxu0 0
  %1688 = vmatpush1.bf16.msra.mxu0 %v1592
  %1689 = vmatprep.subr.bf16.mxu0 0
  %1690 = vmatpush1.bf16.msra.mxu0 0
  %1691 = vmatprep.subr.bf16.mxu0 0
  %1692 = vmatpush1.bf16.msra.mxu0 0
  %1693 = vmatprep.subr.bf16.mxu0 0
  %1694 = vmatpush1.bf16.msra.mxu0 0
  %1695 = vmatprep.subr.bf16.mxu0 0
  %1696 = vmatpush1.bf16.msra.mxu0 0
  %1697 = vmatprep.subr.bf16.mxu0 0
  %1698 = vmatpush1.bf16.msra.mxu0 0
  %1699 = vmatprep.subr.bf16.mxu0 0
  %1700 = vmatpush1.bf16.msra.mxu0 0
  %1701 = vmatprep.subr.bf16.mxu0 0
  %1702 = vmatpush1.bf16.msra.mxu0 0
  %1703 = vmatprep.subr.bf16.mxu0 0
  %1704 = vmatpush1.bf16.msra.mxu0 0
  %1705 = vmatprep.mubr.bf16.mxu0 0
  %1706 = vmatmul.mubr.bf16.gmra.mrb[0].mxu0 %v1417
  %v1707 = vpop.f32.mrb[0].mxu0
  %v1708 = vadd.f32 %v1652, %v1707
  %v1709 = vpop.f32.mrb[0].mxu0
  %v1710 = vpop.f32.mrb[0].mxu0
  %v1711 = vadd.f32 %v1655, %v1710
  %v1712 = vpop.f32.mrb[0].mxu0
  %1713 = vmatprep.mubr.bf16.mxu0 0
  %1714 = vmatmul.mubr.bf16.gmra.mrb[0].mxu0 %v1420
  %v1715 = vpop.f32.mrb[0].mxu0
  %v1716 = vadd.f32 %v1660, %v1715
  %v1717 = vpop.f32.mrb[0].mxu0
  %v1718 = vpop.f32.mrb[0].mxu0
  %v1719 = vadd.f32 %v1663, %v1718
  %v1720 = vpop.f32.mrb[0].mxu0
  %1721 = vmatprep.mubr.bf16.mxu0 0
  %1722 = vmatmul.mubr.bf16.gmra.mrb[0].mxu0 %v1423
  %v1723 = vpop.f32.mrb[0].mxu0
  %v1724 = vadd.f32 %v1668, %v1723
  %v1725 = vpop.f32.mrb[0].mxu0
  %v1726 = vpop.f32.mrb[0].mxu0
  %v1727 = vpop.f32.mrb[0].mxu0
  %1728 = vdwg.mxu0
  %v1732 = vrot.slane %v1708, 1
  %v1733 = vrot.slane %v1711, 1
  %v1734 = vsel %vm447, %v1732, %v1733
  %v1735 = vrot.slane %v1716, 1
  %v1736 = vsel %vm447, %v1733, %v1735
  %v1741 = vrot.slane %v1716, 3
  %v1742 = vrot.slane %v1719, 3
  %v1743 = vsel %vm457, %v1741, %v1742
  %v1744 = vrot.slane %v1724, 3
  %v1745 = vsel %vm457, %v1742, %v1744
  %s1748 = scalar_lea.vmem %s3, 3
  %v1749 = vld [vmem:[%s1748] sm:$0x1]
  %v1751 = vlaneseq
  %v1752 = vshrl.u32 %v1751, 7
  %v1753 = vsub.s32 0, %v1752
  %v1754 = vrot.slane %v1749, %v1753
  %v1756 = vmul.f32 %v1734, %v1754
  %v1757 = vmul.f32 %v1736, %v1754
  %v1758 = vmul.f32 %v1743, %v1754
  %v1759 = vmul.f32 %v1745, %v1754
  %s1760 = scalar_lea.vmem %s4, 3
  %v1761 = vld [vmem:[%s1760] sm:$0x1]
  %v1763 = vlaneseq
  %v1764 = vshrl.u32 %v1763, 7
  %v1765 = vsub.s32 0, %v1764
  %v1766 = vrot.slane %v1761, %v1765
  %v1768 = vadd.f32 %v1756, %v1766
  %v1769 = vadd.f32 %v1757, %v1766
  %v1770 = vadd.f32 %v1758, %v1766
  %v1771 = vadd.f32 %v1759, %v1766
  %v1772 = vmax.f32 %v1768, 0.0
  %v1773 = vmax.f32 %v1769, 0.0
  %v1774 = vmax.f32 %v1770, 0.0
  %v1775 = vmax.f32 %v1771, 0.0
  %v1776 = vmul.f32 %v914, %v45
  %v1777 = vmul.f32 %v915, %v46
  %v1778 = vmul.f32 %v916, %v47
  %v1779 = vmul.f32 %v917, %v48
  %v1780 = vadd.f32 %v914, %v1776
  %v1781 = vadd.f32 %v915, %v1777
  %v1782 = vadd.f32 %v916, %v1778
  %v1783 = vadd.f32 %v917, %v1779
  %v1784 = vmul.f32 %v1341, %v49
  %v1785 = vmul.f32 %v1342, %v50
  %v1786 = vmul.f32 %v1343, %v51
  %v1787 = vmul.f32 %v1344, %v52
  %v1788 = vadd.f32 %v1341, %v1784
  %v1789 = vadd.f32 %v1342, %v1785
  %v1790 = vadd.f32 %v1343, %v1786
  %v1791 = vadd.f32 %v1344, %v1787
  %v1792 = vadd.f32 %v487, %v1772
  %v1793 = vadd.f32 %v488, %v1773
  %v1794 = vadd.f32 %v489, %v1774
  %v1795 = vadd.f32 %v490, %v1775
  %v1798 = vrot.slane %v1780, 6
  %v1799 = vrot.slane %v1781, 6
  %v1800 = vsel %vm63, %v1798, %v1799
  %1804 = vst [vmem:[#allocation2] sm:$0xfc] %v1798
  %1805 = vst [vmem:[#allocation2 + $0x18] sm:$0xff] %v1800
  %1806 = vst [vmem:[#allocation2 + $0x30] sm:$0x3] %v1799
  %v1807 = vrot.slane %v1780, 7
  %v1808 = vrot.slane %v1781, 7
  %v1809 = vsel %vm73, %v1807, %v1808
  %1813 = vst [vmem:[#allocation2 + $0x8] sm:$0xfe] %v1807
  %1814 = vst [vmem:[#allocation2 + $0x20] sm:$0xff] %v1809
  %1815 = vst [vmem:[#allocation2 + $0x38] sm:$0x1] %v1808
  %1816 = vst [vmem:[#allocation2 + $0x10] sm:$0xff] %v1780
  %1817 = vst [vmem:[#allocation2 + $0x28] sm:$0xff] %v1781
  %v1820 = vrot.slane %v1782, 4
  %v1821 = vrot.slane %v1783, 4
  %v1822 = vsel %vm87, %v1820, %v1821
  %1826 = vst [vmem:[#allocation2 + $0x30] sm:$0xf0] %v1820
  %1827 = vst [vmem:[#allocation2 + $0x48] sm:$0xff] %v1822
  %1828 = vst [vmem:[#allocation2 + $0x60] sm:$0xf] %v1821
  %v1829 = vrot.slane %v1782, 5
  %v1830 = vrot.slane %v1783, 5
  %v1831 = vsel %vm97, %v1829, %v1830
  %1835 = vst [vmem:[#allocation2 + $0x38] sm:$0xf8] %v1829
  %1836 = vst [vmem:[#allocation2 + $0x50] sm:$0xff] %v1831
  %1837 = vst [vmem:[#allocation2 + $0x68] sm:$0x7] %v1830
  %v1838 = vrot.slane %v1782, 6
  %v1839 = vrot.slane %v1783, 6
  %v1840 = vsel %vm63, %v1838, %v1839
  %1844 = vst [vmem:[#allocation2 + $0x40] sm:$0xfc] %v1838
  %1845 = vst [vmem:[#allocation2 + $0x58] sm:$0xff] %v1840
  %1846 = vst [vmem:[#allocation2 + $0x70] sm:$0x3] %v1839
  %v1847 = vld [vmem:[#allocation2] sm:$0xff]
  %v1848 = vld [vmem:[#allocation2 + $0x8] sm:$0xff]
  %v1849 = vld [vmem:[#allocation2 + $0x10] sm:$0xff]
  %v1850 = vld [vmem:[#allocation2 + $0x18] sm:$0xff]
  %v1851 = vld [vmem:[#allocation2 + $0x20] sm:$0xff]
  %v1852 = vld [vmem:[#allocation2 + $0x28] sm:$0xff]
  %v1853 = vld [vmem:[#allocation2 + $0x30] sm:$0xff]
  %v1854 = vld [vmem:[#allocation2 + $0x38] sm:$0xff]
  %v1855 = vld [vmem:[#allocation2 + $0x40] sm:$0xff]
  %v1856 = vld [vmem:[#allocation2 + $0x48] sm:$0xff]
  %v1857 = vld [vmem:[#allocation2 + $0x50] sm:$0xff]
  %v1858 = vld [vmem:[#allocation2 + $0x58] sm:$0xff]
  %v1859 = vld [vmem:[#allocation2 + $0x60] sm:$0xf]
  %v1860 = vld [vmem:[#allocation2 + $0x68] sm:$0xf]
  %v1861 = vld [vmem:[#allocation2 + $0x70] sm:$0xf]
  %v1862 = vpack.c.bf16 %v1850, %v1847
  %v1863 = vpack.c.bf16 %v1851, %v1848
  %v1864 = vpack.c.bf16 %v1852, %v1849
  %v1865 = vpack.c.bf16 %v1856, %v1853
  %v1866 = vpack.c.bf16 %v1857, %v1854
  %v1867 = vpack.c.bf16 %v1858, %v1855
  %v1868 = vpack.c.bf16 %v1859, %v1859
  %v1869 = vpack.c.bf16 %v1860, %v1860
  %v1870 = vpack.c.bf16 %v1861, %v1861
  %s1871 = scalar_lea.vmem %s2, 768
  %v1872 = vld [vmem:[%s1871] sm:$0xf]
  %v1873 = vld [vmem:[%s1871 + $0x4] sm:$0xf]
  %v1874 = vld [vmem:[%s1871 + $0x8] sm:$0xf]
  %v1875 = vld [vmem:[%s1871 + $0xc] sm:$0xf]
  %v1876 = vld [vmem:[%s1871 + $0x10] sm:$0xf]
  %v1877 = vld [vmem:[%s1871 + $0x14] sm:$0xf]
  %v1878 = vld [vmem:[%s1871 + $0x18] sm:$0xf]
  %v1879 = vld [vmem:[%s1871 + $0x1c] sm:$0xf]
  %v1880 = vld [vmem:[%s1871 + $0x20] sm:$0xf]
  %v1881 = vld [vmem:[%s1871 + $0x24] sm:$0xf]
  %v1882 = vld [vmem:[%s1871 + $0x28] sm:$0xf]
  %v1883 = vld [vmem:[%s1871 + $0x2c] sm:$0xf]
  %v1884 = vld [vmem:[%s1871 + $0x30] sm:$0xf]
  %v1885 = vld [vmem:[%s1871 + $0x34] sm:$0xf]
  %v1886 = vld [vmem:[%s1871 + $0x38] sm:$0xf]
  %v1887 = vld [vmem:[%s1871 + $0x3c] sm:$0xf]
  %v1888 = vld [vmem:[%s1871 + $0x40] sm:$0xf]
  %v1889 = vld [vmem:[%s1871 + $0x44] sm:$0xf]
  %v1890 = vld [vmem:[%s1871 + $0x48] sm:$0xf]
  %v1891 = vld [vmem:[%s1871 + $0x4c] sm:$0xf]
  %v1892 = vld [vmem:[%s1871 + $0x50] sm:$0xf]
  %v1893 = vld [vmem:[%s1871 + $0x54] sm:$0xf]
  %v1894 = vld [vmem:[%s1871 + $0x58] sm:$0xf]
  %v1895 = vld [vmem:[%s1871 + $0x5c] sm:$0xf]
  %v1896 = vld [vmem:[%s1871 + $0x60] sm:$0xf]
  %v1897 = vld [vmem:[%s1871 + $0x64] sm:$0xf]
  %v1898 = vld [vmem:[%s1871 + $0x68] sm:$0xf]
  %v1899 = vld [vmem:[%s1871 + $0x6c] sm:$0xf]
  %v1900 = vld [vmem:[%s1871 + $0x70] sm:$0xf]
  %v1901 = vld [vmem:[%s1871 + $0x74] sm:$0xf]
  %v1902 = vld [vmem:[%s1871 + $0x78] sm:$0xf]
  %v1903 = vld [vmem:[%s1871 + $0x7c] sm:$0xf]
  %v1904 = vld [vmem:[%s1871 + $0x80] sm:$0xf]
  %v1905 = vld [vmem:[%s1871 + $0x84] sm:$0xf]
  %v1906 = vld [vmem:[%s1871 + $0x88] sm:$0xf]
  %v1907 = vld [vmem:[%s1871 + $0x8c] sm:$0xf]
  %v1908 = vld [vmem:[%s1871 + $0x90] sm:$0xf]
  %v1909 = vld [vmem:[%s1871 + $0x94] sm:$0xf]
  %v1910 = vld [vmem:[%s1871 + $0x98] sm:$0xf]
  %v1911 = vld [vmem:[%s1871 + $0x9c] sm:$0xf]
  %v1912 = vld [vmem:[%s1871 + $0xa0] sm:$0xf]
  %v1913 = vld [vmem:[%s1871 + $0xa4] sm:$0xf]
  %v1914 = vld [vmem:[%s1871 + $0xa8] sm:$0xf]
  %v1915 = vld [vmem:[%s1871 + $0xac] sm:$0xf]
  %v1916 = vld [vmem:[%s1871 + $0xb0] sm:$0xf]
  %v1917 = vld [vmem:[%s1871 + $0xb4] sm:$0xf]
  %v1918 = vld [vmem:[%s1871 + $0xb8] sm:$0xf]
  %v1919 = vld [vmem:[%s1871 + $0xbc] sm:$0xf]
  %v1968 = vunpack.c.l.b16 %v1872
  %v1969 = vunpack.c.l.b16 %v1873
  %v1970 = vunpack.c.l.b16 %v1874
  %v1971 = vunpack.c.l.b16 %v1875
  %v1972 = vunpack.c.l.b16 %v1876
  %v1973 = vunpack.c.l.b16 %v1877
  %v1974 = vunpack.c.l.b16 %v1878
  %v1975 = vunpack.c.l.b16 %v1879
  %v1976 = vunpack.c.l.b16 %v1880
  %v1977 = vunpack.c.l.b16 %v1881
  %v1978 = vunpack.c.l.b16 %v1882
  %v1979 = vunpack.c.l.b16 %v1883
  %v1980 = vunpack.c.l.b16 %v1884
  %v1981 = vunpack.c.l.b16 %v1885
  %v1982 = vunpack.c.l.b16 %v1886
  %v1983 = vunpack.c.l.b16 %v1887
  %v1984 = vunpack.c.l.b16 %v1888
  %v1985 = vunpack.c.l.b16 %v1889
  %v1986 = vunpack.c.l.b16 %v1890
  %v1987 = vunpack.c.l.b16 %v1891
  %v1988 = vunpack.c.l.b16 %v1892
  %v1989 = vunpack.c.l.b16 %v1893
  %v1990 = vunpack.c.l.b16 %v1894
  %v1991 = vunpack.c.l.b16 %v1895
  %v1992 = vunpack.c.l.b16 %v1896
  %v1993 = vunpack.c.l.b16 %v1897
  %v1994 = vunpack.c.l.b16 %v1898
  %v1995 = vunpack.c.l.b16 %v1899
  %v1996 = vunpack.c.l.b16 %v1900
  %v1997 = vunpack.c.l.b16 %v1901
  %v1998 = vunpack.c.l.b16 %v1902
  %v1999 = vunpack.c.l.b16 %v1903
  %v2000 = vunpack.c.l.b16 %v1904
  %v2001 = vunpack.c.l.b16 %v1905
  %v2002 = vunpack.c.l.b16 %v1906
  %v2003 = vunpack.c.l.b16 %v1907
  %v2004 = vunpack.c.l.b16 %v1908
  %v2005 = vunpack.c.l.b16 %v1909
  %v2006 = vunpack.c.l.b16 %v1910
  %v2007 = vunpack.c.l.b16 %v1911
  %v2008 = vunpack.c.l.b16 %v1912
  %v2009 = vunpack.c.l.b16 %v1913
  %v2010 = vunpack.c.l.b16 %v1914
  %v2011 = vunpack.c.l.b16 %v1915
  %v2012 = vunpack.c.l.b16 %v1916
  %v2013 = vunpack.c.l.b16 %v1917
  %v2014 = vunpack.c.l.b16 %v1918
  %v2015 = vunpack.c.l.b16 %v1919
  %v2016 = vpack.c.b16 %v1969, %v1968
  %v2017 = vpack.c.b16 %v1971, %v1970
  %v2018 = vpack.c.b16 %v1973, %v1972
  %v2019 = vpack.c.b16 %v1975, %v1974
  %v2020 = vpack.c.b16 %v1977, %v1976
  %v2021 = vpack.c.b16 %v1979, %v1978
  %v2022 = vpack.c.b16 %v1981, %v1980
  %v2023 = vpack.c.b16 %v1983, %v1982
  %v2024 = vpack.c.b16 %v1985, %v1984
  %v2025 = vpack.c.b16 %v1987, %v1986
  %v2026 = vpack.c.b16 %v1989, %v1988
  %v2027 = vpack.c.b16 %v1991, %v1990
  %v2028 = vpack.c.b16 %v1993, %v1992
  %v2029 = vpack.c.b16 %v1995, %v1994
  %v2030 = vpack.c.b16 %v1997, %v1996
  %v2031 = vpack.c.b16 %v1999, %v1998
  %v2032 = vpack.c.b16 %v2001, %v2000
  %v2033 = vpack.c.b16 %v2003, %v2002
  %v2034 = vpack.c.b16 %v2005, %v2004
  %v2035 = vpack.c.b16 %v2007, %v2006
  %v2036 = vpack.c.b16 %v2009, %v2008
  %v2037 = vpack.c.b16 %v2011, %v2010
  %v2038 = vpack.c.b16 %v2013, %v2012
  %v2039 = vpack.c.b16 %v2015, %v2014
  %2064 = vmatprep.subr.bf16.mxu0 0
  %2065 = vmatpush1.bf16.msra.mxu0 %v2016
  %2066 = vmatprep.subr.bf16.mxu0 0
  %2067 = vmatpush1.bf16.msra.mxu0 %v2017
  %2068 = vmatprep.subr.bf16.mxu0 0
  %2069 = vmatpush1.bf16.msra.mxu0 %v2018
  %2070 = vmatprep.subr.bf16.mxu0 0
  %2071 = vmatpush1.bf16.msra.mxu0 %v2019
  %2072 = vmatprep.subr.bf16.mxu0 0
  %2073 = vmatpush1.bf16.msra.mxu0 %v2020
  %2074 = vmatprep.subr.bf16.mxu0 0
  %2075 = vmatpush1.bf16.msra.mxu0 %v2021
  %2076 = vmatprep.subr.bf16.mxu0 0
  %2077 = vmatpush1.bf16.msra.mxu0 %v2022
  %2078 = vmatprep.subr.bf16.mxu0 0
  %2079 = vmatpush1.bf16.msra.mxu0 %v2023
  %2080 = vmatprep.subr.bf16.mxu0 0
  %2081 = vmatpush1.bf16.msra.mxu0 %v2024
  %2082 = vmatprep.subr.bf16.mxu0 0
  %2083 = vmatpush1.bf16.msra.mxu0 %v2025
  %2084 = vmatprep.subr.bf16.mxu0 0
  %2085 = vmatpush1.bf16.msra.mxu0 %v2026
  %2086 = vmatprep.subr.bf16.mxu0 0
  %2087 = vmatpush1.bf16.msra.mxu0 %v2027
  %2088 = vmatprep.subr.bf16.mxu0 0
  %2089 = vmatpush1.bf16.msra.mxu0 %v2028
  %2090 = vmatprep.subr.bf16.mxu0 0
  %2091 = vmatpush1.bf16.msra.mxu0 %v2029
  %2092 = vmatprep.subr.bf16.mxu0 0
  %2093 = vmatpush1.bf16.msra.mxu0 %v2030
  %2094 = vmatprep.subr.bf16.mxu0 0
  %2095 = vmatpush1.bf16.msra.mxu0 %v2031
  %2096 = vmatprep.mubr.bf16.mxu0 %v1863
  %2097 = vmatmul.mubr.bf16.gmra.mrb[0].mxu0 %v1862
  %v2098 = vpop.f32.mrb[0].mxu0
  %v2099 = vadd.f32 0.0, %v2098
  %v2100 = vpop.f32.mrb[0].mxu0
  %v2101 = vpop.f32.mrb[0].mxu0
  %v2102 = vadd.f32 0.0, %v2101
  %v2103 = vpop.f32.mrb[0].mxu0
  %2104 = vmatprep.mubr.bf16.mxu0 %v1866
  %2105 = vmatmul.mubr.bf16.gmra.mrb[0].mxu0 %v1865
  %v2106 = vpop.f32.mrb[0].mxu0
  %v2107 = vadd.f32 0.0, %v2106
  %v2108 = vpop.f32.mrb[0].mxu0
  %v2109 = vpop.f32.mrb[0].mxu0
  %v2110 = vadd.f32 0.0, %v2109
  %v2111 = vpop.f32.mrb[0].mxu0
  %2112 = vmatprep.mubr.bf16.mxu0 %v1869
  %2113 = vmatmul.mubr.bf16.gmra.mrb[0].mxu0 %v1868
  %v2114 = vpop.f32.mrb[0].mxu0
  %v2115 = vadd.f32 0.0, %v2114
  %v2116 = vpop.f32.mrb[0].mxu0
  %v2117 = vpop.f32.mrb[0].mxu0
  %v2118 = vpop.f32.mrb[0].mxu0
  %2119 = vdwg.mxu0
  %2120 = vmatprep.subr.bf16.mxu0 0
  %2121 = vmatpush1.bf16.msra.mxu0 %v2032
  %2122 = vmatprep.subr.bf16.mxu0 0
  %2123 = vmatpush1.bf16.msra.mxu0 %v2033
  %2124 = vmatprep.subr.bf16.mxu0 0
  %2125 = vmatpush1.bf16.msra.mxu0 %v2034
  %2126 = vmatprep.subr.bf16.mxu0 0
  %2127 = vmatpush1.bf16.msra.mxu0 %v2035
  %2128 = vmatprep.subr.bf16.mxu0 0
  %2129 = vmatpush1.bf16.msra.mxu0 %v2036
  %2130 = vmatprep.subr.bf16.mxu0 0
  %2131 = vmatpush1.bf16.msra.mxu0 %v2037
  %2132 = vmatprep.subr.bf16.mxu0 0
  %2133 = vmatpush1.bf16.msra.mxu0 %v2038
  %2134 = vmatprep.subr.bf16.mxu0 0
  %2135 = vmatpush1.bf16.msra.mxu0 %v2039
  %2136 = vmatprep.subr.bf16.mxu0 0
  %2137 = vmatpush1.bf16.msra.mxu0 0
  %2138 = vmatprep.subr.bf16.mxu0 0
  %2139 = vmatpush1.bf16.msra.mxu0 0
  %2140 = vmatprep.subr.bf16.mxu0 0
  %2141 = vmatpush1.bf16.msra.mxu0 0
  %2142 = vmatprep.subr.bf16.mxu0 0
  %2143 = vmatpush1.bf16.msra.mxu0 0
  %2144 = vmatprep.subr.bf16.mxu0 0
  %2145 = vmatpush1.bf16.msra.mxu0 0
  %2146 = vmatprep.subr.bf16.mxu0 0
  %2147 = vmatpush1.bf16.msra.mxu0 0
  %2148 = vmatprep.subr.bf16.mxu0 0
  %2149 = vmatpush1.bf16.msra.mxu0 0
  %2150 = vmatprep.subr.bf16.mxu0 0
  %2151 = vmatpush1.bf16.msra.mxu0 0
  %2152 = vmatprep.mubr.bf16.mxu0 0
  %2153 = vmatmul.mubr.bf16.gmra.mrb[0].mxu0 %v1864
  %v2154 = vpop.f32.mrb[0].mxu0
  %v2155 = vadd.f32 %v2099, %v2154
  %v2156 = vpop.f32.mrb[0].mxu0
  %v2157 = vpop.f32.mrb[0].mxu0
  %v2158 = vadd.f32 %v2102, %v2157
  %v2159 = vpop.f32.mrb[0].mxu0
  %2160 = vmatprep.mubr.bf16.mxu0 0
  %2161 = vmatmul.mubr.bf16.gmra.mrb[0].mxu0 %v1867
  %v2162 = vpop.f32.mrb[0].mxu0
  %v2163 = vadd.f32 %v2107, %v2162
  %v2164 = vpop.f32.mrb[0].mxu0
  %v2165 = vpop.f32.mrb[0].mxu0
  %v2166 = vadd.f32 %v2110, %v2165
  %v2167 = vpop.f32.mrb[0].mxu0
  %2168 = vmatprep.mubr.bf16.mxu0 0
  %2169 = vmatmul.mubr.bf16.gmra.mrb[0].mxu0 %v1870
  %v2170 = vpop.f32.mrb[0].mxu0
  %v2171 = vadd.f32 %v2115, %v2170
  %v2172 = vpop.f32.mrb[0].mxu0
  %v2173 = vpop.f32.mrb[0].mxu0
  %v2174 = vpop.f32.mrb[0].mxu0
  %2175 = vdwg.mxu0
  %v2179 = vrot.slane %v2155, 1
  %v2180 = vrot.slane %v2158, 1
  %v2181 = vsel %vm447, %v2179, %v2180
  %v2182 = vrot.slane %v2163, 1
  %v2183 = vsel %vm447, %v2180, %v2182
  %v2188 = vrot.slane %v2163, 3
  %v2189 = vrot.slane %v2166, 3
  %v2190 = vsel %vm457, %v2188, %v2189
  %v2191 = vrot.slane %v2171, 3
  %v2192 = vsel %vm457, %v2189, %v2191
  %v2197 = vrot.slane %v1788, 6
  %v2198 = vrot.slane %v1789, 6
  %v2199 = vsel %vm63, %v2197, %v2198
  %2203 = vst [vmem:[#allocation2] sm:$0xfc] %v2197
  %2204 = vst [vmem:[#allocation2 + $0x18] sm:$0xff] %v2199
  %2205 = vst [vmem:[#allocation2 + $0x30] sm:$0x3] %v2198
  %v2206 = vrot.slane %v1788, 7
  %v2207 = vrot.slane %v1789, 7
  %v2208 = vsel %vm73, %v2206, %v2207
  %2212 = vst [vmem:[#allocation2 + $0x8] sm:$0xfe] %v2206
  %2213 = vst [vmem:[#allocation2 + $0x20] sm:$0xff] %v2208
  %2214 = vst [vmem:[#allocation2 + $0x38] sm:$0x1] %v2207
  %2215 = vst [vmem:[#allocation2 + $0x10] sm:$0xff] %v1788
  %2216 = vst [vmem:[#allocation2 + $0x28] sm:$0xff] %v1789
  %v2219 = vrot.slane %v1790, 4
  %v2220 = vrot.slane %v1791, 4
  %v2221 = vsel %vm87, %v2219, %v2220
  %2225 = vst [vmem:[#allocation2 + $0x30] sm:$0xf0] %v2219
  %2226 = vst [vmem:[#allocation2 + $0x48] sm:$0xff] %v2221
  %2227 = vst [vmem:[#allocation2 + $0x60] sm:$0xf] %v2220
  %v2228 = vrot.slane %v1790, 5
  %v2229 = vrot.slane %v1791, 5
  %v2230 = vsel %vm97, %v2228, %v2229
  %2234 = vst [vmem:[#allocation2 + $0x38] sm:$0xf8] %v2228
  %2235 = vst [vmem:[#allocation2 + $0x50] sm:$0xff] %v2230
  %2236 = vst [vmem:[#allocation2 + $0x68] sm:$0x7] %v2229
  %v2237 = vrot.slane %v1790, 6
  %v2238 = vrot.slane %v1791, 6
  %v2239 = vsel %vm63, %v2237, %v2238
  %2243 = vst [vmem:[#allocation2 + $0x40] sm:$0xfc] %v2237
  %2244 = vst [vmem:[#allocation2 + $0x58] sm:$0xff] %v2239
  %2245 = vst [vmem:[#allocation2 + $0x70] sm:$0x3] %v2238
  %v2246 = vld [vmem:[#allocation2] sm:$0xff]
  %v2247 = vld [vmem:[#allocation2 + $0x8] sm:$0xff]
  %v2248 = vld [vmem:[#allocation2 + $0x10] sm:$0xff]
  %v2249 = vld [vmem:[#allocation2 + $0x18] sm:$0xff]
  %v2250 = vld [vmem:[#allocation2 + $0x20] sm:$0xff]
  %v2251 = vld [vmem:[#allocation2 + $0x28] sm:$0xff]
  %v2252 = vld [vmem:[#allocation2 + $0x30] sm:$0xff]
  %v2253 = vld [vmem:[#allocation2 + $0x38] sm:$0xff]
  %v2254 = vld [vmem:[#allocation2 + $0x40] sm:$0xff]
  %v2255 = vld [vmem:[#allocation2 + $0x48] sm:$0xff]
  %v2256 = vld [vmem:[#allocation2 + $0x50] sm:$0xff]
  %v2257 = vld [vmem:[#allocation2 + $0x58] sm:$0xff]
  %v2258 = vld [vmem:[#allocation2 + $0x60] sm:$0xf]
  %v2259 = vld [vmem:[#allocation2 + $0x68] sm:$0xf]
  %v2260 = vld [vmem:[#allocation2 + $0x70] sm:$0xf]
  %v2261 = vpack.c.bf16 %v2249, %v2246
  %v2262 = vpack.c.bf16 %v2250, %v2247
  %v2263 = vpack.c.bf16 %v2251, %v2248
  %v2264 = vpack.c.bf16 %v2255, %v2252
  %v2265 = vpack.c.bf16 %v2256, %v2253
  %v2266 = vpack.c.bf16 %v2257, %v2254
  %v2267 = vpack.c.bf16 %v2258, %v2258
  %v2268 = vpack.c.bf16 %v2259, %v2259
  %v2269 = vpack.c.bf16 %v2260, %v2260
  %s2270 = scalar_lea.vmem %s2, 960
  %v2271 = vld [vmem:[%s2270] sm:$0xf]
  %v2272 = vld [vmem:[%s2270 + $0x4] sm:$0xf]
  %v2273 = vld [vmem:[%s2270 + $0x8] sm:$0xf]
  %v2274 = vld [vmem:[%s2270 + $0xc] sm:$0xf]
  %v2275 = vld [vmem:[%s2270 + $0x10] sm:$0xf]
  %v2276 = vld [vmem:[%s2270 + $0x14] sm:$0xf]
  %v2277 = vld [vmem:[%s2270 + $0x18] sm:$0xf]
  %v2278 = vld [vmem:[%s2270 + $0x1c] sm:$0xf]
  %v2279 = vld [vmem:[%s2270 + $0x20] sm:$0xf]
  %v2280 = vld [vmem:[%s2270 + $0x24] sm:$0xf]
  %v2281 = vld [vmem:[%s2270 + $0x28] sm:$0xf]
  %v2282 = vld [vmem:[%s2270 + $0x2c] sm:$0xf]
  %v2283 = vld [vmem:[%s2270 + $0x30] sm:$0xf]
  %v2284 = vld [vmem:[%s2270 + $0x34] sm:$0xf]
  %v2285 = vld [vmem:[%s2270 + $0x38] sm:$0xf]
  %v2286 = vld [vmem:[%s2270 + $0x3c] sm:$0xf]
  %v2287 = vld [vmem:[%s2270 + $0x40] sm:$0xf]
  %v2288 = vld [vmem:[%s2270 + $0x44] sm:$0xf]
  %v2289 = vld [vmem:[%s2270 + $0x48] sm:$0xf]
  %v2290 = vld [vmem:[%s2270 + $0x4c] sm:$0xf]
  %v2291 = vld [vmem:[%s2270 + $0x50] sm:$0xf]
  %v2292 = vld [vmem:[%s2270 + $0x54] sm:$0xf]
  %v2293 = vld [vmem:[%s2270 + $0x58] sm:$0xf]
  %v2294 = vld [vmem:[%s2270 + $0x5c] sm:$0xf]
  %v2295 = vld [vmem:[%s2270 + $0x60] sm:$0xf]
  %v2296 = vld [vmem:[%s2270 + $0x64] sm:$0xf]
  %v2297 = vld [vmem:[%s2270 + $0x68] sm:$0xf]
  %v2298 = vld [vmem:[%s2270 + $0x6c] sm:$0xf]
  %v2299 = vld [vmem:[%s2270 + $0x70] sm:$0xf]
  %v2300 = vld [vmem:[%s2270 + $0x74] sm:$0xf]
  %v2301 = vld [vmem:[%s2270 + $0x78] sm:$0xf]
  %v2302 = vld [vmem:[%s2270 + $0x7c] sm:$0xf]
  %v2303 = vld [vmem:[%s2270 + $0x80] sm:$0xf]
  %v2304 = vld [vmem:[%s2270 + $0x84] sm:$0xf]
  %v2305 = vld [vmem:[%s2270 + $0x88] sm:$0xf]
  %v2306 = vld [vmem:[%s2270 + $0x8c] sm:$0xf]
  %v2307 = vld [vmem:[%s2270 + $0x90] sm:$0xf]
  %v2308 = vld [vmem:[%s2270 + $0x94] sm:$0xf]
  %v2309 = vld [vmem:[%s2270 + $0x98] sm:$0xf]
  %v2310 = vld [vmem:[%s2270 + $0x9c] sm:$0xf]
  %v2311 = vld [vmem:[%s2270 + $0xa0] sm:$0xf]
  %v2312 = vld [vmem:[%s2270 + $0xa4] sm:$0xf]
  %v2313 = vld [vmem:[%s2270 + $0xa8] sm:$0xf]
  %v2314 = vld [vmem:[%s2270 + $0xac] sm:$0xf]
  %v2315 = vld [vmem:[%s2270 + $0xb0] sm:$0xf]
  %v2316 = vld [vmem:[%s2270 + $0xb4] sm:$0xf]
  %v2317 = vld [vmem:[%s2270 + $0xb8] sm:$0xf]
  %v2318 = vld [vmem:[%s2270 + $0xbc] sm:$0xf]
  %v2367 = vunpack.c.l.b16 %v2271
  %v2368 = vunpack.c.l.b16 %v2272
  %v2369 = vunpack.c.l.b16 %v2273
  %v2370 = vunpack.c.l.b16 %v2274
  %v2371 = vunpack.c.l.b16 %v2275
  %v2372 = vunpack.c.l.b16 %v2276
  %v2373 = vunpack.c.l.b16 %v2277
  %v2374 = vunpack.c.l.b16 %v2278
  %v2375 = vunpack.c.l.b16 %v2279
  %v2376 = vunpack.c.l.b16 %v2280
  %v2377 = vunpack.c.l.b16 %v2281
  %v2378 = vunpack.c.l.b16 %v2282
  %v2379 = vunpack.c.l.b16 %v2283
  %v2380 = vunpack.c.l.b16 %v2284
  %v2381 = vunpack.c.l.b16 %v2285
  %v2382 = vunpack.c.l.b16 %v2286
  %v2383 = vunpack.c.l.b16 %v2287
  %v2384 = vunpack.c.l.b16 %v2288
  %v2385 = vunpack.c.l.b16 %v2289
  %v2386 = vunpack.c.l.b16 %v2290
  %v2387 = vunpack.c.l.b16 %v2291
  %v2388 = vunpack.c.l.b16 %v2292
  %v2389 = vunpack.c.l.b16 %v2293
  %v2390 = vunpack.c.l.b16 %v2294
  %v2391 = vunpack.c.l.b16 %v2295
  %v2392 = vunpack.c.l.b16 %v2296
  %v2393 = vunpack.c.l.b16 %v2297
  %v2394 = vunpack.c.l.b16 %v2298
  %v2395 = vunpack.c.l.b16 %v2299
  %v2396 = vunpack.c.l.b16 %v2300
  %v2397 = vunpack.c.l.b16 %v2301
  %v2398 = vunpack.c.l.b16 %v2302
  %v2399 = vunpack.c.l.b16 %v2303
  %v2400 = vunpack.c.l.b16 %v2304
  %v2401 = vunpack.c.l.b16 %v2305
  %v2402 = vunpack.c.l.b16 %v2306
  %v2403 = vunpack.c.l.b16 %v2307
  %v2404 = vunpack.c.l.b16 %v2308
  %v2405 = vunpack.c.l.b16 %v2309
  %v2406 = vunpack.c.l.b16 %v2310
  %v2407 = vunpack.c.l.b16 %v2311
  %v2408 = vunpack.c.l.b16 %v2312
  %v2409 = vunpack.c.l.b16 %v2313
  %v2410 = vunpack.c.l.b16 %v2314
  %v2411 = vunpack.c.l.b16 %v2315
  %v2412 = vunpack.c.l.b16 %v2316
  %v2413 = vunpack.c.l.b16 %v2317
  %v2414 = vunpack.c.l.b16 %v2318
  %v2415 = vpack.c.b16 %v2368, %v2367
  %v2416 = vpack.c.b16 %v2370, %v2369
  %v2417 = vpack.c.b16 %v2372, %v2371
  %v2418 = vpack.c.b16 %v2374, %v2373
  %v2419 = vpack.c.b16 %v2376, %v2375
  %v2420 = vpack.c.b16 %v2378, %v2377
  %v2421 = vpack.c.b16 %v2380, %v2379
  %v2422 = vpack.c.b16 %v2382, %v2381
  %v2423 = vpack.c.b16 %v2384, %v2383
  %v2424 = vpack.c.b16 %v2386, %v2385
  %v2425 = vpack.c.b16 %v2388, %v2387
  %v2426 = vpack.c.b16 %v2390, %v2389
  %v2427 = vpack.c.b16 %v2392, %v2391
  %v2428 = vpack.c.b16 %v2394, %v2393
  %v2429 = vpack.c.b16 %v2396, %v2395
  %v2430 = vpack.c.b16 %v2398, %v2397
  %v2431 = vpack.c.b16 %v2400, %v2399
  %v2432 = vpack.c.b16 %v2402, %v2401
  %v2433 = vpack.c.b16 %v2404, %v2403
  %v2434 = vpack.c.b16 %v2406, %v2405
  %v2435 = vpack.c.b16 %v2408, %v2407
  %v2436 = vpack.c.b16 %v2410, %v2409
  %v2437 = vpack.c.b16 %v2412, %v2411
  %v2438 = vpack.c.b16 %v2414, %v2413
  %2463 = vmatprep.subr.bf16.mxu0 0
  %2464 = vmatpush1.bf16.msra.mxu0 %v2415
  %2465 = vmatprep.subr.bf16.mxu0 0
  %2466 = vmatpush1.bf16.msra.mxu0 %v2416
  %2467 = vmatprep.subr.bf16.mxu0 0
  %2468 = vmatpush1.bf16.msra.mxu0 %v2417
  %2469 = vmatprep.subr.bf16.mxu0 0
  %2470 = vmatpush1.bf16.msra.mxu0 %v2418
  %2471 = vmatprep.subr.bf16.mxu0 0
  %2472 = vmatpush1.bf16.msra.mxu0 %v2419
  %2473 = vmatprep.subr.bf16.mxu0 0
  %2474 = vmatpush1.bf16.msra.mxu0 %v2420
  %2475 = vmatprep.subr.bf16.mxu0 0
  %2476 = vmatpush1.bf16.msra.mxu0 %v2421
  %2477 = vmatprep.subr.bf16.mxu0 0
  %2478 = vmatpush1.bf16.msra.mxu0 %v2422
  %2479 = vmatprep.subr.bf16.mxu0 0
  %2480 = vmatpush1.bf16.msra.mxu0 %v2423
  %2481 = vmatprep.subr.bf16.mxu0 0
  %2482 = vmatpush1.bf16.msra.mxu0 %v2424
  %2483 = vmatprep.subr.bf16.mxu0 0
  %2484 = vmatpush1.bf16.msra.mxu0 %v2425
  %2485 = vmatprep.subr.bf16.mxu0 0
  %2486 = vmatpush1.bf16.msra.mxu0 %v2426
  %2487 = vmatprep.subr.bf16.mxu0 0
  %2488 = vmatpush1.bf16.msra.mxu0 %v2427
  %2489 = vmatprep.subr.bf16.mxu0 0
  %2490 = vmatpush1.bf16.msra.mxu0 %v2428
  %2491 = vmatprep.subr.bf16.mxu0 0
  %2492 = vmatpush1.bf16.msra.mxu0 %v2429
  %2493 = vmatprep.subr.bf16.mxu0 0
  %2494 = vmatpush1.bf16.msra.mxu0 %v2430
  %2495 = vmatprep.mubr.bf16.mxu0 %v2262
  %2496 = vmatmul.mubr.bf16.gmra.mrb[0].mxu0 %v2261
  %v2497 = vpop.f32.mrb[0].mxu0
  %v2498 = vadd.f32 0.0, %v2497
  %v2499 = vpop.f32.mrb[0].mxu0
  %v2500 = vpop.f32.mrb[0].mxu0
  %v2501 = vadd.f32 0.0, %v2500
  %v2502 = vpop.f32.mrb[0].mxu0
  %2503 = vmatprep.mubr.bf16.mxu0 %v2265
  %2504 = vmatmul.mubr.bf16.gmra.mrb[0].mxu0 %v2264
  %v2505 = vpop.f32.mrb[0].mxu0
  %v2506 = vadd.f32 0.0, %v2505
  %v2507 = vpop.f32.mrb[0].mxu0
  %v2508 = vpop.f32.mrb[0].mxu0
  %v2509 = vadd.f32 0.0, %v2508
  %v2510 = vpop.f32.mrb[0].mxu0
  %2511 = vmatprep.mubr.bf16.mxu0 %v2268
  %2512 = vmatmul.mubr.bf16.gmra.mrb[0].mxu0 %v2267
  %v2513 = vpop.f32.mrb[0].mxu0
  %v2514 = vadd.f32 0.0, %v2513
  %v2515 = vpop.f32.mrb[0].mxu0
  %v2516 = vpop.f32.mrb[0].mxu0
  %v2517 = vpop.f32.mrb[0].mxu0
  %2518 = vdwg.mxu0
  %2519 = vmatprep.subr.bf16.mxu0 0
  %2520 = vmatpush1.bf16.msra.mxu0 %v2431
  %2521 = vmatprep.subr.bf16.mxu0 0
  %2522 = vmatpush1.bf16.msra.mxu0 %v2432
  %2523 = vmatprep.subr.bf16.mxu0 0
  %2524 = vmatpush1.bf16.msra.mxu0 %v2433
  %2525 = vmatprep.subr.bf16.mxu0 0
  %2526 = vmatpush1.bf16.msra.mxu0 %v2434
  %2527 = vmatprep.subr.bf16.mxu0 0
  %2528 = vmatpush1.bf16.msra.mxu0 %v2435
  %2529 = vmatprep.subr.bf16.mxu0 0
  %2530 = vmatpush1.bf16.msra.mxu0 %v2436
  %2531 = vmatprep.subr.bf16.mxu0 0
  %2532 = vmatpush1.bf16.msra.mxu0 %v2437
  %2533 = vmatprep.subr.bf16.mxu0 0
  %2534 = vmatpush1.bf16.msra.mxu0 %v2438
  %2535 = vmatprep.subr.bf16.mxu0 0
  %2536 = vmatpush1.bf16.msra.mxu0 0
  %2537 = vmatprep.subr.bf16.mxu0 0
  %2538 = vmatpush1.bf16.msra.mxu0 0
  %2539 = vmatprep.subr.bf16.mxu0 0
  %2540 = vmatpush1.bf16.msra.mxu0 0
  %2541 = vmatprep.subr.bf16.mxu0 0
  %2542 = vmatpush1.bf16.msra.mxu0 0
  %2543 = vmatprep.subr.bf16.mxu0 0
  %2544 = vmatpush1.bf16.msra.mxu0 0
  %2545 = vmatprep.subr.bf16.mxu0 0
  %2546 = vmatpush1.bf16.msra.mxu0 0
  %2547 = vmatprep.subr.bf16.mxu0 0
  %2548 = vmatpush1.bf16.msra.mxu0 0
  %2549 = vmatprep.subr.bf16.mxu0 0
  %2550 = vmatpush1.bf16.msra.mxu0 0
  %2551 = vmatprep.mubr.bf16.mxu0 0
  %2552 = vmatmul.mubr.bf16.gmra.mrb[0].mxu0 %v2263
  %v2553 = vpop.f32.mrb[0].mxu0
  %v2554 = vadd.f32 %v2498, %v2553
  %v2555 = vpop.f32.mrb[0].mxu0
  %v2556 = vpop.f32.mrb[0].mxu0
  %v2557 = vadd.f32 %v2501, %v2556
  %v2558 = vpop.f32.mrb[0].mxu0
  %2559 = vmatprep.mubr.bf16.mxu0 0
  %2560 = vmatmul.mubr.bf16.gmra.mrb[0].mxu0 %v2266
  %v2561 = vpop.f32.mrb[0].mxu0
  %v2562 = vadd.f32 %v2506, %v2561
  %v2563 = vpop.f32.mrb[0].mxu0
  %v2564 = vpop.f32.mrb[0].mxu0
  %v2565 = vadd.f32 %v2509, %v2564
  %v2566 = vpop.f32.mrb[0].mxu0
  %2567 = vmatprep.mubr.bf16.mxu0 0
  %2568 = vmatmul.mubr.bf16.gmra.mrb[0].mxu0 %v2269
  %v2569 = vpop.f32.mrb[0].mxu0
  %v2570 = vadd.f32 %v2514, %v2569
  %v2571 = vpop.f32.mrb[0].mxu0
  %v2572 = vpop.f32.mrb[0].mxu0
  %v2573 = vpop.f32.mrb[0].mxu0
  %2574 = vdwg.mxu0
  %v2578 = vrot.slane %v2554, 1
  %v2579 = vrot.slane %v2557, 1
  %v2580 = vsel %vm447, %v2578, %v2579
  %v2581 = vrot.slane %v2562, 1
  %v2582 = vsel %vm447, %v2579, %v2581
  %v2587 = vrot.slane %v2562, 3
  %v2588 = vrot.slane %v2565, 3
  %v2589 = vsel %vm457, %v2587, %v2588
  %v2590 = vrot.slane %v2570, 3
  %v2591 = vsel %vm457, %v2588, %v2590
  %v2594 = vadd.f32 %v2181, %v2580
  %v2595 = vadd.f32 %v2183, %v2582
  %v2596 = vadd.f32 %v2190, %v2589
  %v2597 = vadd.f32 %v2192, %v2591
  %v2600 = vrot.slane %v1792, 6
  %v2601 = vrot.slane %v1793, 6
  %v2602 = vsel %vm63, %v2600, %v2601
  %2606 = vst [vmem:[#allocation2] sm:$0xfc] %v2600
  %2607 = vst [vmem:[#allocation2 + $0x18] sm:$0xff] %v2602
  %2608 = vst [vmem:[#allocation2 + $0x30] sm:$0x3] %v2601
  %v2609 = vrot.slane %v1792, 7
  %v2610 = vrot.slane %v1793, 7
  %v2611 = vsel %vm73, %v2609, %v2610
  %2615 = vst [vmem:[#allocation2 + $0x8] sm:$0xfe] %v2609
  %2616 = vst [vmem:[#allocation2 + $0x20] sm:$0xff] %v2611
  %2617 = vst [vmem:[#allocation2 + $0x38] sm:$0x1] %v2610
  %2618 = vst [vmem:[#allocation2 + $0x10] sm:$0xff] %v1792
  %2619 = vst [vmem:[#allocation2 + $0x28] sm:$0xff] %v1793
  %v2622 = vrot.slane %v1794, 4
  %v2623 = vrot.slane %v1795, 4
  %v2624 = vsel %vm87, %v2622, %v2623
  %2628 = vst [vmem:[#allocation2 + $0x30] sm:$0xf0] %v2622
  %2629 = vst [vmem:[#allocation2 + $0x48] sm:$0xff] %v2624
  %2630 = vst [vmem:[#allocation2 + $0x60] sm:$0xf] %v2623
  %v2631 = vrot.slane %v1794, 5
  %v2632 = vrot.slane %v1795, 5
  %v2633 = vsel %vm97, %v2631, %v2632
  %2637 = vst [vmem:[#allocation2 + $0x38] sm:$0xf8] %v2631
  %2638 = vst [vmem:[#allocation2 + $0x50] sm:$0xff] %v2633
  %2639 = vst [vmem:[#allocation2 + $0x68] sm:$0x7] %v2632
  %v2640 = vrot.slane %v1794, 6
  %v2641 = vrot.slane %v1795, 6
  %v2642 = vsel %vm63, %v2640, %v2641
  %2646 = vst [vmem:[#allocation2 + $0x40] sm:$0xfc] %v2640
  %2647 = vst [vmem:[#allocation2 + $0x58] sm:$0xff] %v2642
  %2648 = vst [vmem:[#allocation2 + $0x70] sm:$0x3] %v2641
  %v2649 = vld [vmem:[#allocation2] sm:$0xff]
  %v2650 = vld [vmem:[#allocation2 + $0x8] sm:$0xff]
  %v2651 = vld [vmem:[#allocation2 + $0x10] sm:$0xff]
  %v2652 = vld [vmem:[#allocation2 + $0x18] sm:$0xff]
  %v2653 = vld [vmem:[#allocation2 + $0x20] sm:$0xff]
  %v2654 = vld [vmem:[#allocation2 + $0x28] sm:$0xff]
  %v2655 = vld [vmem:[#allocation2 + $0x30] sm:$0xff]
  %v2656 = vld [vmem:[#allocation2 + $0x38] sm:$0xff]
  %v2657 = vld [vmem:[#allocation2 + $0x40] sm:$0xff]
  %v2658 = vld [vmem:[#allocation2 + $0x48] sm:$0xff]
  %v2659 = vld [vmem:[#allocation2 + $0x50] sm:$0xff]
  %v2660 = vld [vmem:[#allocation2 + $0x58] sm:$0xff]
  %v2661 = vld [vmem:[#allocation2 + $0x60] sm:$0xf]
  %v2662 = vld [vmem:[#allocation2 + $0x68] sm:$0xf]
  %v2663 = vld [vmem:[#allocation2 + $0x70] sm:$0xf]
  %v2664 = vpack.c.bf16 %v2652, %v2649
  %v2665 = vpack.c.bf16 %v2653, %v2650
  %v2666 = vpack.c.bf16 %v2654, %v2651
  %v2667 = vpack.c.bf16 %v2658, %v2655
  %v2668 = vpack.c.bf16 %v2659, %v2656
  %v2669 = vpack.c.bf16 %v2660, %v2657
  %v2670 = vpack.c.bf16 %v2661, %v2661
  %v2671 = vpack.c.bf16 %v2662, %v2662
  %v2672 = vpack.c.bf16 %v2663, %v2663
  %s2673 = scalar_lea.vmem %s2, 1152
  %v2674 = vld [vmem:[%s2673] sm:$0xf]
  %v2675 = vld [vmem:[%s2673 + $0x4] sm:$0xf]
  %v2676 = vld [vmem:[%s2673 + $0x8] sm:$0xf]
  %v2677 = vld [vmem:[%s2673 + $0xc] sm:$0xf]
  %v2678 = vld [vmem:[%s2673 + $0x10] sm:$0xf]
  %v2679 = vld [vmem:[%s2673 + $0x14] sm:$0xf]
  %v2680 = vld [vmem:[%s2673 + $0x18] sm:$0xf]
  %v2681 = vld [vmem:[%s2673 + $0x1c] sm:$0xf]
  %v2682 = vld [vmem:[%s2673 + $0x20] sm:$0xf]
  %v2683 = vld [vmem:[%s2673 + $0x24] sm:$0xf]
  %v2684 = vld [vmem:[%s2673 + $0x28] sm:$0xf]
  %v2685 = vld [vmem:[%s2673 + $0x2c] sm:$0xf]
  %v2686 = vld [vmem:[%s2673 + $0x30] sm:$0xf]
  %v2687 = vld [vmem:[%s2673 + $0x34] sm:$0xf]
  %v2688 = vld [vmem:[%s2673 + $0x38] sm:$0xf]
  %v2689 = vld [vmem:[%s2673 + $0x3c] sm:$0xf]
  %v2690 = vld [vmem:[%s2673 + $0x40] sm:$0xf]
  %v2691 = vld [vmem:[%s2673 + $0x44] sm:$0xf]
  %v2692 = vld [vmem:[%s2673 + $0x48] sm:$0xf]
  %v2693 = vld [vmem:[%s2673 + $0x4c] sm:$0xf]
  %v2694 = vld [vmem:[%s2673 + $0x50] sm:$0xf]
  %v2695 = vld [vmem:[%s2673 + $0x54] sm:$0xf]
  %v2696 = vld [vmem:[%s2673 + $0x58] sm:$0xf]
  %v2697 = vld [vmem:[%s2673 + $0x5c] sm:$0xf]
  %v2698 = vld [vmem:[%s2673 + $0x60] sm:$0xf]
  %v2699 = vld [vmem:[%s2673 + $0x64] sm:$0xf]
  %v2700 = vld [vmem:[%s2673 + $0x68] sm:$0xf]
  %v2701 = vld [vmem:[%s2673 + $0x6c] sm:$0xf]
  %v2702 = vld [vmem:[%s2673 + $0x70] sm:$0xf]
  %v2703 = vld [vmem:[%s2673 + $0x74] sm:$0xf]
  %v2704 = vld [vmem:[%s2673 + $0x78] sm:$0xf]
  %v2705 = vld [vmem:[%s2673 + $0x7c] sm:$0xf]
  %v2706 = vld [vmem:[%s2673 + $0x80] sm:$0xf]
  %v2707 = vld [vmem:[%s2673 + $0x84] sm:$0xf]
  %v2708 = vld [vmem:[%s2673 + $0x88] sm:$0xf]
  %v2709 = vld [vmem:[%s2673 + $0x8c] sm:$0xf]
  %v2710 = vld [vmem:[%s2673 + $0x90] sm:$0xf]
  %v2711 = vld [vmem:[%s2673 + $0x94] sm:$0xf]
  %v2712 = vld [vmem:[%s2673 + $0x98] sm:$0xf]
  %v2713 = vld [vmem:[%s2673 + $0x9c] sm:$0xf]
  %v2714 = vld [vmem:[%s2673 + $0xa0] sm:$0xf]
  %v2715 = vld [vmem:[%s2673 + $0xa4] sm:$0xf]
  %v2716 = vld [vmem:[%s2673 + $0xa8] sm:$0xf]
  %v2717 = vld [vmem:[%s2673 + $0xac] sm:$0xf]
  %v2718 = vld [vmem:[%s2673 + $0xb0] sm:$0xf]
  %v2719 = vld [vmem:[%s2673 + $0xb4] sm:$0xf]
  %v2720 = vld [vmem:[%s2673 + $0xb8] sm:$0xf]
  %v2721 = vld [vmem:[%s2673 + $0xbc] sm:$0xf]
  %v2770 = vunpack.c.l.b16 %v2674
  %v2771 = vunpack.c.l.b16 %v2675
  %v2772 = vunpack.c.l.b16 %v2676
  %v2773 = vunpack.c.l.b16 %v2677
  %v2774 = vunpack.c.l.b16 %v2678
  %v2775 = vunpack.c.l.b16 %v2679
  %v2776 = vunpack.c.l.b16 %v2680
  %v2777 = vunpack.c.l.b16 %v2681
  %v2778 = vunpack.c.l.b16 %v2682
  %v2779 = vunpack.c.l.b16 %v2683
  %v2780 = vunpack.c.l.b16 %v2684
  %v2781 = vunpack.c.l.b16 %v2685
  %v2782 = vunpack.c.l.b16 %v2686
  %v2783 = vunpack.c.l.b16 %v2687
  %v2784 = vunpack.c.l.b16 %v2688
  %v2785 = vunpack.c.l.b16 %v2689
  %v2786 = vunpack.c.l.b16 %v2690
  %v2787 = vunpack.c.l.b16 %v2691
  %v2788 = vunpack.c.l.b16 %v2692
  %v2789 = vunpack.c.l.b16 %v2693
  %v2790 = vunpack.c.l.b16 %v2694
  %v2791 = vunpack.c.l.b16 %v2695
  %v2792 = vunpack.c.l.b16 %v2696
  %v2793 = vunpack.c.l.b16 %v2697
  %v2794 = vunpack.c.l.b16 %v2698
  %v2795 = vunpack.c.l.b16 %v2699
  %v2796 = vunpack.c.l.b16 %v2700
  %v2797 = vunpack.c.l.b16 %v2701
  %v2798 = vunpack.c.l.b16 %v2702
  %v2799 = vunpack.c.l.b16 %v2703
  %v2800 = vunpack.c.l.b16 %v2704
  %v2801 = vunpack.c.l.b16 %v2705
  %v2802 = vunpack.c.l.b16 %v2706
  %v2803 = vunpack.c.l.b16 %v2707
  %v2804 = vunpack.c.l.b16 %v2708
  %v2805 = vunpack.c.l.b16 %v2709
  %v2806 = vunpack.c.l.b16 %v2710
  %v2807 = vunpack.c.l.b16 %v2711
  %v2808 = vunpack.c.l.b16 %v2712
  %v2809 = vunpack.c.l.b16 %v2713
  %v2810 = vunpack.c.l.b16 %v2714
  %v2811 = vunpack.c.l.b16 %v2715
  %v2812 = vunpack.c.l.b16 %v2716
  %v2813 = vunpack.c.l.b16 %v2717
  %v2814 = vunpack.c.l.b16 %v2718
  %v2815 = vunpack.c.l.b16 %v2719
  %v2816 = vunpack.c.l.b16 %v2720
  %v2817 = vunpack.c.l.b16 %v2721
  %v2818 = vpack.c.b16 %v2771, %v2770
  %v2819 = vpack.c.b16 %v2773, %v2772
  %v2820 = vpack.c.b16 %v2775, %v2774
  %v2821 = vpack.c.b16 %v2777, %v2776
  %v2822 = vpack.c.b16 %v2779, %v2778
  %v2823 = vpack.c.b16 %v2781, %v2780
  %v2824 = vpack.c.b16 %v2783, %v2782
  %v2825 = vpack.c.b16 %v2785, %v2784
  %v2826 = vpack.c.b16 %v2787, %v2786
  %v2827 = vpack.c.b16 %v2789, %v2788
  %v2828 = vpack.c.b16 %v2791, %v2790
  %v2829 = vpack.c.b16 %v2793, %v2792
  %v2830 = vpack.c.b16 %v2795, %v2794
  %v2831 = vpack.c.b16 %v2797, %v2796
  %v2832 = vpack.c.b16 %v2799, %v2798
  %v2833 = vpack.c.b16 %v2801, %v2800
  %v2834 = vpack.c.b16 %v2803, %v2802
  %v2835 = vpack.c.b16 %v2805, %v2804
  %v2836 = vpack.c.b16 %v2807, %v2806
  %v2837 = vpack.c.b16 %v2809, %v2808
  %v2838 = vpack.c.b16 %v2811, %v2810
  %v2839 = vpack.c.b16 %v2813, %v2812
  %v2840 = vpack.c.b16 %v2815, %v2814
  %v2841 = vpack.c.b16 %v2817, %v2816
  %2866 = vmatprep.subr.bf16.mxu0 0
  %2867 = vmatpush1.bf16.msra.mxu0 %v2818
  %2868 = vmatprep.subr.bf16.mxu0 0
  %2869 = vmatpush1.bf16.msra.mxu0 %v2819
  %2870 = vmatprep.subr.bf16.mxu0 0
  %2871 = vmatpush1.bf16.msra.mxu0 %v2820
  %2872 = vmatprep.subr.bf16.mxu0 0
  %2873 = vmatpush1.bf16.msra.mxu0 %v2821
  %2874 = vmatprep.subr.bf16.mxu0 0
  %2875 = vmatpush1.bf16.msra.mxu0 %v2822
  %2876 = vmatprep.subr.bf16.mxu0 0
  %2877 = vmatpush1.bf16.msra.mxu0 %v2823
  %2878 = vmatprep.subr.bf16.mxu0 0
  %2879 = vmatpush1.bf16.msra.mxu0 %v2824
  %2880 = vmatprep.subr.bf16.mxu0 0
  %2881 = vmatpush1.bf16.msra.mxu0 %v2825
  %2882 = vmatprep.subr.bf16.mxu0 0
  %2883 = vmatpush1.bf16.msra.mxu0 %v2826
  %2884 = vmatprep.subr.bf16.mxu0 0
  %2885 = vmatpush1.bf16.msra.mxu0 %v2827
  %2886 = vmatprep.subr.bf16.mxu0 0
  %2887 = vmatpush1.bf16.msra.mxu0 %v2828
  %2888 = vmatprep.subr.bf16.mxu0 0
  %2889 = vmatpush1.bf16.msra.mxu0 %v2829
  %2890 = vmatprep.subr.bf16.mxu0 0
  %2891 = vmatpush1.bf16.msra.mxu0 %v2830
  %2892 = vmatprep.subr.bf16.mxu0 0
  %2893 = vmatpush1.bf16.msra.mxu0 %v2831
  %2894 = vmatprep.subr.bf16.mxu0 0
  %2895 = vmatpush1.bf16.msra.mxu0 %v2832
  %2896 = vmatprep.subr.bf16.mxu0 0
  %2897 = vmatpush1.bf16.msra.mxu0 %v2833
  %2898 = vmatprep.mubr.bf16.mxu0 %v2665
  %2899 = vmatmul.mubr.bf16.gmra.mrb[0].mxu0 %v2664
  %v2900 = vpop.f32.mrb[0].mxu0
  %v2901 = vadd.f32 0.0, %v2900
  %v2902 = vpop.f32.mrb[0].mxu0
  %v2903 = vpop.f32.mrb[0].mxu0
  %v2904 = vadd.f32 0.0, %v2903
  %v2905 = vpop.f32.mrb[0].mxu0
  %2906 = vmatprep.mubr.bf16.mxu0 %v2668
  %2907 = vmatmul.mubr.bf16.gmra.mrb[0].mxu0 %v2667
  %v2908 = vpop.f32.mrb[0].mxu0
  %v2909 = vadd.f32 0.0, %v2908
  %v2910 = vpop.f32.mrb[0].mxu0
  %v2911 = vpop.f32.mrb[0].mxu0
  %v2912 = vadd.f32 0.0, %v2911
  %v2913 = vpop.f32.mrb[0].mxu0
  %2914 = vmatprep.mubr.bf16.mxu0 %v2671
  %2915 = vmatmul.mubr.bf16.gmra.mrb[0].mxu0 %v2670
  %v2916 = vpop.f32.mrb[0].mxu0
  %v2917 = vadd.f32 0.0, %v2916
  %v2918 = vpop.f32.mrb[0].mxu0
  %v2919 = vpop.f32.mrb[0].mxu0
  %v2920 = vpop.f32.mrb[0].mxu0
  %2921 = vdwg.mxu0
  %2922 = vmatprep.subr.bf16.mxu0 0
  %2923 = vmatpush1.bf16.msra.mxu0 %v2834
  %2924 = vmatprep.subr.bf16.mxu0 0
  %2925 = vmatpush1.bf16.msra.mxu0 %v2835
  %2926 = vmatprep.subr.bf16.mxu0 0
  %2927 = vmatpush1.bf16.msra.mxu0 %v2836
  %2928 = vmatprep.subr.bf16.mxu0 0
  %2929 = vmatpush1.bf16.msra.mxu0 %v2837
  %2930 = vmatprep.subr.bf16.mxu0 0
  %2931 = vmatpush1.bf16.msra.mxu0 %v2838
  %2932 = vmatprep.subr.bf16.mxu0 0
  %2933 = vmatpush1.bf16.msra.mxu0 %v2839
  %2934 = vmatprep.subr.bf16.mxu0 0
  %2935 = vmatpush1.bf16.msra.mxu0 %v2840
  %2936 = vmatprep.subr.bf16.mxu0 0
  %2937 = vmatpush1.bf16.msra.mxu0 %v2841
  %2938 = vmatprep.subr.bf16.mxu0 0
  %2939 = vmatpush1.bf16.msra.mxu0 0
  %2940 = vmatprep.subr.bf16.mxu0 0
  %2941 = vmatpush1.bf16.msra.mxu0 0
  %2942 = vmatprep.subr.bf16.mxu0 0
  %2943 = vmatpush1.bf16.msra.mxu0 0
  %2944 = vmatprep.subr.bf16.mxu0 0
  %2945 = vmatpush1.bf16.msra.mxu0 0
  %2946 = vmatprep.subr.bf16.mxu0 0
  %2947 = vmatpush1.bf16.msra.mxu0 0
  %2948 = vmatprep.subr.bf16.mxu0 0
  %2949 = vmatpush1.bf16.msra.mxu0 0
  %2950 = vmatprep.subr.bf16.mxu0 0
  %2951 = vmatpush1.bf16.msra.mxu0 0
  %2952 = vmatprep.subr.bf16.mxu0 0
  %2953 = vmatpush1.bf16.msra.mxu0 0
  %2954 = vmatprep.mubr.bf16.mxu0 0
  %2955 = vmatmul.mubr.bf16.gmra.mrb[0].mxu0 %v2666
  %v2956 = vpop.f32.mrb[0].mxu0
  %v2957 = vadd.f32 %v2901, %v2956
  %v2958 = vpop.f32.mrb[0].mxu0
  %v2959 = vpop.f32.mrb[0].mxu0
  %v2960 = vadd.f32 %v2904, %v2959
  %v2961 = vpop.f32.mrb[0].mxu0
  %2962 = vmatprep.mubr.bf16.mxu0 0
  %2963 = vmatmul.mubr.bf16.gmra.mrb[0].mxu0 %v2669
  %v2964 = vpop.f32.mrb[0].mxu0
  %v2965 = vadd.f32 %v2909, %v2964
  %v2966 = vpop.f32.mrb[0].mxu0
  %v2967 = vpop.f32.mrb[0].mxu0
  %v2968 = vadd.f32 %v2912, %v2967
  %v2969 = vpop.f32.mrb[0].mxu0
  %2970 = vmatprep.mubr.bf16.mxu0 0
  %2971 = vmatmul.mubr.bf16.gmra.mrb[0].mxu0 %v2672
  %v2972 = vpop.f32.mrb[0].mxu0
  %v2973 = vadd.f32 %v2917, %v2972
  %v2974 = vpop.f32.mrb[0].mxu0
  %v2975 = vpop.f32.mrb[0].mxu0
  %v2976 = vpop.f32.mrb[0].mxu0
  %2977 = vdwg.mxu0
  %v2981 = vrot.slane %v2957, 1
  %v2982 = vrot.slane %v2960, 1
  %v2983 = vsel %vm447, %v2981, %v2982
  %v2984 = vrot.slane %v2965, 1
  %v2985 = vsel %vm447, %v2982, %v2984
  %v2990 = vrot.slane %v2965, 3
  %v2991 = vrot.slane %v2968, 3
  %v2992 = vsel %vm457, %v2990, %v2991
  %v2993 = vrot.slane %v2973, 3
  %v2994 = vsel %vm457, %v2991, %v2993
  %v2997 = vadd.f32 %v2594, %v2983
  %v2998 = vadd.f32 %v2595, %v2985
  %v2999 = vadd.f32 %v2596, %v2992
  %v3000 = vadd.f32 %v2597, %v2994
  %s3001 = scalar_lea.vmem %s3, 4
  %v3002 = vld [vmem:[%s3001] sm:$0x1]
  %v3004 = vlaneseq
  %v3005 = vshrl.u32 %v3004, 7
  %v3006 = vsub.s32 0, %v3005
  %v3007 = vrot.slane %v3002, %v3006
  %v3009 = vmul.f32 %v2997, %v3007
  %v3010 = vmul.f32 %v2998, %v3007
  %v3011 = vmul.f32 %v2999, %v3007
  %v3012 = vmul.f32 %v3000, %v3007
  %s3013 = scalar_lea.vmem %s4, 4
  %v3014 = vld [vmem:[%s3013] sm:$0x1]
  %v3016 = vlaneseq
  %v3017 = vshrl.u32 %v3016, 7
  %v3018 = vsub.s32 0, %v3017
  %v3019 = vrot.slane %v3014, %v3018
  %v3021 = vadd.f32 %v3009, %v3019
  %v3022 = vadd.f32 %v3010, %v3019
  %v3023 = vadd.f32 %v3011, %v3019
  %v3024 = vadd.f32 %v3012, %v3019
  %v3025 = vmax.f32 %v3021, 0.0
  %v3026 = vmax.f32 %v3022, 0.0
  %v3027 = vmax.f32 %v3023, 0.0
  %v3028 = vmax.f32 %v3024, 0.0
  %v3029 = vpack.c.bf16 %v3026, %v3025
  %v3030 = vpack.c.bf16 %v3028, %v3027
  %v3031 = vld [vmem:[%s5] sm:$0xff]
  %v3032 = vld [vmem:[%s5 + $0x8] sm:$0xff]
  %v3033 = vld [vmem:[%s5 + $0x10] sm:$0xff]
  %v3034 = vld [vmem:[%s5 + $0x18] sm:$0xff]
  %v3035 = vld [vmem:[%s5 + $0x20] sm:$0xff]
  %v3036 = vld [vmem:[%s5 + $0x28] sm:$0xff]
  %v3037 = vld [vmem:[%s5 + $0x30] sm:$0xff]
  %v3038 = vld [vmem:[%s5 + $0x38] sm:$0xff]
  %v3039 = vld [vmem:[%s5 + $0x40] sm:$0xff]
  %v3040 = vld [vmem:[%s5 + $0x48] sm:$0xff]
  %v3041 = vld [vmem:[%s5 + $0x50] sm:$0xff]
  %v3042 = vld [vmem:[%s5 + $0x58] sm:$0xff]
  %v3043 = vld [vmem:[%s5 + $0x60] sm:$0xff]
  %v3044 = vld [vmem:[%s5 + $0x68] sm:$0xff]
  %v3045 = vld [vmem:[%s5 + $0x70] sm:$0xff]
  %v3046 = vld [vmem:[%s5 + $0x78] sm:$0xff]
  %v3063 = vunpack.c.l.b16 %v3031
  %v3064 = vunpack.c.h.b16 %v3031
  %v3065 = vunpack.c.l.b16 %v3032
  %v3066 = vunpack.c.h.b16 %v3032
  %v3067 = vunpack.c.l.b16 %v3033
  %v3068 = vunpack.c.h.b16 %v3033
  %v3069 = vunpack.c.l.b16 %v3034
  %v3070 = vunpack.c.h.b16 %v3034
  %v3071 = vunpack.c.l.b16 %v3035
  %v3072 = vunpack.c.h.b16 %v3035
  %v3073 = vunpack.c.l.b16 %v3036
  %v3074 = vunpack.c.h.b16 %v3036
  %v3075 = vunpack.c.l.b16 %v3037
  %v3076 = vunpack.c.h.b16 %v3037
  %v3077 = vunpack.c.l.b16 %v3038
  %v3078 = vunpack.c.h.b16 %v3038
  %v3079 = vunpack.c.l.b16 %v3039
  %v3080 = vunpack.c.h.b16 %v3039
  %v3081 = vunpack.c.l.b16 %v3040
  %v3082 = vunpack.c.h.b16 %v3040
  %v3083 = vunpack.c.l.b16 %v3041
  %v3084 = vunpack.c.h.b16 %v3041
  %v3085 = vunpack.c.l.b16 %v3042
  %v3086 = vunpack.c.h.b16 %v3042
  %v3087 = vunpack.c.l.b16 %v3043
  %v3088 = vunpack.c.h.b16 %v3043
  %v3089 = vunpack.c.l.b16 %v3044
  %v3090 = vunpack.c.h.b16 %v3044
  %v3091 = vunpack.c.l.b16 %v3045
  %v3092 = vunpack.c.h.b16 %v3045
  %v3093 = vunpack.c.l.b16 %v3046
  %v3094 = vunpack.c.h.b16 %v3046
  %v3095 = vpack.c.b16 %v3065, %v3063
  %v3096 = vpack.c.b16 %v3066, %v3064
  %v3097 = vpack.c.b16 %v3069, %v3067
  %v3098 = vpack.c.b16 %v3070, %v3068
  %v3099 = vpack.c.b16 %v3073, %v3071
  %v3100 = vpack.c.b16 %v3074, %v3072
  %v3101 = vpack.c.b16 %v3077, %v3075
  %v3102 = vpack.c.b16 %v3078, %v3076
  %v3103 = vpack.c.b16 %v3081, %v3079
  %v3104 = vpack.c.b16 %v3082, %v3080
  %v3105 = vpack.c.b16 %v3085, %v3083
  %v3106 = vpack.c.b16 %v3086, %v3084
  %v3107 = vpack.c.b16 %v3089, %v3087
  %v3108 = vpack.c.b16 %v3090, %v3088
  %v3109 = vpack.c.b16 %v3093, %v3091
  %v3110 = vpack.c.b16 %v3094, %v3092
  %3127 = vmatprep.subr.bf16.mxu0 %v3096
  %3128 = vmatpush1.bf16.msra.mxu0 %v3095
  %3129 = vmatprep.subr.bf16.mxu0 %v3098
  %3130 = vmatpush1.bf16.msra.mxu0 %v3097
  %3131 = vmatprep.subr.bf16.mxu0 %v3100
  %3132 = vmatpush1.bf16.msra.mxu0 %v3099
  %3133 = vmatprep.subr.bf16.mxu0 %v3102
  %3134 = vmatpush1.bf16.msra.mxu0 %v3101
  %3135 = vmatprep.subr.bf16.mxu0 %v3104
  %3136 = vmatpush1.bf16.msra.mxu0 %v3103
  %3137 = vmatprep.subr.bf16.mxu0 %v3106
  %3138 = vmatpush1.bf16.msra.mxu0 %v3105
  %3139 = vmatprep.subr.bf16.mxu0 %v3108
  %3140 = vmatpush1.bf16.msra.mxu0 %v3107
  %3141 = vmatprep.subr.bf16.mxu0 %v3110
  %3142 = vmatpush1.bf16.msra.mxu0 %v3109
  %3143 = vmatprep.subr.bf16.mxu0 0
  %3144 = vmatpush1.bf16.msra.mxu0 0
  %3145 = vmatprep.subr.bf16.mxu0 0
  %3146 = vmatpush1.bf16.msra.mxu0 0
  %3147 = vmatprep.subr.bf16.mxu0 0
  %3148 = vmatpush1.bf16.msra.mxu0 0
  %3149 = vmatprep.subr.bf16.mxu0 0
  %3150 = vmatpush1.bf16.msra.mxu0 0
  %3151 = vmatprep.subr.bf16.mxu0 0
  %3152 = vmatpush1.bf16.msra.mxu0 0
  %3153 = vmatprep.subr.bf16.mxu0 0
  %3154 = vmatpush1.bf16.msra.mxu0 0
  %3155 = vmatprep.subr.bf16.mxu0 0
  %3156 = vmatpush1.bf16.msra.mxu0 0
  %3157 = vmatprep.subr.bf16.mxu0 0
  %3158 = vmatpush1.bf16.msra.mxu0 0
  %3159 = vmatprep.mubr.bf16.mxu0 0
  %3160 = vmatmul.mubr.bf16.gmra.mrb[0].mxu0 %v3029
  %v3161 = vpop.f32.mrb[0].mxu0
  %v3162 = vadd.f32 0.0, %v3161
  %v3163 = vpop.f32.mrb[0].mxu0
  %v3164 = vadd.f32 0.0, %v3163
  %v3165 = vpop.f32.mrb[0].mxu0
  %v3166 = vadd.f32 0.0, %v3165
  %v3167 = vpop.f32.mrb[0].mxu0
  %v3168 = vadd.f32 0.0, %v3167
  %3169 = vmatprep.mubr.bf16.mxu0 0
  %3170 = vmatmul.mubr.bf16.gmra.mrb[0].mxu0 %v3030
  %v3171 = vpop.f32.mrb[0].mxu0
  %v3172 = vadd.f32 0.0, %v3171
  %v3173 = vpop.f32.mrb[0].mxu0
  %v3174 = vadd.f32 0.0, %v3173
  %v3175 = vpop.f32.mrb[0].mxu0
  %v3176 = vadd.f32 0.0, %v3175
  %v3177 = vpop.f32.mrb[0].mxu0
  %v3178 = vadd.f32 0.0, %v3177
  %3179 = vdwg.mxu0
  %v3180 = vld [vmem:[%s6] sm:$0x3]
  %v3182 = vlaneseq
  %v3183 = vshrl.u32 %v3182, 7
  %v3184 = vsub.s32 0, %v3183
  %v3185 = vrot.slane %v3180, %v3184
  %v3186 = vlaneseq
  %v3187 = vshrl.u32 %v3186, 7
  %v3188 = vsub.s32 1, %v3187
  %v3189 = vrot.slane %v3180, %v3188
  %v3192 = vmul.f32 %v3162, %v3185
  %v3193 = vmul.f32 %v3164, %v3189
  %v3194 = vmul.f32 %v3166, %v3185
  %v3195 = vmul.f32 %v3168, %v3189
  %v3196 = vmul.f32 %v3172, %v3185
  %v3197 = vmul.f32 %v3174, %v3189
  %v3198 = vmul.f32 %v3176, %v3185
  %v3199 = vmul.f32 %v3178, %v3189
  %v3200 = vld [vmem:[%s7] sm:$0x3]
  %v3202 = vlaneseq
  %v3203 = vshrl.u32 %v3202, 7
  %v3204 = vsub.s32 0, %v3203
  %v3205 = vrot.slane %v3200, %v3204
  %v3206 = vlaneseq
  %v3207 = vshrl.u32 %v3206, 7
  %v3208 = vsub.s32 1, %v3207
  %v3209 = vrot.slane %v3200, %v3208
  %v3212 = vadd.f32 %v3192, %v3205
  %v3213 = vadd.f32 %v3193, %v3209
  %v3214 = vadd.f32 %v3194, %v3205
  %v3215 = vadd.f32 %v3195, %v3209
  %v3216 = vadd.f32 %v3196, %v3205
  %v3217 = vadd.f32 %v3197, %v3209
  %v3218 = vadd.f32 %v3198, %v3205
  %v3219 = vadd.f32 %v3199, %v3209
  %v3220 = vmax.f32 %v3212, 0.0
  %v3221 = vmax.f32 %v3213, 0.0
  %v3222 = vmax.f32 %v3214, 0.0
  %v3223 = vmax.f32 %v3215, 0.0
  %v3224 = vmax.f32 %v3216, 0.0
  %v3225 = vmax.f32 %v3217, 0.0
  %v3226 = vmax.f32 %v3218, 0.0
  %v3227 = vmax.f32 %v3219, 0.0
  %3228 = vst [vmem:[%s8] sm:$0xff] %v3220
  %3229 = vst [vmem:[%s8 + $0x8] sm:$0xff] %v3221
  %3230 = vst [vmem:[%s8 + $0x10] sm:$0xff] %v3222
  %3231 = vst [vmem:[%s8 + $0x18] sm:$0xff] %v3223
  %3232 = vst [vmem:[%s8 + $0x20] sm:$0xff] %v3224
  %3233 = vst [vmem:[%s8 + $0x28] sm:$0xff] %v3225
  %3234 = vst [vmem:[%s8 + $0x30] sm:$0xff] %v3226
  %3235 = vst [vmem:[%s8 + $0x38] sm:$0xff] %v3227
  // Predicated region
  $region34: #{tfim_forward.1} parent=0 // pred_check
    _
  $region35: #{tfim_forward.1} parent=0 // pred_check_branch
    %3237 = sbr.rel (0) target = $region37
  $region36: #{tfim_forward.1} parent=0 // pred_region
    _
  $region37: #{tfim_forward.1} parent=0 // pred_fallthru
    _
  // Predicated region
  $region38: #{tfim_forward.1} parent=0 // pred_check
    _
  $region39: #{tfim_forward.1} parent=0 // pred_check_branch
    %3239 = sbr.rel (0) target = $region41
  $region40: #{tfim_forward.1} parent=0 // pred_region
    _
  $region41: #{tfim_forward.1} parent=0 // pred_fallthru
    _

</llo_original>
